<compile_context>
chip_gen: v7x
topology: tpu7x:2x2x1
jax: 0.10.0
libtpu: 0.0.40
codegen_flags: <defaults>
</compile_context>

<pallas_src>
import functools

import jax
import jax.numpy as jnp
from jax import lax
from jax.experimental import pallas as pl
from jax.experimental.pallas import tpu as pltpu


def _round_up(n, m):
    return ((n + m - 1) // m) * m


def lstm_fc_kernel(*refs, num_layers, hidden_pad):
    # ---- unpack refs -------------------------------------------------------
    x_ref = refs[0]                                   # (T, Bb, D) time-major
    idx = 1
    layer_params = []
    for _ in range(num_layers):
        layer_params.append((refs[idx], refs[idx + 1], refs[idx + 2]))
        idx += 3
    fc1_w_ref, fc1_b_ref, fc2_w_ref, fc2_b_ref = refs[idx:idx + 4]
    idx += 4
    out_ref, hn_ref, cn_ref = refs[idx:idx + 3]
    idx += 3
    seq_ref, gates_ref = refs[idx:idx + 2]            # VMEM scratch

    T, Bb, D = x_ref.shape
    Hp = hidden_pad

    h = jnp.zeros((Bb, Hp), jnp.float32)
    c = jnp.zeros((Bb, Hp), jnp.float32)

    # ---- stacked LSTM recurrence ------------------------------------------
    for layer in range(num_layers):                   # static layer loop
        w_ih = layer_params[layer][0][...]            # (D_in, 4Hp) [i,f,o,g]
        w_hh = layer_params[layer][1][...]            # (Hp,   4Hp) [i,f,o,g]
        b = layer_params[layer][2][...]               # (1, 4Hp) = b_ih + b_hh

        # Hoisted input projection: one batched matmul per layer, computed OFF
        # the serial time-step dependence chain.
        if layer == 0:
            x_in = x_ref[...].reshape(T * Bb, D)
        else:
            x_in = seq_ref[...].reshape(T * Bb, Hp)
        gx = jnp.dot(x_in, w_ih, preferred_element_type=jnp.float32) + b
        gates_ref[...] = gx.reshape(T, Bb, 4 * Hp)

        is_last = layer == num_layers - 1

        # TODO(synk): weight-stationary w_hh via pltpu.matmul_push_rhs skipped;
        # negligible at these hidden sizes, revisit for H >= 256.
        def step(t, carry, w_hh=w_hh, is_last=is_last):
            h, c = carry
            gates = gates_ref[t] + jnp.dot(
                h, w_hh, preferred_element_type=jnp.float32)   # (Bb, 4Hp)
            # Gate order [i, f, o, g]; every block is a full 128-lane multiple,
            # so these slices are plain vreg selections (no cross-lane work).
            sig = jax.nn.sigmoid(gates[:, :3 * Hp])
            i_g = sig[:, 0 * Hp:1 * Hp]
            f_g = sig[:, 1 * Hp:2 * Hp]
            o_g = sig[:, 2 * Hp:3 * Hp]
            g_g = jnp.tanh(gates[:, 3 * Hp:4 * Hp])
            c_new = f_g * c + i_g * g_g
            h_new = o_g * jnp.tanh(c_new)
            if not is_last:
                seq_ref[t] = h_new                     # feed next layer
            return (h_new, c_new)

        h = jnp.zeros((Bb, Hp), jnp.float32)           # h0 = 0
        c = jnp.zeros((Bb, Hp), jnp.float32)           # c0 = 0
        h, c = lax.fori_loop(0, T, step, (h, c), unroll=min(T, 8))

        hn_ref[layer] = h
        cn_ref[layer] = c
        # TODO(synk): inter-layer LSTM dropout omitted (identity in eval mode).

    # ---- MLP head on final hidden state of top layer -----------------------
    y1 = (jnp.dot(h, fc1_w_ref[...], preferred_element_type=jnp.float32)
          + fc1_b_ref[...])
    y1 = jnp.where(y1 > 0, y1, 0.01 * y1)              # LeakyReLU(0.01)
    # TODO(synk): nn.Dropout omitted (identity in eval mode).
    out_ref[...] = (jnp.dot(y1, fc2_w_ref[...], preferred_element_type=jnp.float32)
                    + fc2_b_ref[...])


def _prep_gates(w, H, Hp, rows_to=None):
    """PyTorch gate blocks [i,f,g,o] -> [i,f,o,g], each zero-padded to Hp lanes.

    Optionally zero-pads the row (fan-in) dimension to `rows_to`.
    """
    i, f, g, o = (w[..., 0:H], w[..., H:2 * H], w[..., 2 * H:3 * H], w[..., 3 * H:4 * H])
    pad = [(0, 0)] * (w.ndim - 1) + [(0, Hp - H)]
    blocks = [jnp.pad(blk, pad) for blk in (i, f, o, g)]
    out = jnp.concatenate(blocks, axis=-1)
    if rows_to is not None and rows_to > out.shape[0]:
        out = jnp.pad(out, ((0, rows_to - out.shape[0]), (0, 0)))
    return out


def lstm_model_forward(x, params, *, num_layers, hidden_dim, output_length):
    """x: (B, T, D) float32, batch-first like the PyTorch module."""
    B, T, D = x.shape
    H = hidden_dim
    half = H // 2

    # Lane-align every gate / FC block to full 128-lane vregs.
    Hp = _round_up(max(H, 128), 128)
    Fp = _round_up(max(half, 128), 128)
    Op = _round_up(max(output_length, 128), 128)

    # Batch padding + batch-block grid (2 blocks for B > 8 -> v7x megacore).
    if B <= 8:
        Bp = 8
        Bb = 8
    else:
        Bp = _round_up(B, 16)
        Bb = Bp // 2
    n_blocks = Bp // Bb

    x_p = jnp.pad(x.astype(jnp.float32), ((0, Bp - B), (0, 0), (0, 0)))
    x_tm = jnp.transpose(x_p, (1, 0, 2))               # time-major for the kernel

    flat_inputs = [x_tm]
    for l in range(num_layers):
        rows_to = None if l == 0 else Hp
        flat_inputs += [
            _prep_gates(params[f"w_ih_{l}"], H, Hp, rows_to=rows_to),
            _prep_gates(params[f"w_hh_{l}"], H, Hp, rows_to=Hp),
            _prep_gates(params[f"b_{l}"], H, Hp),
        ]
    fc1_w = jnp.pad(params["fc1_w"], ((0, Hp - H), (0, Fp - half)))
    fc1_b = jnp.pad(params["fc1_b"], ((0, 0), (0, Fp - half)))
    fc2_w = jnp.pad(params["fc2_w"], ((0, Fp - half), (0, Op - output_length)))
    fc2_b = jnp.pad(params["fc2_b"], ((0, 0), (0, Op - output_length)))
    flat_inputs += [fc1_w, fc1_b, fc2_w, fc2_b]

    def _whole(arr):
        nd = arr.ndim
        return pl.BlockSpec(arr.shape, lambda b, _nd=nd: (0,) * _nd)

    in_specs = [pl.BlockSpec((T, Bb, D), lambda b: (0, b, 0))]
    in_specs += [_whole(a) for a in flat_inputs[1:]]

    out_specs = (
        pl.BlockSpec((Bb, Op), lambda b: (b, 0)),
        pl.BlockSpec((num_layers, Bb, Hp), lambda b: (0, b, 0)),
        pl.BlockSpec((num_layers, Bb, Hp), lambda b: (0, b, 0)),
    )

    scratch_shapes = [
        pltpu.VMEM((T, Bb, Hp), jnp.float32),       # inter-layer hidden sequence
        pltpu.VMEM((T, Bb, 4 * Hp), jnp.float32),   # precomputed input projections
    ]

    # Explicit VMEM budget sized from actual usage (default scoped limit is
    # 16/32 MiB depending on generation).
    in_bytes = sum(int(a.size) * a.dtype.itemsize for a in flat_inputs)
    out_bytes = 4 * (Bp * Op + 2 * num_layers * Bp * Hp)
    scratch_bytes = 4 * (T * Bb * Hp + T * Bb * 4 * Hp)
    vmem_limit = int(min(2 * (in_bytes + out_bytes + scratch_bytes) + (8 << 20),
                         64 * 1024 * 1024))

    kernel = functools.partial(lstm_fc_kernel, num_layers=num_layers,
                               hidden_pad=Hp)

    out_p, hn_p, cn_p = pl.pallas_call(
        kernel,
        grid=(n_blocks,),
        out_shape=(
            jax.ShapeDtypeStruct((Bp, Op), jnp.float32),
            jax.ShapeDtypeStruct((num_layers, Bp, Hp), jnp.float32),
            jax.ShapeDtypeStruct((num_layers, Bp, Hp), jnp.float32),
        ),
        in_specs=in_specs,
        out_specs=out_specs,
        scratch_shapes=scratch_shapes,
        compiler_params=pltpu.CompilerParams(
            dimension_semantics=("parallel",),
            vmem_limit_bytes=vmem_limit,
        ),
    )(*flat_inputs)

    out = out_p[:B, :output_length]
    return out, (hn_p[:, :B, :H], cn_p[:, :B, :H])


def init_params(key, input_dim, hidden_dim, num_layers, output_length):
    """Deterministic init mirroring PyTorch default U(-1/sqrt(fan), 1/sqrt(fan))."""
    params = {}
    H = hidden_dim
    k_lstm = 1.0 / jnp.sqrt(H)
    for l in range(num_layers):
        d_in = input_dim if l == 0 else H
        key, k1, k2, k3, k4 = jax.random.split(key, 5)
        params[f"w_ih_{l}"] = jax.random.uniform(k1, (d_in, 4 * H), jnp.float32,
                                                 -k_lstm, k_lstm)
        params[f"w_hh_{l}"] = jax.random.uniform(k2, (H, 4 * H), jnp.float32,
                                                 -k_lstm, k_lstm)
        b_ih = jax.random.uniform(k3, (1, 4 * H), jnp.float32, -k_lstm, k_lstm)
        b_hh = jax.random.uniform(k4, (1, 4 * H), jnp.float32, -k_lstm, k_lstm)
        params[f"b_{l}"] = b_ih + b_hh
    half = H // 2
    key, k1, k2, k3, k4 = jax.random.split(key, 5)
    k_fc1 = 1.0 / jnp.sqrt(H)
    k_fc2 = 1.0 / jnp.sqrt(half)
    params["fc1_w"] = jax.random.uniform(k1, (H, half), jnp.float32, -k_fc1, k_fc1)
    params["fc1_b"] = jax.random.uniform(k2, (1, half), jnp.float32, -k_fc1, k_fc1)
    params["fc2_w"] = jax.random.uniform(k3, (half, output_length), jnp.float32,
                                         -k_fc2, k_fc2)
    params["fc2_b"] = jax.random.uniform(k4, (1, output_length), jnp.float32,
                                         -k_fc2, k_fc2)
    return params


def reference_forward(x, params, *, num_layers, hidden_dim, output_length):
    """Pure-JAX reference of the same forward (canonical [i,f,g,o] gate order)."""
    B, T, D = x.shape
    H = hidden_dim
    seq = x
    h_list, c_list = [], []
    for l in range(num_layers):
        w_ih, w_hh, b = params[f"w_ih_{l}"], params[f"w_hh_{l}"], params[f"b_{l}"]
        h = jnp.zeros((B, H), jnp.float32)
        c = jnp.zeros((B, H), jnp.float32)
        outs = []
        for t in range(T):
            gates = seq[:, t, :] @ w_ih + h @ w_hh + b
            i_g = jax.nn.sigmoid(gates[:, 0 * H:1 * H])
            f_g = jax.nn.sigmoid(gates[:, 1 * H:2 * H])
            g_g = jnp.tanh(gates[:, 2 * H:3 * H])
            o_g = jax.nn.sigmoid(gates[:, 3 * H:4 * H])
            c = f_g * c + i_g * g_g
            h = o_g * jnp.tanh(c)
            outs.append(h)
        seq = jnp.stack(outs, axis=1)
        h_list.append(h)
        c_list.append(c)
    final = seq[:, -1, :]
    y1 = final @ params["fc1_w"] + params["fc1_b"]
    y1 = jnp.where(y1 > 0, y1, 0.01 * y1)
    out = y1 @ params["fc2_w"] + params["fc2_b"]
    return out, (jnp.stack(h_list, 0), jnp.stack(c_list, 0))


if __name__ == "__main__":
    B, T = 2, 8                 # batch, sequence length
    INPUT_DIM = 4
    HIDDEN_DIM = 32
    NUM_LAYERS = 2
    OUTPUT_LENGTH = 1

    key = jax.random.PRNGKey(0)
    key, kx = jax.random.split(key)
    x = jax.random.normal(kx, (B, T, INPUT_DIM), jnp.float32)
    params = init_params(key, INPUT_DIM, HIDDEN_DIM, NUM_LAYERS, OUTPUT_LENGTH)

    out, (h_n, c_n) = lstm_model_forward(
        x, params, num_layers=NUM_LAYERS, hidden_dim=HIDDEN_DIM,
        output_length=OUTPUT_LENGTH)
    jax.block_until_ready((out, h_n, c_n))

    ref_out, (ref_h, ref_c) = reference_forward(
        x, params, num_layers=NUM_LAYERS, hidden_dim=HIDDEN_DIM,
        output_length=OUTPUT_LENGTH)
    assert jnp.allclose(out, ref_out, atol=2e-4), "output mismatch vs reference"
    assert jnp.allclose(h_n, ref_h, atol=2e-4), "h_n mismatch vs reference"
    assert jnp.allclose(c_n, ref_c, atol=2e-4), "c_n mismatch vs reference"

    print("KERNEL_OK")
</pallas_src>

<mosaic_0001>
module attributes {stable_mosaic.version = 11 : i64} {
  func.func @lstm_fc_kernel(%arg0: i32, %arg1: memref<8x8x4xf32, #tpu.memory_space<vmem>>, %arg2: memref<4x512xf32, #tpu.memory_space<vmem>>, %arg3: memref<128x512xf32, #tpu.memory_space<vmem>>, %arg4: memref<1x512xf32, #tpu.memory_space<vmem>>, %arg5: memref<128x512xf32, #tpu.memory_space<vmem>>, %arg6: memref<128x512xf32, #tpu.memory_space<vmem>>, %arg7: memref<1x512xf32, #tpu.memory_space<vmem>>, %arg8: memref<128x128xf32, #tpu.memory_space<vmem>>, %arg9: memref<1x128xf32, #tpu.memory_space<vmem>>, %arg10: memref<128x128xf32, #tpu.memory_space<vmem>>, %arg11: memref<1x128xf32, #tpu.memory_space<vmem>>, %arg12: memref<8x128xf32, #tpu.memory_space<vmem>>, %arg13: memref<2x8x128xf32, #tpu.memory_space<vmem>>, %arg14: memref<2x8x128xf32, #tpu.memory_space<vmem>>, %arg15: memref<8x8x128xf32, #tpu.memory_space<vmem>>, %arg16: memref<8x8x512xf32, #tpu.memory_space<vmem>>) attributes {dimension_semantics = [#tpu.dimension_semantics<parallel>], iteration_bounds = array<i64: 1>, scalar_prefetch = 0 : i64, scratch_operands = 2 : i64, tpu.core_type = #tpu.core_type<tc>, window_params = [{transform_indices = @transform_0, window_bounds = array<i64: 8, 8, 4>}, {pipeline_mode = #tpu.pipeline_mode<synchronous>, transform_indices = @transform_1, window_bounds = array<i64: 4, 512>}, {pipeline_mode = #tpu.pipeline_mode<synchronous>, transform_indices = @transform_2, window_bounds = array<i64: 128, 512>}, {pipeline_mode = #tpu.pipeline_mode<synchronous>, transform_indices = @transform_3, window_bounds = array<i64: 1, 512>}, {pipeline_mode = #tpu.pipeline_mode<synchronous>, transform_indices = @transform_4, window_bounds = array<i64: 128, 512>}, {pipeline_mode = #tpu.pipeline_mode<synchronous>, transform_indices = @transform_5, window_bounds = array<i64: 128, 512>}, {pipeline_mode = #tpu.pipeline_mode<synchronous>, transform_indices = @transform_6, window_bounds = array<i64: 1, 512>}, {pipeline_mode = #tpu.pipeline_mode<synchronous>, transform_indices = @transform_7, window_bounds = array<i64: 128, 128>}, {pipeline_mode = #tpu.pipeline_mode<synchronous>, transform_indices = @transform_8, window_bounds = array<i64: 1, 128>}, {pipeline_mode = #tpu.pipeline_mode<synchronous>, transform_indices = @transform_9, window_bounds = array<i64: 128, 128>}, {pipeline_mode = #tpu.pipeline_mode<synchronous>, transform_indices = @transform_10, window_bounds = array<i64: 1, 128>}, {transform_indices = @transform_11, window_bounds = array<i64: 8, 128>}, {transform_indices = @transform_12, window_bounds = array<i64: 2, 8, 128>}, {transform_indices = @transform_13, window_bounds = array<i64: 2, 8, 128>}]} {
    %c0 = arith.constant 0 : index
    %c0_0 = arith.constant 0 : index
    %0 = vector.load %arg2[%c0, %c0_0] : memref<4x512xf32, #tpu.memory_space<vmem>>, vector<4x512xf32>
    %c0_1 = arith.constant 0 : index
    %c0_2 = arith.constant 0 : index
    %1 = vector.load %arg3[%c0_1, %c0_2] : memref<128x512xf32, #tpu.memory_space<vmem>>, vector<128x512xf32>
    %c0_3 = arith.constant 0 : index
    %c0_4 = arith.constant 0 : index
    %2 = vector.load %arg4[%c0_3, %c0_4] : memref<1x512xf32, #tpu.memory_space<vmem>>, vector<1x512xf32>
    %c0_5 = arith.constant 0 : index
    %c0_6 = arith.constant 0 : index
    %c0_7 = arith.constant 0 : index
    %3 = vector.load %arg1[%c0_5, %c0_6, %c0_7] : memref<8x8x4xf32, #tpu.memory_space<vmem>>, vector<8x8x4xf32>
    %4 = vector.shape_cast %3 : vector<8x8x4xf32> to vector<64x4xf32>
    %cst = arith.constant dense<0.000000e+00> : vector<64x512xf32>
    %5 = tpu.matmul %4, %0, %cst {dimension_numbers = #tpu.dot_dimension_numbers<[1], [0], [0], [1], [0, 0, 1, 1], [], []>} : vector<64x4xf32>, vector<4x512xf32>, vector<64x512xf32> -> vector<64x512xf32>
    %6 = vector.broadcast %2 : vector<1x512xf32> to vector<64x512xf32>
    %7 = arith.addf %5, %6 : vector<64x512xf32>
    %8 = vector.shape_cast %7 : vector<64x512xf32> to vector<8x8x512xf32>
    %c0_8 = arith.constant 0 : index
    %c0_9 = arith.constant 0 : index
    %c0_10 = arith.constant 0 : index
    %9 = vector.load %arg16[%c0_8, %c0_9, %c0_10] : memref<8x8x512xf32, #tpu.memory_space<vmem>>, vector<8x8x512xf32>
    tpu.vector_store %arg16[%c0_8, %c0_9, %c0_10], %8 {strides = array<i32>} : memref<8x8x512xf32, #tpu.memory_space<vmem>>, vector<8x8x512xf32>,
    %cst_11 = arith.constant 0.000000e+00 : f32
    %10 = vector.broadcast %cst_11 : f32 to vector<8x128xf32>
    %cst_12 = arith.constant 0.000000e+00 : f32
    %11 = vector.broadcast %cst_12 : f32 to vector<8x128xf32>
    %c0_i32 = arith.constant 0 : i32
    %12 = arith.index_cast %c0_i32 : i32 to index
    %c0_13 = arith.constant 0 : index
    %c0_14 = arith.constant 0 : index
    %13 = vector.load %arg16[%12, %c0_13, %c0_14] : memref<8x8x512xf32, #tpu.memory_space<vmem>>, vector<1x8x512xf32>
    %14 = vector.shape_cast %13 : vector<1x8x512xf32> to vector<8x512xf32>
    %cst_15 = arith.constant dense<0.000000e+00> : vector<8x512xf32>
    %15 = tpu.matmul %10, %1, %cst_15 {dimension_numbers = #tpu.dot_dimension_numbers<[1], [0], [0], [1], [0, 0, 1, 1], [], []>} : vector<8x128xf32>, vector<128x512xf32>, vector<8x512xf32> -> vector<8x512xf32>
    %16 = arith.addf %14, %15 : vector<8x512xf32>
    %17 = vector.extract_strided_slice %16 {offsets = [0, 0], sizes = [8, 384], strides = [1, 1]} : vector<8x512xf32> to vector<8x384xf32>
    %18 = arith.negf %17 : vector<8x384xf32>
    %19 = math.exp %18 : vector<8x384xf32>
    %cst_16 = arith.constant 1.000000e+00 : f32
    %20 = vector.broadcast %cst_16 : f32 to vector<8x384xf32>
    %21 = arith.addf %20, %19 : vector<8x384xf32>
    %22 = arith.divf %20, %21 : vector<8x384xf32>
    %23 = vector.extract_strided_slice %22 {offsets = [0, 0], sizes = [8, 128], strides = [1, 1]} : vector<8x384xf32> to vector<8x128xf32>
    %24 = vector.extract_strided_slice %22 {offsets = [0, 128], sizes = [8, 128], strides = [1, 1]} : vector<8x384xf32> to vector<8x128xf32>
    %25 = vector.extract_strided_slice %22 {offsets = [0, 256], sizes = [8, 128], strides = [1, 1]} : vector<8x384xf32> to vector<8x128xf32>
    %26 = vector.extract_strided_slice %16 {offsets = [0, 384], sizes = [8, 128], strides = [1, 1]} : vector<8x512xf32> to vector<8x128xf32>
    %27 = math.tanh %26 : vector<8x128xf32>
    %28 = arith.mulf %24, %11 : vector<8x128xf32>
    %29 = arith.mulf %23, %27 : vector<8x128xf32>
    %30 = arith.addf %28, %29 : vector<8x128xf32>
    %31 = math.tanh %30 : vector<8x128xf32>
    %32 = arith.mulf %25, %31 : vector<8x128xf32>
    %33 = arith.index_cast %c0_i32 : i32 to index
    %c0_17 = arith.constant 0 : index
    %c0_18 = arith.constant 0 : index
    %34 = vector.load %arg15[%33, %c0_17, %c0_18] : memref<8x8x128xf32, #tpu.memory_space<vmem>>, vector<1x8x128xf32>
    %35 = vector.shape_cast %34 : vector<1x8x128xf32> to vector<8x128xf32>
    %36 = vector.shape_cast %32 : vector<8x128xf32> to vector<1x8x128xf32>
    tpu.vector_store %arg15[%33, %c0_17, %c0_18], %36 {strides = array<i32>} : memref<8x8x128xf32, #tpu.memory_space<vmem>>, vector<1x8x128xf32>,
    %c1_i32 = arith.constant 1 : i32
    %37 = arith.index_cast %c1_i32 : i32 to index
    %c0_19 = arith.constant 0 : index
    %c0_20 = arith.constant 0 : index
    %38 = vector.load %arg16[%37, %c0_19, %c0_20] : memref<8x8x512xf32, #tpu.memory_space<vmem>>, vector<1x8x512xf32>
    %39 = vector.shape_cast %38 : vector<1x8x512xf32> to vector<8x512xf32>
    %cst_21 = arith.constant dense<0.000000e+00> : vector<8x512xf32>
    %40 = tpu.matmul %32, %1, %cst_21 {dimension_numbers = #tpu.dot_dimension_numbers<[1], [0], [0], [1], [0, 0, 1, 1], [], []>} : vector<8x128xf32>, vector<128x512xf32>, vector<8x512xf32> -> vector<8x512xf32>
    %41 = arith.addf %39, %40 : vector<8x512xf32>
    %42 = vector.extract_strided_slice %41 {offsets = [0, 0], sizes = [8, 384], strides = [1, 1]} : vector<8x512xf32> to vector<8x384xf32>
    %43 = arith.negf %42 : vector<8x384xf32>
    %44 = math.exp %43 : vector<8x384xf32>
    %cst_22 = arith.constant 1.000000e+00 : f32
    %45 = vector.broadcast %cst_22 : f32 to vector<8x384xf32>
    %46 = arith.addf %45, %44 : vector<8x384xf32>
    %47 = arith.divf %45, %46 : vector<8x384xf32>
    %48 = vector.extract_strided_slice %47 {offsets = [0, 0], sizes = [8, 128], strides = [1, 1]} : vector<8x384xf32> to vector<8x128xf32>
    %49 = vector.extract_strided_slice %47 {offsets = [0, 128], sizes = [8, 128], strides = [1, 1]} : vector<8x384xf32> to vector<8x128xf32>
    %50 = vector.extract_strided_slice %47 {offsets = [0, 256], sizes = [8, 128], strides = [1, 1]} : vector<8x384xf32> to vector<8x128xf32>
    %51 = vector.extract_strided_slice %41 {offsets = [0, 384], sizes = [8, 128], strides = [1, 1]} : vector<8x512xf32> to vector<8x128xf32>
    %52 = math.tanh %51 : vector<8x128xf32>
    %53 = arith.mulf %49, %30 : vector<8x128xf32>
    %54 = arith.mulf %48, %52 : vector<8x128xf32>
    %55 = arith.addf %53, %54 : vector<8x128xf32>
    %56 = math.tanh %55 : vector<8x128xf32>
    %57 = arith.mulf %50, %56 : vector<8x128xf32>
    %58 = arith.index_cast %c1_i32 : i32 to index
    %c0_23 = arith.constant 0 : index
    %c0_24 = arith.constant 0 : index
    %59 = vector.load %arg15[%58, %c0_23, %c0_24] : memref<8x8x128xf32, #tpu.memory_space<vmem>>, vector<1x8x128xf32>
    %60 = vector.shape_cast %59 : vector<1x8x128xf32> to vector<8x128xf32>
    %61 = vector.shape_cast %57 : vector<8x128xf32> to vector<1x8x128xf32>
    tpu.vector_store %arg15[%58, %c0_23, %c0_24], %61 {strides = array<i32>} : memref<8x8x128xf32, #tpu.memory_space<vmem>>, vector<1x8x128xf32>,
    %c2_i32 = arith.constant 2 : i32
    %62 = arith.index_cast %c2_i32 : i32 to index
    %c0_25 = arith.constant 0 : index
    %c0_26 = arith.constant 0 : index
    %63 = vector.load %arg16[%62, %c0_25, %c0_26] : memref<8x8x512xf32, #tpu.memory_space<vmem>>, vector<1x8x512xf32>
    %64 = vector.shape_cast %63 : vector<1x8x512xf32> to vector<8x512xf32>
    %cst_27 = arith.constant dense<0.000000e+00> : vector<8x512xf32>
    %65 = tpu.matmul %57, %1, %cst_27 {dimension_numbers = #tpu.dot_dimension_numbers<[1], [0], [0], [1], [0, 0, 1, 1], [], []>} : vector<8x128xf32>, vector<128x512xf32>, vector<8x512xf32> -> vector<8x512xf32>
    %66 = arith.addf %64, %65 : vector<8x512xf32>
    %67 = vector.extract_strided_slice %66 {offsets = [0, 0], sizes = [8, 384], strides = [1, 1]} : vector<8x512xf32> to vector<8x384xf32>
    %68 = arith.negf %67 : vector<8x384xf32>
    %69 = math.exp %68 : vector<8x384xf32>
    %cst_28 = arith.constant 1.000000e+00 : f32
    %70 = vector.broadcast %cst_28 : f32 to vector<8x384xf32>
    %71 = arith.addf %70, %69 : vector<8x384xf32>
    %72 = arith.divf %70, %71 : vector<8x384xf32>
    %73 = vector.extract_strided_slice %72 {offsets = [0, 0], sizes = [8, 128], strides = [1, 1]} : vector<8x384xf32> to vector<8x128xf32>
    %74 = vector.extract_strided_slice %72 {offsets = [0, 128], sizes = [8, 128], strides = [1, 1]} : vector<8x384xf32> to vector<8x128xf32>
    %75 = vector.extract_strided_slice %72 {offsets = [0, 256], sizes = [8, 128], strides = [1, 1]} : vector<8x384xf32> to vector<8x128xf32>
    %76 = vector.extract_strided_slice %66 {offsets = [0, 384], sizes = [8, 128], strides = [1, 1]} : vector<8x512xf32> to vector<8x128xf32>
    %77 = math.tanh %76 : vector<8x128xf32>
    %78 = arith.mulf %74, %55 : vector<8x128xf32>
    %79 = arith.mulf %73, %77 : vector<8x128xf32>
    %80 = arith.addf %78, %79 : vector<8x128xf32>
    %81 = math.tanh %80 : vector<8x128xf32>
    %82 = arith.mulf %75, %81 : vector<8x128xf32>
    %83 = arith.index_cast %c2_i32 : i32 to index
    %c0_29 = arith.constant 0 : index
    %c0_30 = arith.constant 0 : index
    %84 = vector.load %arg15[%83, %c0_29, %c0_30] : memref<8x8x128xf32, #tpu.memory_space<vmem>>, vector<1x8x128xf32>
    %85 = vector.shape_cast %84 : vector<1x8x128xf32> to vector<8x128xf32>
    %86 = vector.shape_cast %82 : vector<8x128xf32> to vector<1x8x128xf32>
    tpu.vector_store %arg15[%83, %c0_29, %c0_30], %86 {strides = array<i32>} : memref<8x8x128xf32, #tpu.memory_space<vmem>>, vector<1x8x128xf32>,
    %c3_i32 = arith.constant 3 : i32
    %87 = arith.index_cast %c3_i32 : i32 to index
    %c0_31 = arith.constant 0 : index
    %c0_32 = arith.constant 0 : index
    %88 = vector.load %arg16[%87, %c0_31, %c0_32] : memref<8x8x512xf32, #tpu.memory_space<vmem>>, vector<1x8x512xf32>
    %89 = vector.shape_cast %88 : vector<1x8x512xf32> to vector<8x512xf32>
    %cst_33 = arith.constant dense<0.000000e+00> : vector<8x512xf32>
    %90 = tpu.matmul %82, %1, %cst_33 {dimension_numbers = #tpu.dot_dimension_numbers<[1], [0], [0], [1], [0, 0, 1, 1], [], []>} : vector<8x128xf32>, vector<128x512xf32>, vector<8x512xf32> -> vector<8x512xf32>
    %91 = arith.addf %89, %90 : vector<8x512xf32>
    %92 = vector.extract_strided_slice %91 {offsets = [0, 0], sizes = [8, 384], strides = [1, 1]} : vector<8x512xf32> to vector<8x384xf32>
    %93 = arith.negf %92 : vector<8x384xf32>
    %94 = math.exp %93 : vector<8x384xf32>
    %cst_34 = arith.constant 1.000000e+00 : f32
    %95 = vector.broadcast %cst_34 : f32 to vector<8x384xf32>
    %96 = arith.addf %95, %94 : vector<8x384xf32>
    %97 = arith.divf %95, %96 : vector<8x384xf32>
    %98 = vector.extract_strided_slice %97 {offsets = [0, 0], sizes = [8, 128], strides = [1, 1]} : vector<8x384xf32> to vector<8x128xf32>
    %99 = vector.extract_strided_slice %97 {offsets = [0, 128], sizes = [8, 128], strides = [1, 1]} : vector<8x384xf32> to vector<8x128xf32>
    %100 = vector.extract_strided_slice %97 {offsets = [0, 256], sizes = [8, 128], strides = [1, 1]} : vector<8x384xf32> to vector<8x128xf32>
    %101 = vector.extract_strided_slice %91 {offsets = [0, 384], sizes = [8, 128], strides = [1, 1]} : vector<8x512xf32> to vector<8x128xf32>
    %102 = math.tanh %101 : vector<8x128xf32>
    %103 = arith.mulf %99, %80 : vector<8x128xf32>
    %104 = arith.mulf %98, %102 : vector<8x128xf32>
    %105 = arith.addf %103, %104 : vector<8x128xf32>
    %106 = math.tanh %105 : vector<8x128xf32>
    %107 = arith.mulf %100, %106 : vector<8x128xf32>
    %108 = arith.index_cast %c3_i32 : i32 to index
    %c0_35 = arith.constant 0 : index
    %c0_36 = arith.constant 0 : index
    %109 = vector.load %arg15[%108, %c0_35, %c0_36] : memref<8x8x128xf32, #tpu.memory_space<vmem>>, vector<1x8x128xf32>
    %110 = vector.shape_cast %109 : vector<1x8x128xf32> to vector<8x128xf32>
    %111 = vector.shape_cast %107 : vector<8x128xf32> to vector<1x8x128xf32>
    tpu.vector_store %arg15[%108, %c0_35, %c0_36], %111 {strides = array<i32>} : memref<8x8x128xf32, #tpu.memory_space<vmem>>, vector<1x8x128xf32>,
    %c4_i32 = arith.constant 4 : i32
    %112 = arith.index_cast %c4_i32 : i32 to index
    %c0_37 = arith.constant 0 : index
    %c0_38 = arith.constant 0 : index
    %113 = vector.load %arg16[%112, %c0_37, %c0_38] : memref<8x8x512xf32, #tpu.memory_space<vmem>>, vector<1x8x512xf32>
    %114 = vector.shape_cast %113 : vector<1x8x512xf32> to vector<8x512xf32>
    %cst_39 = arith.constant dense<0.000000e+00> : vector<8x512xf32>
    %115 = tpu.matmul %107, %1, %cst_39 {dimension_numbers = #tpu.dot_dimension_numbers<[1], [0], [0], [1], [0, 0, 1, 1], [], []>} : vector<8x128xf32>, vector<128x512xf32>, vector<8x512xf32> -> vector<8x512xf32>
    %116 = arith.addf %114, %115 : vector<8x512xf32>
    %117 = vector.extract_strided_slice %116 {offsets = [0, 0], sizes = [8, 384], strides = [1, 1]} : vector<8x512xf32> to vector<8x384xf32>
    %118 = arith.negf %117 : vector<8x384xf32>
    %119 = math.exp %118 : vector<8x384xf32>
    %cst_40 = arith.constant 1.000000e+00 : f32
    %120 = vector.broadcast %cst_40 : f32 to vector<8x384xf32>
    %121 = arith.addf %120, %119 : vector<8x384xf32>
    %122 = arith.divf %120, %121 : vector<8x384xf32>
    %123 = vector.extract_strided_slice %122 {offsets = [0, 0], sizes = [8, 128], strides = [1, 1]} : vector<8x384xf32> to vector<8x128xf32>
    %124 = vector.extract_strided_slice %122 {offsets = [0, 128], sizes = [8, 128], strides = [1, 1]} : vector<8x384xf32> to vector<8x128xf32>
    %125 = vector.extract_strided_slice %122 {offsets = [0, 256], sizes = [8, 128], strides = [1, 1]} : vector<8x384xf32> to vector<8x128xf32>
    %126 = vector.extract_strided_slice %116 {offsets = [0, 384], sizes = [8, 128], strides = [1, 1]} : vector<8x512xf32> to vector<8x128xf32>
    %127 = math.tanh %126 : vector<8x128xf32>
    %128 = arith.mulf %124, %105 : vector<8x128xf32>
    %129 = arith.mulf %123, %127 : vector<8x128xf32>
    %130 = arith.addf %128, %129 : vector<8x128xf32>
    %131 = math.tanh %130 : vector<8x128xf32>
    %132 = arith.mulf %125, %131 : vector<8x128xf32>
    %133 = arith.index_cast %c4_i32 : i32 to index
    %c0_41 = arith.constant 0 : index
    %c0_42 = arith.constant 0 : index
    %134 = vector.load %arg15[%133, %c0_41, %c0_42] : memref<8x8x128xf32, #tpu.memory_space<vmem>>, vector<1x8x128xf32>
    %135 = vector.shape_cast %134 : vector<1x8x128xf32> to vector<8x128xf32>
    %136 = vector.shape_cast %132 : vector<8x128xf32> to vector<1x8x128xf32>
    tpu.vector_store %arg15[%133, %c0_41, %c0_42], %136 {strides = array<i32>} : memref<8x8x128xf32, #tpu.memory_space<vmem>>, vector<1x8x128xf32>,
    %c5_i32 = arith.constant 5 : i32
    %137 = arith.index_cast %c5_i32 : i32 to index
    %c0_43 = arith.constant 0 : index
    %c0_44 = arith.constant 0 : index
    %138 = vector.load %arg16[%137, %c0_43, %c0_44] : memref<8x8x512xf32, #tpu.memory_space<vmem>>, vector<1x8x512xf32>
    %139 = vector.shape_cast %138 : vector<1x8x512xf32> to vector<8x512xf32>
    %cst_45 = arith.constant dense<0.000000e+00> : vector<8x512xf32>
    %140 = tpu.matmul %132, %1, %cst_45 {dimension_numbers = #tpu.dot_dimension_numbers<[1], [0], [0], [1], [0, 0, 1, 1], [], []>} : vector<8x128xf32>, vector<128x512xf32>, vector<8x512xf32> -> vector<8x512xf32>
    %141 = arith.addf %139, %140 : vector<8x512xf32>
    %142 = vector.extract_strided_slice %141 {offsets = [0, 0], sizes = [8, 384], strides = [1, 1]} : vector<8x512xf32> to vector<8x384xf32>
    %143 = arith.negf %142 : vector<8x384xf32>
    %144 = math.exp %143 : vector<8x384xf32>
    %cst_46 = arith.constant 1.000000e+00 : f32
    %145 = vector.broadcast %cst_46 : f32 to vector<8x384xf32>
    %146 = arith.addf %145, %144 : vector<8x384xf32>
    %147 = arith.divf %145, %146 : vector<8x384xf32>
    %148 = vector.extract_strided_slice %147 {offsets = [0, 0], sizes = [8, 128], strides = [1, 1]} : vector<8x384xf32> to vector<8x128xf32>
    %149 = vector.extract_strided_slice %147 {offsets = [0, 128], sizes = [8, 128], strides = [1, 1]} : vector<8x384xf32> to vector<8x128xf32>
    %150 = vector.extract_strided_slice %147 {offsets = [0, 256], sizes = [8, 128], strides = [1, 1]} : vector<8x384xf32> to vector<8x128xf32>
    %151 = vector.extract_strided_slice %141 {offsets = [0, 384], sizes = [8, 128], strides = [1, 1]} : vector<8x512xf32> to vector<8x128xf32>
    %152 = math.tanh %151 : vector<8x128xf32>
    %153 = arith.mulf %149, %130 : vector<8x128xf32>
    %154 = arith.mulf %148, %152 : vector<8x128xf32>
    %155 = arith.addf %153, %154 : vector<8x128xf32>
    %156 = math.tanh %155 : vector<8x128xf32>
    %157 = arith.mulf %150, %156 : vector<8x128xf32>
    %158 = arith.index_cast %c5_i32 : i32 to index
    %c0_47 = arith.constant 0 : index
    %c0_48 = arith.constant 0 : index
    %159 = vector.load %arg15[%158, %c0_47, %c0_48] : memref<8x8x128xf32, #tpu.memory_space<vmem>>, vector<1x8x128xf32>
    %160 = vector.shape_cast %159 : vector<1x8x128xf32> to vector<8x128xf32>
    %161 = vector.shape_cast %157 : vector<8x128xf32> to vector<1x8x128xf32>
    tpu.vector_store %arg15[%158, %c0_47, %c0_48], %161 {strides = array<i32>} : memref<8x8x128xf32, #tpu.memory_space<vmem>>, vector<1x8x128xf32>,
    %c6_i32 = arith.constant 6 : i32
    %162 = arith.index_cast %c6_i32 : i32 to index
    %c0_49 = arith.constant 0 : index
    %c0_50 = arith.constant 0 : index
    %163 = vector.load %arg16[%162, %c0_49, %c0_50] : memref<8x8x512xf32, #tpu.memory_space<vmem>>, vector<1x8x512xf32>
    %164 = vector.shape_cast %163 : vector<1x8x512xf32> to vector<8x512xf32>
    %cst_51 = arith.constant dense<0.000000e+00> : vector<8x512xf32>
    %165 = tpu.matmul %157, %1, %cst_51 {dimension_numbers = #tpu.dot_dimension_numbers<[1], [0], [0], [1], [0, 0, 1, 1], [], []>} : vector<8x128xf32>, vector<128x512xf32>, vector<8x512xf32> -> vector<8x512xf32>
    %166 = arith.addf %164, %165 : vector<8x512xf32>
    %167 = vector.extract_strided_slice %166 {offsets = [0, 0], sizes = [8, 384], strides = [1, 1]} : vector<8x512xf32> to vector<8x384xf32>
    %168 = arith.negf %167 : vector<8x384xf32>
    %169 = math.exp %168 : vector<8x384xf32>
    %cst_52 = arith.constant 1.000000e+00 : f32
    %170 = vector.broadcast %cst_52 : f32 to vector<8x384xf32>
    %171 = arith.addf %170, %169 : vector<8x384xf32>
    %172 = arith.divf %170, %171 : vector<8x384xf32>
    %173 = vector.extract_strided_slice %172 {offsets = [0, 0], sizes = [8, 128], strides = [1, 1]} : vector<8x384xf32> to vector<8x128xf32>
    %174 = vector.extract_strided_slice %172 {offsets = [0, 128], sizes = [8, 128], strides = [1, 1]} : vector<8x384xf32> to vector<8x128xf32>
    %175 = vector.extract_strided_slice %172 {offsets = [0, 256], sizes = [8, 128], strides = [1, 1]} : vector<8x384xf32> to vector<8x128xf32>
    %176 = vector.extract_strided_slice %166 {offsets = [0, 384], sizes = [8, 128], strides = [1, 1]} : vector<8x512xf32> to vector<8x128xf32>
    %177 = math.tanh %176 : vector<8x128xf32>
    %178 = arith.mulf %174, %155 : vector<8x128xf32>
    %179 = arith.mulf %173, %177 : vector<8x128xf32>
    %180 = arith.addf %178, %179 : vector<8x128xf32>
    %181 = math.tanh %180 : vector<8x128xf32>
    %182 = arith.mulf %175, %181 : vector<8x128xf32>
    %183 = arith.index_cast %c6_i32 : i32 to index
    %c0_53 = arith.constant 0 : index
    %c0_54 = arith.constant 0 : index
    %184 = vector.load %arg15[%183, %c0_53, %c0_54] : memref<8x8x128xf32, #tpu.memory_space<vmem>>, vector<1x8x128xf32>
    %185 = vector.shape_cast %184 : vector<1x8x128xf32> to vector<8x128xf32>
    %186 = vector.shape_cast %182 : vector<8x128xf32> to vector<1x8x128xf32>
    tpu.vector_store %arg15[%183, %c0_53, %c0_54], %186 {strides = array<i32>} : memref<8x8x128xf32, #tpu.memory_space<vmem>>, vector<1x8x128xf32>,
    %c7_i32 = arith.constant 7 : i32
    %187 = arith.index_cast %c7_i32 : i32 to index
    %c0_55 = arith.constant 0 : index
    %c0_56 = arith.constant 0 : index
    %188 = vector.load %arg16[%187, %c0_55, %c0_56] : memref<8x8x512xf32, #tpu.memory_space<vmem>>, vector<1x8x512xf32>
    %189 = vector.shape_cast %188 : vector<1x8x512xf32> to vector<8x512xf32>
    %cst_57 = arith.constant dense<0.000000e+00> : vector<8x512xf32>
    %190 = tpu.matmul %182, %1, %cst_57 {dimension_numbers = #tpu.dot_dimension_numbers<[1], [0], [0], [1], [0, 0, 1, 1], [], []>} : vector<8x128xf32>, vector<128x512xf32>, vector<8x512xf32> -> vector<8x512xf32>
    %191 = arith.addf %189, %190 : vector<8x512xf32>
    %192 = vector.extract_strided_slice %191 {offsets = [0, 0], sizes = [8, 384], strides = [1, 1]} : vector<8x512xf32> to vector<8x384xf32>
    %193 = arith.negf %192 : vector<8x384xf32>
    %194 = math.exp %193 : vector<8x384xf32>
    %cst_58 = arith.constant 1.000000e+00 : f32
    %195 = vector.broadcast %cst_58 : f32 to vector<8x384xf32>
    %196 = arith.addf %195, %194 : vector<8x384xf32>
    %197 = arith.divf %195, %196 : vector<8x384xf32>
    %198 = vector.extract_strided_slice %197 {offsets = [0, 0], sizes = [8, 128], strides = [1, 1]} : vector<8x384xf32> to vector<8x128xf32>
    %199 = vector.extract_strided_slice %197 {offsets = [0, 128], sizes = [8, 128], strides = [1, 1]} : vector<8x384xf32> to vector<8x128xf32>
    %200 = vector.extract_strided_slice %197 {offsets = [0, 256], sizes = [8, 128], strides = [1, 1]} : vector<8x384xf32> to vector<8x128xf32>
    %201 = vector.extract_strided_slice %191 {offsets = [0, 384], sizes = [8, 128], strides = [1, 1]} : vector<8x512xf32> to vector<8x128xf32>
    %202 = math.tanh %201 : vector<8x128xf32>
    %203 = arith.mulf %199, %180 : vector<8x128xf32>
    %204 = arith.mulf %198, %202 : vector<8x128xf32>
    %205 = arith.addf %203, %204 : vector<8x128xf32>
    %206 = math.tanh %205 : vector<8x128xf32>
    %207 = arith.mulf %200, %206 : vector<8x128xf32>
    %208 = arith.index_cast %c7_i32 : i32 to index
    %c0_59 = arith.constant 0 : index
    %c0_60 = arith.constant 0 : index
    %209 = vector.load %arg15[%208, %c0_59, %c0_60] : memref<8x8x128xf32, #tpu.memory_space<vmem>>, vector<1x8x128xf32>
    %210 = vector.shape_cast %209 : vector<1x8x128xf32> to vector<8x128xf32>
    %211 = vector.shape_cast %207 : vector<8x128xf32> to vector<1x8x128xf32>
    tpu.vector_store %arg15[%208, %c0_59, %c0_60], %211 {strides = array<i32>} : memref<8x8x128xf32, #tpu.memory_space<vmem>>, vector<1x8x128xf32>,
    %c8_i32 = arith.constant 8 : i32
    %c0_61 = arith.constant 0 : index
    %c0_62 = arith.constant 0 : index
    %c0_63 = arith.constant 0 : index
    %212 = vector.load %arg13[%c0_61, %c0_62, %c0_63] : memref<2x8x128xf32, #tpu.memory_space<vmem>>, vector<1x8x128xf32>
    %213 = vector.shape_cast %212 : vector<1x8x128xf32> to vector<8x128xf32>
    %214 = vector.shape_cast %207 : vector<8x128xf32> to vector<1x8x128xf32>
    tpu.vector_store %arg13[%c0_61, %c0_62, %c0_63], %214 {strides = array<i32>} : memref<2x8x128xf32, #tpu.memory_space<vmem>>, vector<1x8x128xf32>,
    %c0_64 = arith.constant 0 : index
    %c0_65 = arith.constant 0 : index
    %c0_66 = arith.constant 0 : index
    %215 = vector.load %arg14[%c0_64, %c0_65, %c0_66] : memref<2x8x128xf32, #tpu.memory_space<vmem>>, vector<1x8x128xf32>
    %216 = vector.shape_cast %215 : vector<1x8x128xf32> to vector<8x128xf32>
    %217 = vector.shape_cast %205 : vector<8x128xf32> to vector<1x8x128xf32>
    tpu.vector_store %arg14[%c0_64, %c0_65, %c0_66], %217 {strides = array<i32>} : memref<2x8x128xf32, #tpu.memory_space<vmem>>, vector<1x8x128xf32>,
    %c0_67 = arith.constant 0 : index
    %c0_68 = arith.constant 0 : index
    %218 = vector.load %arg5[%c0_67, %c0_68] : memref<128x512xf32, #tpu.memory_space<vmem>>, vector<128x512xf32>
    %c0_69 = arith.constant 0 : index
    %c0_70 = arith.constant 0 : index
    %219 = vector.load %arg6[%c0_69, %c0_70] : memref<128x512xf32, #tpu.memory_space<vmem>>, vector<128x512xf32>
    %c0_71 = arith.constant 0 : index
    %c0_72 = arith.constant 0 : index
    %220 = vector.load %arg7[%c0_71, %c0_72] : memref<1x512xf32, #tpu.memory_space<vmem>>, vector<1x512xf32>
    %c0_73 = arith.constant 0 : index
    %c0_74 = arith.constant 0 : index
    %c0_75 = arith.constant 0 : index
    %221 = vector.load %arg15[%c0_73, %c0_74, %c0_75] : memref<8x8x128xf32, #tpu.memory_space<vmem>>, vector<8x8x128xf32>
    %222 = vector.shape_cast %221 : vector<8x8x128xf32> to vector<64x128xf32>
    %cst_76 = arith.constant dense<0.000000e+00> : vector<64x512xf32>
    %223 = tpu.matmul %222, %218, %cst_76 {dimension_numbers = #tpu.dot_dimension_numbers<[1], [0], [0], [1], [0, 0, 1, 1], [], []>} : vector<64x128xf32>, vector<128x512xf32>, vector<64x512xf32> -> vector<64x512xf32>
    %224 = vector.broadcast %220 : vector<1x512xf32> to vector<64x512xf32>
    %225 = arith.addf %223, %224 : vector<64x512xf32>
    %226 = vector.shape_cast %225 : vector<64x512xf32> to vector<8x8x512xf32>
    %c0_77 = arith.constant 0 : index
    %c0_78 = arith.constant 0 : index
    %c0_79 = arith.constant 0 : index
    %227 = vector.load %arg16[%c0_77, %c0_78, %c0_79] : memref<8x8x512xf32, #tpu.memory_space<vmem>>, vector<8x8x512xf32>
    tpu.vector_store %arg16[%c0_77, %c0_78, %c0_79], %226 {strides = array<i32>} : memref<8x8x512xf32, #tpu.memory_space<vmem>>, vector<8x8x512xf32>,
    %cst_80 = arith.constant 0.000000e+00 : f32
    %228 = vector.broadcast %cst_80 : f32 to vector<8x128xf32>
    %cst_81 = arith.constant 0.000000e+00 : f32
    %229 = vector.broadcast %cst_81 : f32 to vector<8x128xf32>
    %c0_i32_82 = arith.constant 0 : i32
    %230 = arith.index_cast %c0_i32_82 : i32 to index
    %c0_83 = arith.constant 0 : index
    %c0_84 = arith.constant 0 : index
    %231 = vector.load %arg16[%230, %c0_83, %c0_84] : memref<8x8x512xf32, #tpu.memory_space<vmem>>, vector<1x8x512xf32>
    %232 = vector.shape_cast %231 : vector<1x8x512xf32> to vector<8x512xf32>
    %cst_85 = arith.constant dense<0.000000e+00> : vector<8x512xf32>
    %233 = tpu.matmul %228, %219, %cst_85 {dimension_numbers = #tpu.dot_dimension_numbers<[1], [0], [0], [1], [0, 0, 1, 1], [], []>} : vector<8x128xf32>, vector<128x512xf32>, vector<8x512xf32> -> vector<8x512xf32>
    %234 = arith.addf %232, %233 : vector<8x512xf32>
    %235 = vector.extract_strided_slice %234 {offsets = [0, 0], sizes = [8, 384], strides = [1, 1]} : vector<8x512xf32> to vector<8x384xf32>
    %236 = arith.negf %235 : vector<8x384xf32>
    %237 = math.exp %236 : vector<8x384xf32>
    %cst_86 = arith.constant 1.000000e+00 : f32
    %238 = vector.broadcast %cst_86 : f32 to vector<8x384xf32>
    %239 = arith.addf %238, %237 : vector<8x384xf32>
    %240 = arith.divf %238, %239 : vector<8x384xf32>
    %241 = vector.extract_strided_slice %240 {offsets = [0, 0], sizes = [8, 128], strides = [1, 1]} : vector<8x384xf32> to vector<8x128xf32>
    %242 = vector.extract_strided_slice %240 {offsets = [0, 128], sizes = [8, 128], strides = [1, 1]} : vector<8x384xf32> to vector<8x128xf32>
    %243 = vector.extract_strided_slice %240 {offsets = [0, 256], sizes = [8, 128], strides = [1, 1]} : vector<8x384xf32> to vector<8x128xf32>
    %244 = vector.extract_strided_slice %234 {offsets = [0, 384], sizes = [8, 128], strides = [1, 1]} : vector<8x512xf32> to vector<8x128xf32>
    %245 = math.tanh %244 : vector<8x128xf32>
    %246 = arith.mulf %242, %229 : vector<8x128xf32>
    %247 = arith.mulf %241, %245 : vector<8x128xf32>
    %248 = arith.addf %246, %247 : vector<8x128xf32>
    %249 = math.tanh %248 : vector<8x128xf32>
    %250 = arith.mulf %243, %249 : vector<8x128xf32>
    %c1_i32_87 = arith.constant 1 : i32
    %251 = arith.index_cast %c1_i32_87 : i32 to index
    %c0_88 = arith.constant 0 : index
    %c0_89 = arith.constant 0 : index
    %252 = vector.load %arg16[%251, %c0_88, %c0_89] : memref<8x8x512xf32, #tpu.memory_space<vmem>>, vector<1x8x512xf32>
    %253 = vector.shape_cast %252 : vector<1x8x512xf32> to vector<8x512xf32>
    %cst_90 = arith.constant dense<0.000000e+00> : vector<8x512xf32>
    %254 = tpu.matmul %250, %219, %cst_90 {dimension_numbers = #tpu.dot_dimension_numbers<[1], [0], [0], [1], [0, 0, 1, 1], [], []>} : vector<8x128xf32>, vector<128x512xf32>, vector<8x512xf32> -> vector<8x512xf32>
    %255 = arith.addf %253, %254 : vector<8x512xf32>
    %256 = vector.extract_strided_slice %255 {offsets = [0, 0], sizes = [8, 384], strides = [1, 1]} : vector<8x512xf32> to vector<8x384xf32>
    %257 = arith.negf %256 : vector<8x384xf32>
    %258 = math.exp %257 : vector<8x384xf32>
    %cst_91 = arith.constant 1.000000e+00 : f32
    %259 = vector.broadcast %cst_91 : f32 to vector<8x384xf32>
    %260 = arith.addf %259, %258 : vector<8x384xf32>
    %261 = arith.divf %259, %260 : vector<8x384xf32>
    %262 = vector.extract_strided_slice %261 {offsets = [0, 0], sizes = [8, 128], strides = [1, 1]} : vector<8x384xf32> to vector<8x128xf32>
    %263 = vector.extract_strided_slice %261 {offsets = [0, 128], sizes = [8, 128], strides = [1, 1]} : vector<8x384xf32> to vector<8x128xf32>
    %264 = vector.extract_strided_slice %261 {offsets = [0, 256], sizes = [8, 128], strides = [1, 1]} : vector<8x384xf32> to vector<8x128xf32>
    %265 = vector.extract_strided_slice %255 {offsets = [0, 384], sizes = [8, 128], strides = [1, 1]} : vector<8x512xf32> to vector<8x128xf32>
    %266 = math.tanh %265 : vector<8x128xf32>
    %267 = arith.mulf %263, %248 : vector<8x128xf32>
    %268 = arith.mulf %262, %266 : vector<8x128xf32>
    %269 = arith.addf %267, %268 : vector<8x128xf32>
    %270 = math.tanh %269 : vector<8x128xf32>
    %271 = arith.mulf %264, %270 : vector<8x128xf32>
    %c2_i32_92 = arith.constant 2 : i32
    %272 = arith.index_cast %c2_i32_92 : i32 to index
    %c0_93 = arith.constant 0 : index
    %c0_94 = arith.constant 0 : index
    %273 = vector.load %arg16[%272, %c0_93, %c0_94] : memref<8x8x512xf32, #tpu.memory_space<vmem>>, vector<1x8x512xf32>
    %274 = vector.shape_cast %273 : vector<1x8x512xf32> to vector<8x512xf32>
    %cst_95 = arith.constant dense<0.000000e+00> : vector<8x512xf32>
    %275 = tpu.matmul %271, %219, %cst_95 {dimension_numbers = #tpu.dot_dimension_numbers<[1], [0], [0], [1], [0, 0, 1, 1], [], []>} : vector<8x128xf32>, vector<128x512xf32>, vector<8x512xf32> -> vector<8x512xf32>
    %276 = arith.addf %274, %275 : vector<8x512xf32>
    %277 = vector.extract_strided_slice %276 {offsets = [0, 0], sizes = [8, 384], strides = [1, 1]} : vector<8x512xf32> to vector<8x384xf32>
    %278 = arith.negf %277 : vector<8x384xf32>
    %279 = math.exp %278 : vector<8x384xf32>
    %cst_96 = arith.constant 1.000000e+00 : f32
    %280 = vector.broadcast %cst_96 : f32 to vector<8x384xf32>
    %281 = arith.addf %280, %279 : vector<8x384xf32>
    %282 = arith.divf %280, %281 : vector<8x384xf32>
    %283 = vector.extract_strided_slice %282 {offsets = [0, 0], sizes = [8, 128], strides = [1, 1]} : vector<8x384xf32> to vector<8x128xf32>
    %284 = vector.extract_strided_slice %282 {offsets = [0, 128], sizes = [8, 128], strides = [1, 1]} : vector<8x384xf32> to vector<8x128xf32>
    %285 = vector.extract_strided_slice %282 {offsets = [0, 256], sizes = [8, 128], strides = [1, 1]} : vector<8x384xf32> to vector<8x128xf32>
    %286 = vector.extract_strided_slice %276 {offsets = [0, 384], sizes = [8, 128], strides = [1, 1]} : vector<8x512xf32> to vector<8x128xf32>
    %287 = math.tanh %286 : vector<8x128xf32>
    %288 = arith.mulf %284, %269 : vector<8x128xf32>
    %289 = arith.mulf %283, %287 : vector<8x128xf32>
    %290 = arith.addf %288, %289 : vector<8x128xf32>
    %291 = math.tanh %290 : vector<8x128xf32>
    %292 = arith.mulf %285, %291 : vector<8x128xf32>
    %c3_i32_97 = arith.constant 3 : i32
    %293 = arith.index_cast %c3_i32_97 : i32 to index
    %c0_98 = arith.constant 0 : index
    %c0_99 = arith.constant 0 : index
    %294 = vector.load %arg16[%293, %c0_98, %c0_99] : memref<8x8x512xf32, #tpu.memory_space<vmem>>, vector<1x8x512xf32>
    %295 = vector.shape_cast %294 : vector<1x8x512xf32> to vector<8x512xf32>
    %cst_100 = arith.constant dense<0.000000e+00> : vector<8x512xf32>
    %296 = tpu.matmul %292, %219, %cst_100 {dimension_numbers = #tpu.dot_dimension_numbers<[1], [0], [0], [1], [0, 0, 1, 1], [], []>} : vector<8x128xf32>, vector<128x512xf32>, vector<8x512xf32> -> vector<8x512xf32>
    %297 = arith.addf %295, %296 : vector<8x512xf32>
    %298 = vector.extract_strided_slice %297 {offsets = [0, 0], sizes = [8, 384], strides = [1, 1]} : vector<8x512xf32> to vector<8x384xf32>
    %299 = arith.negf %298 : vector<8x384xf32>
    %300 = math.exp %299 : vector<8x384xf32>
    %cst_101 = arith.constant 1.000000e+00 : f32
    %301 = vector.broadcast %cst_101 : f32 to vector<8x384xf32>
    %302 = arith.addf %301, %300 : vector<8x384xf32>
    %303 = arith.divf %301, %302 : vector<8x384xf32>
    %304 = vector.extract_strided_slice %303 {offsets = [0, 0], sizes = [8, 128], strides = [1, 1]} : vector<8x384xf32> to vector<8x128xf32>
    %305 = vector.extract_strided_slice %303 {offsets = [0, 128], sizes = [8, 128], strides = [1, 1]} : vector<8x384xf32> to vector<8x128xf32>
    %306 = vector.extract_strided_slice %303 {offsets = [0, 256], sizes = [8, 128], strides = [1, 1]} : vector<8x384xf32> to vector<8x128xf32>
    %307 = vector.extract_strided_slice %297 {offsets = [0, 384], sizes = [8, 128], strides = [1, 1]} : vector<8x512xf32> to vector<8x128xf32>
    %308 = math.tanh %307 : vector<8x128xf32>
    %309 = arith.mulf %305, %290 : vector<8x128xf32>
    %310 = arith.mulf %304, %308 : vector<8x128xf32>
    %311 = arith.addf %309, %310 : vector<8x128xf32>
    %312 = math.tanh %311 : vector<8x128xf32>
    %313 = arith.mulf %306, %312 : vector<8x128xf32>
    %c4_i32_102 = arith.constant 4 : i32
    %314 = arith.index_cast %c4_i32_102 : i32 to index
    %c0_103 = arith.constant 0 : index
    %c0_104 = arith.constant 0 : index
    %315 = vector.load %arg16[%314, %c0_103, %c0_104] : memref<8x8x512xf32, #tpu.memory_space<vmem>>, vector<1x8x512xf32>
    %316 = vector.shape_cast %315 : vector<1x8x512xf32> to vector<8x512xf32>
    %cst_105 = arith.constant dense<0.000000e+00> : vector<8x512xf32>
    %317 = tpu.matmul %313, %219, %cst_105 {dimension_numbers = #tpu.dot_dimension_numbers<[1], [0], [0], [1], [0, 0, 1, 1], [], []>} : vector<8x128xf32>, vector<128x512xf32>, vector<8x512xf32> -> vector<8x512xf32>
    %318 = arith.addf %316, %317 : vector<8x512xf32>
    %319 = vector.extract_strided_slice %318 {offsets = [0, 0], sizes = [8, 384], strides = [1, 1]} : vector<8x512xf32> to vector<8x384xf32>
    %320 = arith.negf %319 : vector<8x384xf32>
    %321 = math.exp %320 : vector<8x384xf32>
    %cst_106 = arith.constant 1.000000e+00 : f32
    %322 = vector.broadcast %cst_106 : f32 to vector<8x384xf32>
    %323 = arith.addf %322, %321 : vector<8x384xf32>
    %324 = arith.divf %322, %323 : vector<8x384xf32>
    %325 = vector.extract_strided_slice %324 {offsets = [0, 0], sizes = [8, 128], strides = [1, 1]} : vector<8x384xf32> to vector<8x128xf32>
    %326 = vector.extract_strided_slice %324 {offsets = [0, 128], sizes = [8, 128], strides = [1, 1]} : vector<8x384xf32> to vector<8x128xf32>
    %327 = vector.extract_strided_slice %324 {offsets = [0, 256], sizes = [8, 128], strides = [1, 1]} : vector<8x384xf32> to vector<8x128xf32>
    %328 = vector.extract_strided_slice %318 {offsets = [0, 384], sizes = [8, 128], strides = [1, 1]} : vector<8x512xf32> to vector<8x128xf32>
    %329 = math.tanh %328 : vector<8x128xf32>
    %330 = arith.mulf %326, %311 : vector<8x128xf32>
    %331 = arith.mulf %325, %329 : vector<8x128xf32>
    %332 = arith.addf %330, %331 : vector<8x128xf32>
    %333 = math.tanh %332 : vector<8x128xf32>
    %334 = arith.mulf %327, %333 : vector<8x128xf32>
    %c5_i32_107 = arith.constant 5 : i32
    %335 = arith.index_cast %c5_i32_107 : i32 to index
    %c0_108 = arith.constant 0 : index
    %c0_109 = arith.constant 0 : index
    %336 = vector.load %arg16[%335, %c0_108, %c0_109] : memref<8x8x512xf32, #tpu.memory_space<vmem>>, vector<1x8x512xf32>
    %337 = vector.shape_cast %336 : vector<1x8x512xf32> to vector<8x512xf32>
    %cst_110 = arith.constant dense<0.000000e+00> : vector<8x512xf32>
    %338 = tpu.matmul %334, %219, %cst_110 {dimension_numbers = #tpu.dot_dimension_numbers<[1], [0], [0], [1], [0, 0, 1, 1], [], []>} : vector<8x128xf32>, vector<128x512xf32>, vector<8x512xf32> -> vector<8x512xf32>
    %339 = arith.addf %337, %338 : vector<8x512xf32>
    %340 = vector.extract_strided_slice %339 {offsets = [0, 0], sizes = [8, 384], strides = [1, 1]} : vector<8x512xf32> to vector<8x384xf32>
    %341 = arith.negf %340 : vector<8x384xf32>
    %342 = math.exp %341 : vector<8x384xf32>
    %cst_111 = arith.constant 1.000000e+00 : f32
    %343 = vector.broadcast %cst_111 : f32 to vector<8x384xf32>
    %344 = arith.addf %343, %342 : vector<8x384xf32>
    %345 = arith.divf %343, %344 : vector<8x384xf32>
    %346 = vector.extract_strided_slice %345 {offsets = [0, 0], sizes = [8, 128], strides = [1, 1]} : vector<8x384xf32> to vector<8x128xf32>
    %347 = vector.extract_strided_slice %345 {offsets = [0, 128], sizes = [8, 128], strides = [1, 1]} : vector<8x384xf32> to vector<8x128xf32>
    %348 = vector.extract_strided_slice %345 {offsets = [0, 256], sizes = [8, 128], strides = [1, 1]} : vector<8x384xf32> to vector<8x128xf32>
    %349 = vector.extract_strided_slice %339 {offsets = [0, 384], sizes = [8, 128], strides = [1, 1]} : vector<8x512xf32> to vector<8x128xf32>
    %350 = math.tanh %349 : vector<8x128xf32>
    %351 = arith.mulf %347, %332 : vector<8x128xf32>
    %352 = arith.mulf %346, %350 : vector<8x128xf32>
    %353 = arith.addf %351, %352 : vector<8x128xf32>
    %354 = math.tanh %353 : vector<8x128xf32>
    %355 = arith.mulf %348, %354 : vector<8x128xf32>
    %c6_i32_112 = arith.constant 6 : i32
    %356 = arith.index_cast %c6_i32_112 : i32 to index
    %c0_113 = arith.constant 0 : index
    %c0_114 = arith.constant 0 : index
    %357 = vector.load %arg16[%356, %c0_113, %c0_114] : memref<8x8x512xf32, #tpu.memory_space<vmem>>, vector<1x8x512xf32>
    %358 = vector.shape_cast %357 : vector<1x8x512xf32> to vector<8x512xf32>
    %cst_115 = arith.constant dense<0.000000e+00> : vector<8x512xf32>
    %359 = tpu.matmul %355, %219, %cst_115 {dimension_numbers = #tpu.dot_dimension_numbers<[1], [0], [0], [1], [0, 0, 1, 1], [], []>} : vector<8x128xf32>, vector<128x512xf32>, vector<8x512xf32> -> vector<8x512xf32>
    %360 = arith.addf %358, %359 : vector<8x512xf32>
    %361 = vector.extract_strided_slice %360 {offsets = [0, 0], sizes = [8, 384], strides = [1, 1]} : vector<8x512xf32> to vector<8x384xf32>
    %362 = arith.negf %361 : vector<8x384xf32>
    %363 = math.exp %362 : vector<8x384xf32>
    %cst_116 = arith.constant 1.000000e+00 : f32
    %364 = vector.broadcast %cst_116 : f32 to vector<8x384xf32>
    %365 = arith.addf %364, %363 : vector<8x384xf32>
    %366 = arith.divf %364, %365 : vector<8x384xf32>
    %367 = vector.extract_strided_slice %366 {offsets = [0, 0], sizes = [8, 128], strides = [1, 1]} : vector<8x384xf32> to vector<8x128xf32>
    %368 = vector.extract_strided_slice %366 {offsets = [0, 128], sizes = [8, 128], strides = [1, 1]} : vector<8x384xf32> to vector<8x128xf32>
    %369 = vector.extract_strided_slice %366 {offsets = [0, 256], sizes = [8, 128], strides = [1, 1]} : vector<8x384xf32> to vector<8x128xf32>
    %370 = vector.extract_strided_slice %360 {offsets = [0, 384], sizes = [8, 128], strides = [1, 1]} : vector<8x512xf32> to vector<8x128xf32>
    %371 = math.tanh %370 : vector<8x128xf32>
    %372 = arith.mulf %368, %353 : vector<8x128xf32>
    %373 = arith.mulf %367, %371 : vector<8x128xf32>
    %374 = arith.addf %372, %373 : vector<8x128xf32>
    %375 = math.tanh %374 : vector<8x128xf32>
    %376 = arith.mulf %369, %375 : vector<8x128xf32>
    %c7_i32_117 = arith.constant 7 : i32
    %377 = arith.index_cast %c7_i32_117 : i32 to index
    %c0_118 = arith.constant 0 : index
    %c0_119 = arith.constant 0 : index
    %378 = vector.load %arg16[%377, %c0_118, %c0_119] : memref<8x8x512xf32, #tpu.memory_space<vmem>>, vector<1x8x512xf32>
    %379 = vector.shape_cast %378 : vector<1x8x512xf32> to vector<8x512xf32>
    %cst_120 = arith.constant dense<0.000000e+00> : vector<8x512xf32>
    %380 = tpu.matmul %376, %219, %cst_120 {dimension_numbers = #tpu.dot_dimension_numbers<[1], [0], [0], [1], [0, 0, 1, 1], [], []>} : vector<8x128xf32>, vector<128x512xf32>, vector<8x512xf32> -> vector<8x512xf32>
    %381 = arith.addf %379, %380 : vector<8x512xf32>
    %382 = vector.extract_strided_slice %381 {offsets = [0, 0], sizes = [8, 384], strides = [1, 1]} : vector<8x512xf32> to vector<8x384xf32>
    %383 = arith.negf %382 : vector<8x384xf32>
    %384 = math.exp %383 : vector<8x384xf32>
    %cst_121 = arith.constant 1.000000e+00 : f32
    %385 = vector.broadcast %cst_121 : f32 to vector<8x384xf32>
    %386 = arith.addf %385, %384 : vector<8x384xf32>
    %387 = arith.divf %385, %386 : vector<8x384xf32>
    %388 = vector.extract_strided_slice %387 {offsets = [0, 0], sizes = [8, 128], strides = [1, 1]} : vector<8x384xf32> to vector<8x128xf32>
    %389 = vector.extract_strided_slice %387 {offsets = [0, 128], sizes = [8, 128], strides = [1, 1]} : vector<8x384xf32> to vector<8x128xf32>
    %390 = vector.extract_strided_slice %387 {offsets = [0, 256], sizes = [8, 128], strides = [1, 1]} : vector<8x384xf32> to vector<8x128xf32>
    %391 = vector.extract_strided_slice %381 {offsets = [0, 384], sizes = [8, 128], strides = [1, 1]} : vector<8x512xf32> to vector<8x128xf32>
    %392 = math.tanh %391 : vector<8x128xf32>
    %393 = arith.mulf %389, %374 : vector<8x128xf32>
    %394 = arith.mulf %388, %392 : vector<8x128xf32>
    %395 = arith.addf %393, %394 : vector<8x128xf32>
    %396 = math.tanh %395 : vector<8x128xf32>
    %397 = arith.mulf %390, %396 : vector<8x128xf32>
    %c8_i32_122 = arith.constant 8 : i32
    %c1 = arith.constant 1 : index
    %c0_123 = arith.constant 0 : index
    %c0_124 = arith.constant 0 : index
    %398 = vector.load %arg13[%c1, %c0_123, %c0_124] : memref<2x8x128xf32, #tpu.memory_space<vmem>>, vector<1x8x128xf32>
    %399 = vector.shape_cast %398 : vector<1x8x128xf32> to vector<8x128xf32>
    %400 = vector.shape_cast %397 : vector<8x128xf32> to vector<1x8x128xf32>
    tpu.vector_store %arg13[%c1, %c0_123, %c0_124], %400 {strides = array<i32>} : memref<2x8x128xf32, #tpu.memory_space<vmem>>, vector<1x8x128xf32>,
    %c1_125 = arith.constant 1 : index
    %c0_126 = arith.constant 0 : index
    %c0_127 = arith.constant 0 : index
    %401 = vector.load %arg14[%c1_125, %c0_126, %c0_127] : memref<2x8x128xf32, #tpu.memory_space<vmem>>, vector<1x8x128xf32>
    %402 = vector.shape_cast %401 : vector<1x8x128xf32> to vector<8x128xf32>
    %403 = vector.shape_cast %395 : vector<8x128xf32> to vector<1x8x128xf32>
    tpu.vector_store %arg14[%c1_125, %c0_126, %c0_127], %403 {strides = array<i32>} : memref<2x8x128xf32, #tpu.memory_space<vmem>>, vector<1x8x128xf32>,
    %c0_128 = arith.constant 0 : index
    %c0_129 = arith.constant 0 : index
    %404 = vector.load %arg8[%c0_128, %c0_129] : memref<128x128xf32, #tpu.memory_space<vmem>>, vector<128x128xf32>
    %cst_130 = arith.constant dense<0.000000e+00> : vector<8x128xf32>
    %405 = tpu.matmul %397, %404, %cst_130 {dimension_numbers = #tpu.dot_dimension_numbers<[1], [0], [0], [1], [0, 0, 1, 1], [], []>} : vector<8x128xf32>, vector<128x128xf32>, vector<8x128xf32> -> vector<8x128xf32>
    %c0_131 = arith.constant 0 : index
    %c0_132 = arith.constant 0 : index
    %406 = vector.load %arg9[%c0_131, %c0_132] : memref<1x128xf32, #tpu.memory_space<vmem>>, vector<1x128xf32>
    %407 = vector.broadcast %406 : vector<1x128xf32> to vector<8x128xf32>
    %408 = arith.addf %405, %407 : vector<8x128xf32>
    %cst_133 = arith.constant 0.000000e+00 : f32
    %409 = vector.broadcast %cst_133 : f32 to vector<8x128xf32>
    %410 = arith.cmpf ogt, %408, %409 : vector<8x128xf32>
    %cst_134 = arith.constant 0.00999999977 : f32
    %411 = vector.broadcast %cst_134 : f32 to vector<8x128xf32>
    %412 = arith.mulf %411, %408 : vector<8x128xf32>
    %413 = arith.select %410, %408, %412 : vector<8x128xi1>, vector<8x128xf32>
    %c0_135 = arith.constant 0 : index
    %c0_136 = arith.constant 0 : index
    %414 = vector.load %arg10[%c0_135, %c0_136] : memref<128x128xf32, #tpu.memory_space<vmem>>, vector<128x128xf32>
    %cst_137 = arith.constant dense<0.000000e+00> : vector<8x128xf32>
    %415 = tpu.matmul %413, %414, %cst_137 {dimension_numbers = #tpu.dot_dimension_numbers<[1], [0], [0], [1], [0, 0, 1, 1], [], []>} : vector<8x128xf32>, vector<128x128xf32>, vector<8x128xf32> -> vector<8x128xf32>
    %c0_138 = arith.constant 0 : index
    %c0_139 = arith.constant 0 : index
    %416 = vector.load %arg11[%c0_138, %c0_139] : memref<1x128xf32, #tpu.memory_space<vmem>>, vector<1x128xf32>
    %417 = vector.broadcast %416 : vector<1x128xf32> to vector<8x128xf32>
    %418 = arith.addf %415, %417 : vector<8x128xf32>
    %c0_140 = arith.constant 0 : index
    %c0_141 = arith.constant 0 : index
    %419 = vector.load %arg12[%c0_140, %c0_141] : memref<8x128xf32, #tpu.memory_space<vmem>>, vector<8x128xf32>
    tpu.vector_store %arg12[%c0_140, %c0_141], %418 {strides = array<i32>} : memref<8x128xf32, #tpu.memory_space<vmem>>, vector<8x128xf32>,
    return
  }
  func.func @transform_0(%arg0: i32) -> (i32, i32, i32) {
    %c0_i32 = arith.constant 0 : i32
    %c0_i32_0 = arith.constant 0 : i32
    %c0_i32_1 = arith.constant 0 : i32
    return %c0_i32, %arg0, %c0_i32_0 : i32, i32, i32
  }
  func.func @transform_1(%arg0: i32) -> (i32, i32) {
    %c0_i32 = arith.constant 0 : i32
    %c0_i32_0 = arith.constant 0 : i32
    %c0_i32_1 = arith.constant 0 : i32
    return %c0_i32, %c0_i32_0 : i32, i32
  }
  func.func @transform_2(%arg0: i32) -> (i32, i32) {
    %c0_i32 = arith.constant 0 : i32
    %c0_i32_0 = arith.constant 0 : i32
    %c0_i32_1 = arith.constant 0 : i32
    return %c0_i32, %c0_i32_0 : i32, i32
  }
  func.func @transform_3(%arg0: i32) -> (i32, i32) {
    %c0_i32 = arith.constant 0 : i32
    %c0_i32_0 = arith.constant 0 : i32
    %c0_i32_1 = arith.constant 0 : i32
    return %c0_i32, %c0_i32_0 : i32, i32
  }
  func.func @transform_4(%arg0: i32) -> (i32, i32) {
    %c0_i32 = arith.constant 0 : i32
    %c0_i32_0 = arith.constant 0 : i32
    %c0_i32_1 = arith.constant 0 : i32
    return %c0_i32, %c0_i32_0 : i32, i32
  }
  func.func @transform_5(%arg0: i32) -> (i32, i32) {
    %c0_i32 = arith.constant 0 : i32
    %c0_i32_0 = arith.constant 0 : i32
    %c0_i32_1 = arith.constant 0 : i32
    return %c0_i32, %c0_i32_0 : i32, i32
  }
  func.func @transform_6(%arg0: i32) -> (i32, i32) {
    %c0_i32 = arith.constant 0 : i32
    %c0_i32_0 = arith.constant 0 : i32
    %c0_i32_1 = arith.constant 0 : i32
    return %c0_i32, %c0_i32_0 : i32, i32
  }
  func.func @transform_7(%arg0: i32) -> (i32, i32) {
    %c0_i32 = arith.constant 0 : i32
    %c0_i32_0 = arith.constant 0 : i32
    %c0_i32_1 = arith.constant 0 : i32
    return %c0_i32, %c0_i32_0 : i32, i32
  }
  func.func @transform_8(%arg0: i32) -> (i32, i32) {
    %c0_i32 = arith.constant 0 : i32
    %c0_i32_0 = arith.constant 0 : i32
    %c0_i32_1 = arith.constant 0 : i32
    return %c0_i32, %c0_i32_0 : i32, i32
  }
  func.func @transform_9(%arg0: i32) -> (i32, i32) {
    %c0_i32 = arith.constant 0 : i32
    %c0_i32_0 = arith.constant 0 : i32
    %c0_i32_1 = arith.constant 0 : i32
    return %c0_i32, %c0_i32_0 : i32, i32
  }
  func.func @transform_10(%arg0: i32) -> (i32, i32) {
    %c0_i32 = arith.constant 0 : i32
    %c0_i32_0 = arith.constant 0 : i32
    %c0_i32_1 = arith.constant 0 : i32
    return %c0_i32, %c0_i32_0 : i32, i32
  }
  func.func @transform_11(%arg0: i32) -> (i32, i32) {
    %c0_i32 = arith.constant 0 : i32
    %c0_i32_0 = arith.constant 0 : i32
    return %arg0, %c0_i32 : i32, i32
  }
  func.func @transform_12(%arg0: i32) -> (i32, i32, i32) {
    %c0_i32 = arith.constant 0 : i32
    %c0_i32_0 = arith.constant 0 : i32
    %c0_i32_1 = arith.constant 0 : i32
    return %c0_i32, %arg0, %c0_i32_0 : i32, i32, i32
  }
  func.func @transform_13(%arg0: i32) -> (i32, i32, i32) {
    %c0_i32 = arith.constant 0 : i32
    %c0_i32_0 = arith.constant 0 : i32
    %c0_i32_1 = arith.constant 0 : i32
    return %c0_i32, %arg0, %c0_i32_0 : i32, i32, i32
  }
}

</mosaic_0001>

<llo_original>
// kernel: tpu_custom_call.1
$region0: #{tpu_custom_call.1}
  #allocation0 [shape = 'u32[]', space=smem, size = 0x4, offset = 0x4, fixed_abs, tag = 'smem constant byte address 0x4 - core index']
  #allocation1 [shape = 'u32[144,128]{1,0:T(1,128)}', space=vmem, size = 0x12000, scoped, tag = 'internal scratch']
  #allocation2 [shape = 'f32[8,8,128]{2,1,0:T(8,128)}', space=vmem, size = 0x8000, scoped, tag = 'scratch operand']
  #allocation3 [shape = 'f32[8,8,512]{2,1,0:T(8,128)}', space=vmem, size = 0x20000, scoped, tag = 'scratch operand']
  %s0 = inlined_call_operand.vmem [shape: f32[8,8,4], index: 0, kind: input, shape index: {}]
  %s1 = inlined_call_operand.hbm [shape: f32[4,512], index: 1, kind: input, shape index: {}]
  %s2 = inlined_call_operand.hbm [shape: f32[128,512], index: 2, kind: input, shape index: {}]
  %s3 = inlined_call_operand.hbm [shape: f32[1,512], index: 3, kind: input, shape index: {}]
  %s4 = inlined_call_operand.hbm [shape: f32[128,512], index: 4, kind: input, shape index: {}]
  %s5 = inlined_call_operand.hbm [shape: f32[128,512], index: 5, kind: input, shape index: {}]
  %s6 = inlined_call_operand.hbm [shape: f32[1,512], index: 6, kind: input, shape index: {}]
  %s7 = inlined_call_operand.hbm [shape: f32[128,128], index: 7, kind: input, shape index: {}]
  %s8 = inlined_call_operand.vmem [shape: f32[1,128], index: 8, kind: input, shape index: {}]
  %s9 = inlined_call_operand.vmem [shape: f32[128,128], index: 9, kind: input, shape index: {}]
  %s10 = inlined_call_operand.vmem [shape: f32[1,128], index: 10, kind: input, shape index: {}]
  %s11 = inlined_call_operand.hbm [shape: f32[8,128], index: 11, kind: output, shape index: {0}]
  %s12 = inlined_call_operand.hbm [shape: f32[2,8,128], index: 12, kind: output, shape index: {1}]
  %s13 = inlined_call_operand.hbm [shape: f32[2,8,128], index: 13, kind: output, shape index: {2}]
  %14 = xla_tuple %s11, %s12, %s13
  %s15 = sld [smem:[#allocation0]]
  $region98: #{tpu_custom_call.1} parent=0
    _
  %s17 = ssub.s32 1, %s15
  %s18 = scalar_select 0, %s17, %s15
  $region1: #{tpu_custom_call.1} parent=0
    #allocation4 [shape = 'u8[8192]{0}', space=vmem, size = 0x2000, scoped, tag = 'input window, operand 1, single buffered']
    #allocation5 [shape = 's32[1]{0}', space=sflag, size = 0x4, scoped, tag = 'scoped memory for tpu_custom_call.1']
    #allocation6 [shape = 's32[1]{0}', space=sflag, size = 0x4, scoped, tag = 'scoped memory for tpu_custom_call.1']
    #allocation7 [shape = 'u8[262144]{0}', space=vmem, size = 0x40000, scoped, tag = 'input window, operand 2, single buffered']
    #allocation8 [shape = 's32[1]{0}', space=sflag, size = 0x4, scoped, tag = 'scoped memory for tpu_custom_call.1']
    #allocation9 [shape = 'u8[2048]{0}', space=vmem, size = 0x800, scoped, tag = 'input window, operand 3, single buffered']
    #allocation10 [shape = 'u8[262144]{0}', space=vmem, size = 0x40000, scoped, tag = 'input window, operand 4, single buffered']
    #allocation11 [shape = 's32[1]{0}', space=sflag, size = 0x4, scoped, tag = 'scoped memory for tpu_custom_call.1']
    #allocation12 [shape = 'u8[262144]{0}', space=vmem, size = 0x40000, scoped, tag = 'input window, operand 5, single buffered']
    #allocation13 [shape = 'u8[2048]{0}', space=vmem, size = 0x800, scoped, tag = 'input window, operand 6, single buffered']
    #allocation14 [shape = 's32[1]{0}', space=sflag, size = 0x4, scoped, tag = 'scoped memory for tpu_custom_call.1']
    #allocation15 [shape = 'u8[65536]{0}', space=vmem, size = 0x10000, scoped, tag = 'input window, operand 7, single buffered']
    #allocation16 [shape = 'u8[4096]{0}', space=vmem, size = 0x1000, scoped, tag = 'output window, operand 0, single buffered']
    #allocation17 [shape = 'u8[8192]{0}', space=vmem, size = 0x2000, scoped, tag = 'output window, operand 1, single buffered']
    #allocation18 [shape = 's32[1]{0}', space=sflag, size = 0x4, scoped, tag = 'scoped memory for tpu_custom_call.1']
    #allocation19 [shape = 'u8[8192]{0}', space=vmem, size = 0x2000, scoped, tag = 'output window, operand 2, single buffered']
    %19 = vsyncpa [#allocation5], 0
    %20 = vsyncpa [#allocation8], 0
    %21 = vsyncpa [#allocation11], 0
    %22 = vsyncpa [#allocation14], 0
    %23 = vsyncpa [#allocation6], 0
    %24 = vsyncpa [#allocation18], 0
    // Predicated region
    $region2: #{tpu_custom_call.1} parent=1 // pred_check
      _
    $region3: #{tpu_custom_call.1} parent=1 // pred_check_branch
      %26 = sbr.rel (0) target = $region5
    $region4: #{tpu_custom_call.1} parent=1 // pred_region
      _
    $region5: #{tpu_custom_call.1} parent=1 // pred_fallthru
      _
    // Predicated region
    $region6: #{tpu_custom_call.1} parent=1 // pred_check
      _
    $region7: #{tpu_custom_call.1} parent=1 // pred_check_branch
      %28 = sbr.rel (0) target = $region9
    $region8: #{tpu_custom_call.1} parent=1 // pred_region
      %s30 = ssub.s32 256, 256
      %31 = vsyncadd [#allocation5], %s30
      %s33 = sshll.u32 [#allocation4], 4
      %s34 = int_to_ptr.vmem [resolvable:$true] %s33
      %36 = dma.hbm_to_vmem [thread:$0]  %s1, 256, %s34, [#allocation5]
    $region9: #{tpu_custom_call.1} parent=1 // pred_fallthru
      _
    // Predicated region
    $region10: #{tpu_custom_call.1} parent=1 // pred_check
      _
    $region11: #{tpu_custom_call.1} parent=1 // pred_check_branch
      %38 = sbr.rel (0) target = $region13
    $region12: #{tpu_custom_call.1} parent=1 // pred_region
      %s40 = ssub.s32 8192, 8192
      %41 = vsyncadd [#allocation8], %s40
      %s42 = sshll.u32 [#allocation7], 4
      %s43 = int_to_ptr.vmem [resolvable:$true] %s42
      %48 = dma.hbm_to_vmem [thread:$0]  %s2, 8192, %s43, [#allocation8], 512, 512, 32
    $region13: #{tpu_custom_call.1} parent=1 // pred_fallthru
      _
    // Predicated region
    $region14: #{tpu_custom_call.1} parent=1 // pred_check
      _
    $region15: #{tpu_custom_call.1} parent=1 // pred_check_branch
      %50 = sbr.rel (0) target = $region17
    $region16: #{tpu_custom_call.1} parent=1 // pred_region
      %s52 = ssub.s32 64, 64
      %53 = vsyncadd [#allocation8], %s52
      %s55 = sshll.u32 [#allocation9], 4
      %s56 = int_to_ptr.vmem [resolvable:$true] %s55
      %58 = dma.hbm_to_vmem [thread:$0]  %s3, 64, %s56, [#allocation8]
    $region17: #{tpu_custom_call.1} parent=1 // pred_fallthru
      _
    // Predicated region
    $region18: #{tpu_custom_call.1} parent=1 // pred_check
      _
    $region19: #{tpu_custom_call.1} parent=1 // pred_check_branch
      %60 = sbr.rel (0) target = $region21
    $region20: #{tpu_custom_call.1} parent=1 // pred_region
      %s62 = ssub.s32 8192, 8192
      %63 = vsyncadd [#allocation11], %s62
      %s64 = sshll.u32 [#allocation10], 4
      %s65 = int_to_ptr.vmem [resolvable:$true] %s64
      %70 = dma.hbm_to_vmem [thread:$0]  %s4, 8192, %s65, [#allocation11], 512, 512, 32
    $region21: #{tpu_custom_call.1} parent=1 // pred_fallthru
      _
    // Predicated region
    $region22: #{tpu_custom_call.1} parent=1 // pred_check
      _
    $region23: #{tpu_custom_call.1} parent=1 // pred_check_branch
      %72 = sbr.rel (0) target = $region25
    $region24: #{tpu_custom_call.1} parent=1 // pred_region
      %s74 = ssub.s32 8192, 8192
      %75 = vsyncadd [#allocation11], %s74
      %s76 = sshll.u32 [#allocation12], 4
      %s77 = int_to_ptr.vmem [resolvable:$true] %s76
      %82 = dma.hbm_to_vmem [thread:$0]  %s5, 8192, %s77, [#allocation11], 512, 512, 32
    $region25: #{tpu_custom_call.1} parent=1 // pred_fallthru
      _
    // Predicated region
    $region26: #{tpu_custom_call.1} parent=1 // pred_check
      _
    $region27: #{tpu_custom_call.1} parent=1 // pred_check_branch
      %84 = sbr.rel (0) target = $region29
    $region28: #{tpu_custom_call.1} parent=1 // pred_region
      %s86 = ssub.s32 64, 64
      %87 = vsyncadd [#allocation14], %s86
      %s89 = sshll.u32 [#allocation13], 4
      %s90 = int_to_ptr.vmem [resolvable:$true] %s89
      %92 = dma.hbm_to_vmem [thread:$0]  %s6, 64, %s90, [#allocation14]
    $region29: #{tpu_custom_call.1} parent=1 // pred_fallthru
      _
    // Predicated region
    $region30: #{tpu_custom_call.1} parent=1 // pred_check
      _
    $region31: #{tpu_custom_call.1} parent=1 // pred_check_branch
      %94 = sbr.rel (0) target = $region33
    $region32: #{tpu_custom_call.1} parent=1 // pred_region
      %s96 = ssub.s32 2048, 2048
      %97 = vsyncadd [#allocation14], %s96
      %s98 = sshll.u32 [#allocation15], 4
      %s99 = int_to_ptr.vmem [resolvable:$true] %s98
      %104 = dma.hbm_to_vmem [thread:$0]  %s7, 2048, %s99, [#allocation14], 128, 128, 8
    $region33: #{tpu_custom_call.1} parent=1 // pred_fallthru
      _
    // Predicated region
    $region34: #{tpu_custom_call.1} parent=1 // pred_check
      _
    $region35: #{tpu_custom_call.1} parent=1 // pred_check_branch
      %106 = sbr.rel (0) target = $region37
    $region36: #{tpu_custom_call.1} parent=1 // pred_region
      _
    $region37: #{tpu_custom_call.1} parent=1 // pred_fallthru
      _
    // Predicated region
    $region38: #{tpu_custom_call.1} parent=1 // pred_check
      _
    $region39: #{tpu_custom_call.1} parent=1 // pred_check_branch
      %108 = sbr.rel (0) target = $region41
    $region40: #{tpu_custom_call.1} parent=1 // pred_region
      _
    $region41: #{tpu_custom_call.1} parent=1 // pred_fallthru
      _
    // Predicated region
    $region42: #{tpu_custom_call.1} parent=1 // pred_check
      _
    $region43: #{tpu_custom_call.1} parent=1 // pred_check_branch
      %110 = sbr.rel (0) target = $region45
    $region44: #{tpu_custom_call.1} parent=1 // pred_region
      _
    $region45: #{tpu_custom_call.1} parent=1 // pred_fallthru
      _
    // Predicated region
    $region46: #{tpu_custom_call.1} parent=1 // pred_check
      _
    $region47: #{tpu_custom_call.1} parent=1 // pred_check_branch
      %112 = sbr.rel (0) target = $region49
    $region48: #{tpu_custom_call.1} parent=1 // pred_region
      %113 = dma.done [#allocation5], 256
    $region49: #{tpu_custom_call.1} parent=1 // pred_fallthru
      _
    // Predicated region
    $region50: #{tpu_custom_call.1} parent=1 // pred_check
      _
    $region51: #{tpu_custom_call.1} parent=1 // pred_check_branch
      %115 = sbr.rel (0) target = $region53
    $region52: #{tpu_custom_call.1} parent=1 // pred_region
      %116 = dma.done [#allocation8], 8192
    $region53: #{tpu_custom_call.1} parent=1 // pred_fallthru
      _
    // Predicated region
    $region54: #{tpu_custom_call.1} parent=1 // pred_check
      _
    $region55: #{tpu_custom_call.1} parent=1 // pred_check_branch
      %118 = sbr.rel (0) target = $region57
    $region56: #{tpu_custom_call.1} parent=1 // pred_region
      %119 = dma.done [#allocation8], 64
    $region57: #{tpu_custom_call.1} parent=1 // pred_fallthru
      _
    // Predicated region
    $region58: #{tpu_custom_call.1} parent=1 // pred_check
      _
    $region59: #{tpu_custom_call.1} parent=1 // pred_check_branch
      %121 = sbr.rel (0) target = $region61
    $region60: #{tpu_custom_call.1} parent=1 // pred_region
      %122 = dma.done [#allocation11], 8192
    $region61: #{tpu_custom_call.1} parent=1 // pred_fallthru
      _
    // Predicated region
    $region62: #{tpu_custom_call.1} parent=1 // pred_check
      _
    $region63: #{tpu_custom_call.1} parent=1 // pred_check_branch
      %124 = sbr.rel (0) target = $region65
    $region64: #{tpu_custom_call.1} parent=1 // pred_region
      %125 = dma.done [#allocation11], 8192
    $region65: #{tpu_custom_call.1} parent=1 // pred_fallthru
      _
    // Predicated region
    $region66: #{tpu_custom_call.1} parent=1 // pred_check
      _
    $region67: #{tpu_custom_call.1} parent=1 // pred_check_branch
      %127 = sbr.rel (0) target = $region69
    $region68: #{tpu_custom_call.1} parent=1 // pred_region
      %128 = dma.done [#allocation14], 64
    $region69: #{tpu_custom_call.1} parent=1 // pred_fallthru
      _
    // Predicated region
    $region70: #{tpu_custom_call.1} parent=1 // pred_check
      _
    $region71: #{tpu_custom_call.1} parent=1 // pred_check_branch
      %130 = sbr.rel (0) target = $region73
    $region72: #{tpu_custom_call.1} parent=1 // pred_region
      %131 = dma.done [#allocation14], 2048
    $region73: #{tpu_custom_call.1} parent=1 // pred_fallthru
      _
    %v132 = vld [vmem:[#allocation4] sm:$0xff]
    %v133 = vld [vmem:[#allocation4 + $0x8] sm:$0xff]
    %v134 = vld [vmem:[#allocation7] sm:$0xff]
    %v135 = vld [vmem:[#allocation7 + $0x8] sm:$0xff]
    %v136 = vld [vmem:[#allocation7 + $0x10] sm:$0xff]
    %v137 = vld [vmem:[#allocation7 + $0x18] sm:$0xff]
    %v138 = vld [vmem:[#allocation7 + $0x20] sm:$0xff]
    %v139 = vld [vmem:[#allocation7 + $0x28] sm:$0xff]
    %v140 = vld [vmem:[#allocation7 + $0x30] sm:$0xff]
    %v141 = vld [vmem:[#allocation7 + $0x38] sm:$0xff]
    %v142 = vld [vmem:[#allocation7 + $0x40] sm:$0xff]
    %v143 = vld [vmem:[#allocation7 + $0x48] sm:$0xff]
    %v144 = vld [vmem:[#allocation7 + $0x50] sm:$0xff]
    %v145 = vld [vmem:[#allocation7 + $0x58] sm:$0xff]
    %v146 = vld [vmem:[#allocation7 + $0x60] sm:$0xff]
    %v147 = vld [vmem:[#allocation7 + $0x68] sm:$0xff]
    %v148 = vld [vmem:[#allocation7 + $0x70] sm:$0xff]
    %v149 = vld [vmem:[#allocation7 + $0x78] sm:$0xff]
    %v150 = vld [vmem:[#allocation7 + $0x80] sm:$0xff]
    %v151 = vld [vmem:[#allocation7 + $0x88] sm:$0xff]
    %v152 = vld [vmem:[#allocation7 + $0x90] sm:$0xff]
    %v153 = vld [vmem:[#allocation7 + $0x98] sm:$0xff]
    %v154 = vld [vmem:[#allocation7 + $0xa0] sm:$0xff]
    %v155 = vld [vmem:[#allocation7 + $0xa8] sm:$0xff]
    %v156 = vld [vmem:[#allocation7 + $0xb0] sm:$0xff]
    %v157 = vld [vmem:[#allocation7 + $0xb8] sm:$0xff]
    %v158 = vld [vmem:[#allocation7 + $0xc0] sm:$0xff]
    %v159 = vld [vmem:[#allocation7 + $0xc8] sm:$0xff]
    %v160 = vld [vmem:[#allocation7 + $0xd0] sm:$0xff]
    %v161 = vld [vmem:[#allocation7 + $0xd8] sm:$0xff]
    %v162 = vld [vmem:[#allocation7 + $0xe0] sm:$0xff]
    %v163 = vld [vmem:[#allocation7 + $0xe8] sm:$0xff]
    %v164 = vld [vmem:[#allocation7 + $0xf0] sm:$0xff]
    %v165 = vld [vmem:[#allocation7 + $0xf8] sm:$0xff]
    %v166 = vld [vmem:[#allocation7 + $0x100] sm:$0xff]
    %v167 = vld [vmem:[#allocation7 + $0x108] sm:$0xff]
    %v168 = vld [vmem:[#allocation7 + $0x110] sm:$0xff]
    %v169 = vld [vmem:[#allocation7 + $0x118] sm:$0xff]
    %v170 = vld [vmem:[#allocation7 + $0x120] sm:$0xff]
    %v171 = vld [vmem:[#allocation7 + $0x128] sm:$0xff]
    %v172 = vld [vmem:[#allocation7 + $0x130] sm:$0xff]
    %v173 = vld [vmem:[#allocation7 + $0x138] sm:$0xff]
    %v174 = vld [vmem:[#allocation7 + $0x140] sm:$0xff]
    %v175 = vld [vmem:[#allocation7 + $0x148] sm:$0xff]
    %v176 = vld [vmem:[#allocation7 + $0x150] sm:$0xff]
    %v177 = vld [vmem:[#allocation7 + $0x158] sm:$0xff]
    %v178 = vld [vmem:[#allocation7 + $0x160] sm:$0xff]
    %v179 = vld [vmem:[#allocation7 + $0x168] sm:$0xff]
    %v180 = vld [vmem:[#allocation7 + $0x170] sm:$0xff]
    %v181 = vld [vmem:[#allocation7 + $0x178] sm:$0xff]
    %v182 = vld [vmem:[#allocation7 + $0x180] sm:$0xff]
    %v183 = vld [vmem:[#allocation7 + $0x188] sm:$0xff]
    %v184 = vld [vmem:[#allocation7 + $0x190] sm:$0xff]
    %v185 = vld [vmem:[#allocation7 + $0x198] sm:$0xff]
    %v186 = vld [vmem:[#allocation7 + $0x1a0] sm:$0xff]
    %v187 = vld [vmem:[#allocation7 + $0x1a8] sm:$0xff]
    %v188 = vld [vmem:[#allocation7 + $0x1b0] sm:$0xff]
    %v189 = vld [vmem:[#allocation7 + $0x1b8] sm:$0xff]
    %v190 = vld [vmem:[#allocation7 + $0x1c0] sm:$0xff]
    %v191 = vld [vmem:[#allocation7 + $0x1c8] sm:$0xff]
    %v192 = vld [vmem:[#allocation7 + $0x1d0] sm:$0xff]
    %v193 = vld [vmem:[#allocation7 + $0x1d8] sm:$0xff]
    %v194 = vld [vmem:[#allocation7 + $0x1e0] sm:$0xff]
    %v195 = vld [vmem:[#allocation7 + $0x1e8] sm:$0xff]
    %v196 = vld [vmem:[#allocation7 + $0x1f0] sm:$0xff]
    %v197 = vld [vmem:[#allocation7 + $0x1f8] sm:$0xff]
    %v198 = vld [vmem:[#allocation9] sm:$0xf]
    %v199 = vld [vmem:[%s0] sm:$0xff]
    %v200 = vld [vmem:[%s0 + $0x8] sm:$0xff]
    %v201 = vld [vmem:[%s0 + $0x10] sm:$0xff]
    %v202 = vld [vmem:[%s0 + $0x18] sm:$0xff]
    %v203 = vld [vmem:[%s0 + $0x20] sm:$0xff]
    %v204 = vld [vmem:[%s0 + $0x28] sm:$0xff]
    %v205 = vld [vmem:[%s0 + $0x30] sm:$0xff]
    %v206 = vld [vmem:[%s0 + $0x38] sm:$0xff]
    %v208 = vlaneseq
    %v209 = vshrl.u32 %v208, 7
    %v210 = vsub.s32 0, %v209
    %v211 = vrot.slane %v198, %v210
    %v212 = vlaneseq
    %v213 = vshrl.u32 %v212, 7
    %v214 = vsub.s32 1, %v213
    %v215 = vrot.slane %v198, %v214
    %v216 = vlaneseq
    %v217 = vshrl.u32 %v216, 7
    %v218 = vsub.s32 2, %v217
    %v219 = vrot.slane %v198, %v218
    %v220 = vlaneseq
    %v221 = vshrl.u32 %v220, 7
    %v222 = vsub.s32 3, %v221
    %v223 = vrot.slane %v198, %v222
    %v230 = vcombine.high %v132, %v132
    %v231 = vcombine.high %v133, %v133
    %vm232 = vcmask 31744
    %v234 = vsel %vm232, %v199, 0
    %v237 = vsel %vm232, %v200, 0
    %v240 = vsel %vm232, %v201, 0
    %v243 = vsel %vm232, %v202, 0
    %v246 = vsel %vm232, %v203, 0
    %v249 = vsel %vm232, %v204, 0
    %v252 = vsel %vm232, %v205, 0
    %v255 = vsel %vm232, %v206, 0
    %vm257 = vcmask 1043456
    %v258 = vsel %vm257, %v132, 0
    %v260 = vsel %vm257, %v230, 0
    %v262 = vsel %vm257, %v133, 0
    %v264 = vsel %vm257, %v231, 0
    %266 = vmatprep.subr.mxu0 %v260
    %267 = vmatpush1.msra.mxu0 %v258
    %268 = vmatprep.subr.mxu0 0.0
    %269 = vmatpush1.msra.mxu0 0.0
    %270 = vmatprep.subr.mxu0 0.0
    %271 = vmatpush1.msra.mxu0 0.0
    %272 = vmatprep.subr.mxu0 0.0
    %273 = vmatpush1.msra.mxu0 0.0
    %274 = vmatprep.subr.mxu0 0.0
    %275 = vmatpush1.msra.mxu0 0.0
    %276 = vmatprep.subr.mxu0 0.0
    %277 = vmatpush1.msra.mxu0 0.0
    %278 = vmatprep.subr.mxu0 0.0
    %279 = vmatpush1.msra.mxu0 0.0
    %280 = vmatprep.subr.mxu0 0.0
    %281 = vmatpush1.msra.mxu0 0.0
    %282 = vmatprep.subr.mxu0 0.0
    %283 = vmatpush1.msra.mxu0 0.0
    %284 = vmatprep.subr.mxu0 0.0
    %285 = vmatpush1.msra.mxu0 0.0
    %286 = vmatprep.subr.mxu0 0.0
    %287 = vmatpush1.msra.mxu0 0.0
    %288 = vmatprep.subr.mxu0 0.0
    %289 = vmatpush1.msra.mxu0 0.0
    %290 = vmatprep.subr.mxu0 0.0
    %291 = vmatpush1.msra.mxu0 0.0
    %292 = vmatprep.subr.mxu0 0.0
    %293 = vmatpush1.msra.mxu0 0.0
    %294 = vmatprep.subr.mxu0 0.0
    %295 = vmatpush1.msra.mxu0 0.0
    %296 = vmatprep.subr.mxu0 0.0
    %297 = vmatpush1.msra.mxu0 0.0
    %298 = vmatprep.subr.mxu0 0.0
    %299 = vmatpush1.msra.mxu0 0.0
    %300 = vmatprep.subr.mxu0 0.0
    %301 = vmatpush1.msra.mxu0 0.0
    %302 = vmatprep.subr.mxu0 0.0
    %303 = vmatpush1.msra.mxu0 0.0
    %304 = vmatprep.subr.mxu0 0.0
    %305 = vmatpush1.msra.mxu0 0.0
    %306 = vmatprep.subr.mxu0 0.0
    %307 = vmatpush1.msra.mxu0 0.0
    %308 = vmatprep.subr.mxu0 0.0
    %309 = vmatpush1.msra.mxu0 0.0
    %310 = vmatprep.subr.mxu0 0.0
    %311 = vmatpush1.msra.mxu0 0.0
    %312 = vmatprep.subr.mxu0 0.0
    %313 = vmatpush1.msra.mxu0 0.0
    %314 = vmatprep.subr.mxu0 0.0
    %315 = vmatpush1.msra.mxu0 0.0
    %316 = vmatprep.subr.mxu0 0.0
    %317 = vmatpush1.msra.mxu0 0.0
    %318 = vmatprep.subr.mxu0 0.0
    %319 = vmatpush1.msra.mxu0 0.0
    %320 = vmatprep.subr.mxu0 0.0
    %321 = vmatpush1.msra.mxu0 0.0
    %322 = vmatprep.subr.mxu0 0.0
    %323 = vmatpush1.msra.mxu0 0.0
    %324 = vmatprep.subr.mxu0 0.0
    %325 = vmatpush1.msra.mxu0 0.0
    %326 = vmatprep.subr.mxu0 0.0
    %327 = vmatpush1.msra.mxu0 0.0
    %328 = vmatprep.subr.mxu0 0.0
    %329 = vmatpush1.msra.mxu0 0.0
    %330 = vmatprep.mubr.f32.mxu0 0.0
    %331 = vmatmul.mubr.f32.gmra.mrb[0].mxu0 %v234
    %v332 = vpop.f32.mrb[0].mxu0
    %v333 = vadd.f32 %v211, %v332
    %v334 = vpop.f32.mrb[0].mxu0
    %v335 = vadd.f32 %v215, %v334
    %336 = vmatprep.mubr.f32.mxu0 0.0
    %337 = vmatmul.mubr.f32.gmra.mrb[0].mxu0 %v237
    %v338 = vpop.f32.mrb[0].mxu0
    %v339 = vadd.f32 %v211, %v338
    %v340 = vpop.f32.mrb[0].mxu0
    %v341 = vadd.f32 %v215, %v340
    %342 = vmatprep.mubr.f32.mxu0 0.0
    %343 = vmatmul.mubr.f32.gmra.mrb[0].mxu0 %v240
    %v344 = vpop.f32.mrb[0].mxu0
    %v345 = vadd.f32 %v211, %v344
    %v346 = vpop.f32.mrb[0].mxu0
    %v347 = vadd.f32 %v215, %v346
    %348 = vmatprep.mubr.f32.mxu0 0.0
    %349 = vmatmul.mubr.f32.gmra.mrb[0].mxu0 %v243
    %v350 = vpop.f32.mrb[0].mxu0
    %v351 = vadd.f32 %v211, %v350
    %v352 = vpop.f32.mrb[0].mxu0
    %v353 = vadd.f32 %v215, %v352
    %354 = vmatprep.mubr.f32.mxu0 0.0
    %355 = vmatmul.mubr.f32.gmra.mrb[0].mxu0 %v246
    %v356 = vpop.f32.mrb[0].mxu0
    %v357 = vadd.f32 %v211, %v356
    %v358 = vpop.f32.mrb[0].mxu0
    %v359 = vadd.f32 %v215, %v358
    %360 = vmatprep.mubr.f32.mxu0 0.0
    %361 = vmatmul.mubr.f32.gmra.mrb[0].mxu0 %v249
    %v362 = vpop.f32.mrb[0].mxu0
    %v363 = vadd.f32 %v211, %v362
    %v364 = vpop.f32.mrb[0].mxu0
    %v365 = vadd.f32 %v215, %v364
    %366 = vmatprep.mubr.f32.mxu0 0.0
    %367 = vmatmul.mubr.f32.gmra.mrb[0].mxu0 %v252
    %v368 = vpop.f32.mrb[0].mxu0
    %v369 = vadd.f32 %v211, %v368
    %v370 = vpop.f32.mrb[0].mxu0
    %v371 = vadd.f32 %v215, %v370
    %372 = vmatprep.mubr.f32.mxu0 0.0
    %373 = vmatmul.mubr.f32.gmra.mrb[0].mxu0 %v255
    %v374 = vpop.f32.mrb[0].mxu0
    %v375 = vadd.f32 %v211, %v374
    %v376 = vpop.f32.mrb[0].mxu0
    %v377 = vadd.f32 %v215, %v376
    %378 = vdwg.mxu0
    %379 = vmatprep.subr.mxu0 %v264
    %380 = vmatpush1.msra.mxu0 %v262
    %381 = vmatprep.subr.mxu0 0.0
    %382 = vmatpush1.msra.mxu0 0.0
    %383 = vmatprep.subr.mxu0 0.0
    %384 = vmatpush1.msra.mxu0 0.0
    %385 = vmatprep.subr.mxu0 0.0
    %386 = vmatpush1.msra.mxu0 0.0
    %387 = vmatprep.subr.mxu0 0.0
    %388 = vmatpush1.msra.mxu0 0.0
    %389 = vmatprep.subr.mxu0 0.0
    %390 = vmatpush1.msra.mxu0 0.0
    %391 = vmatprep.subr.mxu0 0.0
    %392 = vmatpush1.msra.mxu0 0.0
    %393 = vmatprep.subr.mxu0 0.0
    %394 = vmatpush1.msra.mxu0 0.0
    %395 = vmatprep.subr.mxu0 0.0
    %396 = vmatpush1.msra.mxu0 0.0
    %397 = vmatprep.subr.mxu0 0.0
    %398 = vmatpush1.msra.mxu0 0.0
    %399 = vmatprep.subr.mxu0 0.0
    %400 = vmatpush1.msra.mxu0 0.0
    %401 = vmatprep.subr.mxu0 0.0
    %402 = vmatpush1.msra.mxu0 0.0
    %403 = vmatprep.subr.mxu0 0.0
    %404 = vmatpush1.msra.mxu0 0.0
    %405 = vmatprep.subr.mxu0 0.0
    %406 = vmatpush1.msra.mxu0 0.0
    %407 = vmatprep.subr.mxu0 0.0
    %408 = vmatpush1.msra.mxu0 0.0
    %409 = vmatprep.subr.mxu0 0.0
    %410 = vmatpush1.msra.mxu0 0.0
    %411 = vmatprep.subr.mxu0 0.0
    %412 = vmatpush1.msra.mxu0 0.0
    %413 = vmatprep.subr.mxu0 0.0
    %414 = vmatpush1.msra.mxu0 0.0
    %415 = vmatprep.subr.mxu0 0.0
    %416 = vmatpush1.msra.mxu0 0.0
    %417 = vmatprep.subr.mxu0 0.0
    %418 = vmatpush1.msra.mxu0 0.0
    %419 = vmatprep.subr.mxu0 0.0
    %420 = vmatpush1.msra.mxu0 0.0
    %421 = vmatprep.subr.mxu0 0.0
    %422 = vmatpush1.msra.mxu0 0.0
    %423 = vmatprep.subr.mxu0 0.0
    %424 = vmatpush1.msra.mxu0 0.0
    %425 = vmatprep.subr.mxu0 0.0
    %426 = vmatpush1.msra.mxu0 0.0
    %427 = vmatprep.subr.mxu0 0.0
    %428 = vmatpush1.msra.mxu0 0.0
    %429 = vmatprep.subr.mxu0 0.0
    %430 = vmatpush1.msra.mxu0 0.0
    %431 = vmatprep.subr.mxu0 0.0
    %432 = vmatpush1.msra.mxu0 0.0
    %433 = vmatprep.subr.mxu0 0.0
    %434 = vmatpush1.msra.mxu0 0.0
    %435 = vmatprep.subr.mxu0 0.0
    %436 = vmatpush1.msra.mxu0 0.0
    %437 = vmatprep.subr.mxu0 0.0
    %438 = vmatpush1.msra.mxu0 0.0
    %439 = vmatprep.subr.mxu0 0.0
    %440 = vmatpush1.msra.mxu0 0.0
    %441 = vmatprep.subr.mxu0 0.0
    %442 = vmatpush1.msra.mxu0 0.0
    %443 = vmatprep.mubr.f32.mxu0 0.0
    %444 = vmatmul.mubr.f32.gmra.mrb[0].mxu0 %v234
    %v445 = vpop.f32.mrb[0].mxu0
    %v446 = vadd.f32 %v219, %v445
    %v447 = vpop.f32.mrb[0].mxu0
    %v448 = vadd.f32 %v223, %v447
    %449 = vmatprep.mubr.f32.mxu0 0.0
    %450 = vmatmul.mubr.f32.gmra.mrb[0].mxu0 %v237
    %v451 = vpop.f32.mrb[0].mxu0
    %v452 = vadd.f32 %v219, %v451
    %v453 = vpop.f32.mrb[0].mxu0
    %v454 = vadd.f32 %v223, %v453
    %455 = vmatprep.mubr.f32.mxu0 0.0
    %456 = vmatmul.mubr.f32.gmra.mrb[0].mxu0 %v240
    %v457 = vpop.f32.mrb[0].mxu0
    %v458 = vadd.f32 %v219, %v457
    %v459 = vpop.f32.mrb[0].mxu0
    %v460 = vadd.f32 %v223, %v459
    %461 = vmatprep.mubr.f32.mxu0 0.0
    %462 = vmatmul.mubr.f32.gmra.mrb[0].mxu0 %v243
    %v463 = vpop.f32.mrb[0].mxu0
    %v464 = vadd.f32 %v219, %v463
    %v465 = vpop.f32.mrb[0].mxu0
    %v466 = vadd.f32 %v223, %v465
    %467 = vmatprep.mubr.f32.mxu0 0.0
    %468 = vmatmul.mubr.f32.gmra.mrb[0].mxu0 %v246
    %v469 = vpop.f32.mrb[0].mxu0
    %v470 = vadd.f32 %v219, %v469
    %v471 = vpop.f32.mrb[0].mxu0
    %v472 = vadd.f32 %v223, %v471
    %473 = vmatprep.mubr.f32.mxu0 0.0
    %474 = vmatmul.mubr.f32.gmra.mrb[0].mxu0 %v249
    %v475 = vpop.f32.mrb[0].mxu0
    %v476 = vadd.f32 %v219, %v475
    %v477 = vpop.f32.mrb[0].mxu0
    %v478 = vadd.f32 %v223, %v477
    %479 = vmatprep.mubr.f32.mxu0 0.0
    %480 = vmatmul.mubr.f32.gmra.mrb[0].mxu0 %v252
    %v481 = vpop.f32.mrb[0].mxu0
    %v482 = vadd.f32 %v219, %v481
    %v483 = vpop.f32.mrb[0].mxu0
    %v484 = vadd.f32 %v223, %v483
    %485 = vmatprep.mubr.f32.mxu0 0.0
    %486 = vmatmul.mubr.f32.gmra.mrb[0].mxu0 %v255
    %v487 = vpop.f32.mrb[0].mxu0
    %v488 = vadd.f32 %v219, %v487
    %v489 = vpop.f32.mrb[0].mxu0
    %v490 = vadd.f32 %v223, %v489
    %491 = vdwg.mxu0
    %492 = vst [vmem:[#allocation3] sm:$0xff] %v333
    %493 = vst [vmem:[#allocation3 + $0x8] sm:$0xff] %v335
    %494 = vst [vmem:[#allocation3 + $0x10] sm:$0xff] %v446
    %495 = vst [vmem:[#allocation3 + $0x18] sm:$0xff] %v448
    %496 = vst [vmem:[#allocation3 + $0x20] sm:$0xff] %v339
    %497 = vst [vmem:[#allocation3 + $0x28] sm:$0xff] %v341
    %498 = vst [vmem:[#allocation3 + $0x30] sm:$0xff] %v452
    %499 = vst [vmem:[#allocation3 + $0x38] sm:$0xff] %v454
    %500 = vst [vmem:[#allocation3 + $0x40] sm:$0xff] %v345
    %501 = vst [vmem:[#allocation3 + $0x48] sm:$0xff] %v347
    %502 = vst [vmem:[#allocation3 + $0x50] sm:$0xff] %v458
    %503 = vst [vmem:[#allocation3 + $0x58] sm:$0xff] %v460
    %504 = vst [vmem:[#allocation3 + $0x60] sm:$0xff] %v351
    %505 = vst [vmem:[#allocation3 + $0x68] sm:$0xff] %v353
    %506 = vst [vmem:[#allocation3 + $0x70] sm:$0xff] %v464
    %507 = vst [vmem:[#allocation3 + $0x78] sm:$0xff] %v466
    %508 = vst [vmem:[#allocation3 + $0x80] sm:$0xff] %v357
    %509 = vst [vmem:[#allocation3 + $0x88] sm:$0xff] %v359
    %510 = vst [vmem:[#allocation3 + $0x90] sm:$0xff] %v470
    %511 = vst [vmem:[#allocation3 + $0x98] sm:$0xff] %v472
    %512 = vst [vmem:[#allocation3 + $0xa0] sm:$0xff] %v363
    %513 = vst [vmem:[#allocation3 + $0xa8] sm:$0xff] %v365
    %514 = vst [vmem:[#allocation3 + $0xb0] sm:$0xff] %v476
    %515 = vst [vmem:[#allocation3 + $0xb8] sm:$0xff] %v478
    %516 = vst [vmem:[#allocation3 + $0xc0] sm:$0xff] %v369
    %517 = vst [vmem:[#allocation3 + $0xc8] sm:$0xff] %v371
    %518 = vst [vmem:[#allocation3 + $0xd0] sm:$0xff] %v482
    %519 = vst [vmem:[#allocation3 + $0xd8] sm:$0xff] %v484
    %520 = vst [vmem:[#allocation3 + $0xe0] sm:$0xff] %v375
    %521 = vst [vmem:[#allocation3 + $0xe8] sm:$0xff] %v377
    %522 = vst [vmem:[#allocation3 + $0xf0] sm:$0xff] %v488
    %523 = vst [vmem:[#allocation3 + $0xf8] sm:$0xff] %v490
    %v524 = vld [vmem:[#allocation3] sm:$0xff]
    %v525 = vld [vmem:[#allocation3 + $0x8] sm:$0xff]
    %v526 = vld [vmem:[#allocation3 + $0x10] sm:$0xff]
    %v527 = vld [vmem:[#allocation3 + $0x18] sm:$0xff]
    %528 = vmatprep.subr.mxu0 %v135
    %529 = vmatpush1.msra.mxu0 %v134
    %530 = vmatprep.subr.mxu0 %v139
    %531 = vmatpush1.msra.mxu0 %v138
    %532 = vmatprep.subr.mxu0 %v143
    %533 = vmatpush1.msra.mxu0 %v142
    %534 = vmatprep.subr.mxu0 %v147
    %535 = vmatpush1.msra.mxu0 %v146
    %536 = vmatprep.subr.mxu0 %v151
    %537 = vmatpush1.msra.mxu0 %v150
    %538 = vmatprep.subr.mxu0 %v155
    %539 = vmatpush1.msra.mxu0 %v154
    %540 = vmatprep.subr.mxu0 %v159
    %541 = vmatpush1.msra.mxu0 %v158
    %542 = vmatprep.subr.mxu0 %v163
    %543 = vmatpush1.msra.mxu0 %v162
    %544 = vmatprep.subr.mxu0 %v167
    %545 = vmatpush1.msra.mxu0 %v166
    %546 = vmatprep.subr.mxu0 %v171
    %547 = vmatpush1.msra.mxu0 %v170
    %548 = vmatprep.subr.mxu0 %v175
    %549 = vmatpush1.msra.mxu0 %v174
    %550 = vmatprep.subr.mxu0 %v179
    %551 = vmatpush1.msra.mxu0 %v178
    %552 = vmatprep.subr.mxu0 %v183
    %553 = vmatpush1.msra.mxu0 %v182
    %554 = vmatprep.subr.mxu0 %v187
    %555 = vmatpush1.msra.mxu0 %v186
    %556 = vmatprep.subr.mxu0 %v191
    %557 = vmatpush1.msra.mxu0 %v190
    %558 = vmatprep.subr.mxu0 %v195
    %559 = vmatpush1.msra.mxu0 %v194
    %560 = vmatprep.subr.mxu0 0.0
    %561 = vmatpush1.msra.mxu0 0.0
    %562 = vmatprep.subr.mxu0 0.0
    %563 = vmatpush1.msra.mxu0 0.0
    %564 = vmatprep.subr.mxu0 0.0
    %565 = vmatpush1.msra.mxu0 0.0
    %566 = vmatprep.subr.mxu0 0.0
    %567 = vmatpush1.msra.mxu0 0.0
    %568 = vmatprep.subr.mxu0 0.0
    %569 = vmatpush1.msra.mxu0 0.0
    %570 = vmatprep.subr.mxu0 0.0
    %571 = vmatpush1.msra.mxu0 0.0
    %572 = vmatprep.subr.mxu0 0.0
    %573 = vmatpush1.msra.mxu0 0.0
    %574 = vmatprep.subr.mxu0 0.0
    %575 = vmatpush1.msra.mxu0 0.0
    %576 = vmatprep.subr.mxu0 0.0
    %577 = vmatpush1.msra.mxu0 0.0
    %578 = vmatprep.subr.mxu0 0.0
    %579 = vmatpush1.msra.mxu0 0.0
    %580 = vmatprep.subr.mxu0 0.0
    %581 = vmatpush1.msra.mxu0 0.0
    %582 = vmatprep.subr.mxu0 0.0
    %583 = vmatpush1.msra.mxu0 0.0
    %584 = vmatprep.subr.mxu0 0.0
    %585 = vmatpush1.msra.mxu0 0.0
    %586 = vmatprep.subr.mxu0 0.0
    %587 = vmatpush1.msra.mxu0 0.0
    %588 = vmatprep.subr.mxu0 0.0
    %589 = vmatpush1.msra.mxu0 0.0
    %590 = vmatprep.subr.mxu0 0.0
    %591 = vmatpush1.msra.mxu0 0.0
    %592 = vmatprep.mubr.f32.mxu0 0.0
    %593 = vmatmul.mubr.f32.gmra.mrb[0].mxu0 0.0
    %v594 = vpop.f32.mrb[0].mxu0
    %v595 = vadd.f32 0.0, %v594
    %v596 = vpop.f32.mrb[0].mxu0
    %v597 = vadd.f32 0.0, %v596
    %598 = vdwg.mxu0
    %599 = vmatprep.subr.mxu0 %v137
    %600 = vmatpush1.msra.mxu0 %v136
    %601 = vmatprep.subr.mxu0 %v141
    %602 = vmatpush1.msra.mxu0 %v140
    %603 = vmatprep.subr.mxu0 %v145
    %604 = vmatpush1.msra.mxu0 %v144
    %605 = vmatprep.subr.mxu0 %v149
    %606 = vmatpush1.msra.mxu0 %v148
    %607 = vmatprep.subr.mxu0 %v153
    %608 = vmatpush1.msra.mxu0 %v152
    %609 = vmatprep.subr.mxu0 %v157
    %610 = vmatpush1.msra.mxu0 %v156
    %611 = vmatprep.subr.mxu0 %v161
    %612 = vmatpush1.msra.mxu0 %v160
    %613 = vmatprep.subr.mxu0 %v165
    %614 = vmatpush1.msra.mxu0 %v164
    %615 = vmatprep.subr.mxu0 %v169
    %616 = vmatpush1.msra.mxu0 %v168
    %617 = vmatprep.subr.mxu0 %v173
    %618 = vmatpush1.msra.mxu0 %v172
    %619 = vmatprep.subr.mxu0 %v177
    %620 = vmatpush1.msra.mxu0 %v176
    %621 = vmatprep.subr.mxu0 %v181
    %622 = vmatpush1.msra.mxu0 %v180
    %623 = vmatprep.subr.mxu0 %v185
    %624 = vmatpush1.msra.mxu0 %v184
    %625 = vmatprep.subr.mxu0 %v189
    %626 = vmatpush1.msra.mxu0 %v188
    %627 = vmatprep.subr.mxu0 %v193
    %628 = vmatpush1.msra.mxu0 %v192
    %629 = vmatprep.subr.mxu0 %v197
    %630 = vmatpush1.msra.mxu0 %v196
    %631 = vmatprep.subr.mxu0 0.0
    %632 = vmatpush1.msra.mxu0 0.0
    %633 = vmatprep.subr.mxu0 0.0
    %634 = vmatpush1.msra.mxu0 0.0
    %635 = vmatprep.subr.mxu0 0.0
    %636 = vmatpush1.msra.mxu0 0.0
    %637 = vmatprep.subr.mxu0 0.0
    %638 = vmatpush1.msra.mxu0 0.0
    %639 = vmatprep.subr.mxu0 0.0
    %640 = vmatpush1.msra.mxu0 0.0
    %641 = vmatprep.subr.mxu0 0.0
    %642 = vmatpush1.msra.mxu0 0.0
    %643 = vmatprep.subr.mxu0 0.0
    %644 = vmatpush1.msra.mxu0 0.0
    %645 = vmatprep.subr.mxu0 0.0
    %646 = vmatpush1.msra.mxu0 0.0
    %647 = vmatprep.subr.mxu0 0.0
    %648 = vmatpush1.msra.mxu0 0.0
    %649 = vmatprep.subr.mxu0 0.0
    %650 = vmatpush1.msra.mxu0 0.0
    %651 = vmatprep.subr.mxu0 0.0
    %652 = vmatpush1.msra.mxu0 0.0
    %653 = vmatprep.subr.mxu0 0.0
    %654 = vmatpush1.msra.mxu0 0.0
    %655 = vmatprep.subr.mxu0 0.0
    %656 = vmatpush1.msra.mxu0 0.0
    %657 = vmatprep.subr.mxu0 0.0
    %658 = vmatpush1.msra.mxu0 0.0
    %659 = vmatprep.subr.mxu0 0.0
    %660 = vmatpush1.msra.mxu0 0.0
    %661 = vmatprep.subr.mxu0 0.0
    %662 = vmatpush1.msra.mxu0 0.0
    %663 = vmatprep.mubr.f32.mxu0 0.0
    %664 = vmatmul.mubr.f32.gmra.mrb[0].mxu0 0.0
    %v665 = vpop.f32.mrb[0].mxu0
    %v666 = vadd.f32 0.0, %v665
    %v667 = vpop.f32.mrb[0].mxu0
    %v668 = vadd.f32 0.0, %v667
    %669 = vdwg.mxu0
    %v670 = vadd.f32 %v524, %v595
    %v671 = vadd.f32 %v525, %v597
    %v672 = vadd.f32 %v526, %v666
    %v673 = vadd.f32 %v527, %v668
    %v674 = vxor.u32 %v670, 2147483648
    %v675 = vxor.u32 %v671, 2147483648
    %v676 = vxor.u32 %v672, 2147483648
    %v677 = vmul.f32 %v674, 1.442695
    %v678 = vpow.pop %v677
    %v679 = vmul.f32 %v675, 1.442695
    %v680 = vpow.pop %v679
    %v681 = vmul.f32 %v676, 1.442695
    %v682 = vpow.pop %v681
    %v683 = vadd.f32 %v678, 1.0
    %v684 = vadd.f32 %v680, 1.0
    %v685 = vadd.f32 %v682, 1.0
    %v686 = vrcp.pop %v683
    %v687 = vmul.f32 1.0, %v686
    %v688 = vrcp.pop %v684
    %v689 = vmul.f32 1.0, %v688
    %v690 = vrcp.pop %v685
    %v691 = vmul.f32 1.0, %v690
    %v692 = vtanh.pop %v673
    %v693 = vmul.f32 %v689, 0.0
    %v694 = vmul.f32 %v687, %v692
    %v695 = vadd.f32 %v693, %v694
    %v696 = vtanh.pop %v695
    %v697 = vmul.f32 %v691, %v696
    %698 = vst [vmem:[#allocation2] sm:$0xff] %v697
    %s699 = scalar_lea.vmem [#allocation3], 32
    %v700 = vld [vmem:[%s699] sm:$0xff]
    %v701 = vld [vmem:[%s699 + $0x8] sm:$0xff]
    %v702 = vld [vmem:[%s699 + $0x10] sm:$0xff]
    %v703 = vld [vmem:[%s699 + $0x18] sm:$0xff]
    %704 = vmatprep.subr.mxu0 %v135
    %705 = vmatpush1.msra.mxu0 %v134
    %706 = vmatprep.subr.mxu0 %v139
    %707 = vmatpush1.msra.mxu0 %v138
    %708 = vmatprep.subr.mxu0 %v143
    %709 = vmatpush1.msra.mxu0 %v142
    %710 = vmatprep.subr.mxu0 %v147
    %711 = vmatpush1.msra.mxu0 %v146
    %712 = vmatprep.subr.mxu0 %v151
    %713 = vmatpush1.msra.mxu0 %v150
    %714 = vmatprep.subr.mxu0 %v155
    %715 = vmatpush1.msra.mxu0 %v154
    %716 = vmatprep.subr.mxu0 %v159
    %717 = vmatpush1.msra.mxu0 %v158
    %718 = vmatprep.subr.mxu0 %v163
    %719 = vmatpush1.msra.mxu0 %v162
    %720 = vmatprep.subr.mxu0 %v167
    %721 = vmatpush1.msra.mxu0 %v166
    %722 = vmatprep.subr.mxu0 %v171
    %723 = vmatpush1.msra.mxu0 %v170
    %724 = vmatprep.subr.mxu0 %v175
    %725 = vmatpush1.msra.mxu0 %v174
    %726 = vmatprep.subr.mxu0 %v179
    %727 = vmatpush1.msra.mxu0 %v178
    %728 = vmatprep.subr.mxu0 %v183
    %729 = vmatpush1.msra.mxu0 %v182
    %730 = vmatprep.subr.mxu0 %v187
    %731 = vmatpush1.msra.mxu0 %v186
    %732 = vmatprep.subr.mxu0 %v191
    %733 = vmatpush1.msra.mxu0 %v190
    %734 = vmatprep.subr.mxu0 %v195
    %735 = vmatpush1.msra.mxu0 %v194
    %736 = vmatprep.subr.mxu0 0.0
    %737 = vmatpush1.msra.mxu0 0.0
    %738 = vmatprep.subr.mxu0 0.0
    %739 = vmatpush1.msra.mxu0 0.0
    %740 = vmatprep.subr.mxu0 0.0
    %741 = vmatpush1.msra.mxu0 0.0
    %742 = vmatprep.subr.mxu0 0.0
    %743 = vmatpush1.msra.mxu0 0.0
    %744 = vmatprep.subr.mxu0 0.0
    %745 = vmatpush1.msra.mxu0 0.0
    %746 = vmatprep.subr.mxu0 0.0
    %747 = vmatpush1.msra.mxu0 0.0
    %748 = vmatprep.subr.mxu0 0.0
    %749 = vmatpush1.msra.mxu0 0.0
    %750 = vmatprep.subr.mxu0 0.0
    %751 = vmatpush1.msra.mxu0 0.0
    %752 = vmatprep.subr.mxu0 0.0
    %753 = vmatpush1.msra.mxu0 0.0
    %754 = vmatprep.subr.mxu0 0.0
    %755 = vmatpush1.msra.mxu0 0.0
    %756 = vmatprep.subr.mxu0 0.0
    %757 = vmatpush1.msra.mxu0 0.0
    %758 = vmatprep.subr.mxu0 0.0
    %759 = vmatpush1.msra.mxu0 0.0
    %760 = vmatprep.subr.mxu0 0.0
    %761 = vmatpush1.msra.mxu0 0.0
    %762 = vmatprep.subr.mxu0 0.0
    %763 = vmatpush1.msra.mxu0 0.0
    %764 = vmatprep.subr.mxu0 0.0
    %765 = vmatpush1.msra.mxu0 0.0
    %766 = vmatprep.subr.mxu0 0.0
    %767 = vmatpush1.msra.mxu0 0.0
    %768 = vmatprep.mubr.f32.mxu0 0.0
    %769 = vmatmul.mubr.f32.gmra.mrb[0].mxu0 %v697
    %v770 = vpop.f32.mrb[0].mxu0
    %v771 = vadd.f32 0.0, %v770
    %v772 = vpop.f32.mrb[0].mxu0
    %v773 = vadd.f32 0.0, %v772
    %774 = vdwg.mxu0
    %775 = vmatprep.subr.mxu0 %v137
    %776 = vmatpush1.msra.mxu0 %v136
    %777 = vmatprep.subr.mxu0 %v141
    %778 = vmatpush1.msra.mxu0 %v140
    %779 = vmatprep.subr.mxu0 %v145
    %780 = vmatpush1.msra.mxu0 %v144
    %781 = vmatprep.subr.mxu0 %v149
    %782 = vmatpush1.msra.mxu0 %v148
    %783 = vmatprep.subr.mxu0 %v153
    %784 = vmatpush1.msra.mxu0 %v152
    %785 = vmatprep.subr.mxu0 %v157
    %786 = vmatpush1.msra.mxu0 %v156
    %787 = vmatprep.subr.mxu0 %v161
    %788 = vmatpush1.msra.mxu0 %v160
    %789 = vmatprep.subr.mxu0 %v165
    %790 = vmatpush1.msra.mxu0 %v164
    %791 = vmatprep.subr.mxu0 %v169
    %792 = vmatpush1.msra.mxu0 %v168
    %793 = vmatprep.subr.mxu0 %v173
    %794 = vmatpush1.msra.mxu0 %v172
    %795 = vmatprep.subr.mxu0 %v177
    %796 = vmatpush1.msra.mxu0 %v176
    %797 = vmatprep.subr.mxu0 %v181
    %798 = vmatpush1.msra.mxu0 %v180
    %799 = vmatprep.subr.mxu0 %v185
    %800 = vmatpush1.msra.mxu0 %v184
    %801 = vmatprep.subr.mxu0 %v189
    %802 = vmatpush1.msra.mxu0 %v188
    %803 = vmatprep.subr.mxu0 %v193
    %804 = vmatpush1.msra.mxu0 %v192
    %805 = vmatprep.subr.mxu0 %v197
    %806 = vmatpush1.msra.mxu0 %v196
    %807 = vmatprep.subr.mxu0 0.0
    %808 = vmatpush1.msra.mxu0 0.0
    %809 = vmatprep.subr.mxu0 0.0
    %810 = vmatpush1.msra.mxu0 0.0
    %811 = vmatprep.subr.mxu0 0.0
    %812 = vmatpush1.msra.mxu0 0.0
    %813 = vmatprep.subr.mxu0 0.0
    %814 = vmatpush1.msra.mxu0 0.0
    %815 = vmatprep.subr.mxu0 0.0
    %816 = vmatpush1.msra.mxu0 0.0
    %817 = vmatprep.subr.mxu0 0.0
    %818 = vmatpush1.msra.mxu0 0.0
    %819 = vmatprep.subr.mxu0 0.0
    %820 = vmatpush1.msra.mxu0 0.0
    %821 = vmatprep.subr.mxu0 0.0
    %822 = vmatpush1.msra.mxu0 0.0
    %823 = vmatprep.subr.mxu0 0.0
    %824 = vmatpush1.msra.mxu0 0.0
    %825 = vmatprep.subr.mxu0 0.0
    %826 = vmatpush1.msra.mxu0 0.0
    %827 = vmatprep.subr.mxu0 0.0
    %828 = vmatpush1.msra.mxu0 0.0
    %829 = vmatprep.subr.mxu0 0.0
    %830 = vmatpush1.msra.mxu0 0.0
    %831 = vmatprep.subr.mxu0 0.0
    %832 = vmatpush1.msra.mxu0 0.0
    %833 = vmatprep.subr.mxu0 0.0
    %834 = vmatpush1.msra.mxu0 0.0
    %835 = vmatprep.subr.mxu0 0.0
    %836 = vmatpush1.msra.mxu0 0.0
    %837 = vmatprep.subr.mxu0 0.0
    %838 = vmatpush1.msra.mxu0 0.0
    %839 = vmatprep.mubr.f32.mxu0 0.0
    %840 = vmatmul.mubr.f32.gmra.mrb[0].mxu0 %v697
    %v841 = vpop.f32.mrb[0].mxu0
    %v842 = vadd.f32 0.0, %v841
    %v843 = vpop.f32.mrb[0].mxu0
    %v844 = vadd.f32 0.0, %v843
    %845 = vdwg.mxu0
    %v846 = vadd.f32 %v700, %v771
    %v847 = vadd.f32 %v701, %v773
    %v848 = vadd.f32 %v702, %v842
    %v849 = vadd.f32 %v703, %v844
    %v850 = vxor.u32 %v846, 2147483648
    %v851 = vxor.u32 %v847, 2147483648
    %v852 = vxor.u32 %v848, 2147483648
    %v853 = vmul.f32 %v850, 1.442695
    %v854 = vpow.pop %v853
    %v855 = vmul.f32 %v851, 1.442695
    %v856 = vpow.pop %v855
    %v857 = vmul.f32 %v852, 1.442695
    %v858 = vpow.pop %v857
    %v859 = vadd.f32 %v854, 1.0
    %v860 = vadd.f32 %v856, 1.0
    %v861 = vadd.f32 %v858, 1.0
    %v862 = vrcp.pop %v859
    %v863 = vmul.f32 1.0, %v862
    %v864 = vrcp.pop %v860
    %v865 = vmul.f32 1.0, %v864
    %v866 = vrcp.pop %v861
    %v867 = vmul.f32 1.0, %v866
    %v868 = vtanh.pop %v849
    %v869 = vmul.f32 %v865, %v695
    %v870 = vmul.f32 %v863, %v868
    %v871 = vadd.f32 %v869, %v870
    %v872 = vtanh.pop %v871
    %v873 = vmul.f32 %v867, %v872
    %s874 = scalar_lea.vmem [#allocation2], 8
    %875 = vst [vmem:[%s874] sm:$0xff] %v873
    %s876 = scalar_lea.vmem [#allocation3], 64
    %v877 = vld [vmem:[%s876] sm:$0xff]
    %v878 = vld [vmem:[%s876 + $0x8] sm:$0xff]
    %v879 = vld [vmem:[%s876 + $0x10] sm:$0xff]
    %v880 = vld [vmem:[%s876 + $0x18] sm:$0xff]
    %881 = vmatprep.subr.mxu0 %v135
    %882 = vmatpush1.msra.mxu0 %v134
    %883 = vmatprep.subr.mxu0 %v139
    %884 = vmatpush1.msra.mxu0 %v138
    %885 = vmatprep.subr.mxu0 %v143
    %886 = vmatpush1.msra.mxu0 %v142
    %887 = vmatprep.subr.mxu0 %v147
    %888 = vmatpush1.msra.mxu0 %v146
    %889 = vmatprep.subr.mxu0 %v151
    %890 = vmatpush1.msra.mxu0 %v150
    %891 = vmatprep.subr.mxu0 %v155
    %892 = vmatpush1.msra.mxu0 %v154
    %893 = vmatprep.subr.mxu0 %v159
    %894 = vmatpush1.msra.mxu0 %v158
    %895 = vmatprep.subr.mxu0 %v163
    %896 = vmatpush1.msra.mxu0 %v162
    %897 = vmatprep.subr.mxu0 %v167
    %898 = vmatpush1.msra.mxu0 %v166
    %899 = vmatprep.subr.mxu0 %v171
    %900 = vmatpush1.msra.mxu0 %v170
    %901 = vmatprep.subr.mxu0 %v175
    %902 = vmatpush1.msra.mxu0 %v174
    %903 = vmatprep.subr.mxu0 %v179
    %904 = vmatpush1.msra.mxu0 %v178
    %905 = vmatprep.subr.mxu0 %v183
    %906 = vmatpush1.msra.mxu0 %v182
    %907 = vmatprep.subr.mxu0 %v187
    %908 = vmatpush1.msra.mxu0 %v186
    %909 = vmatprep.subr.mxu0 %v191
    %910 = vmatpush1.msra.mxu0 %v190
    %911 = vmatprep.subr.mxu0 %v195
    %912 = vmatpush1.msra.mxu0 %v194
    %913 = vmatprep.subr.mxu0 0.0
    %914 = vmatpush1.msra.mxu0 0.0
    %915 = vmatprep.subr.mxu0 0.0
    %916 = vmatpush1.msra.mxu0 0.0
    %917 = vmatprep.subr.mxu0 0.0
    %918 = vmatpush1.msra.mxu0 0.0
    %919 = vmatprep.subr.mxu0 0.0
    %920 = vmatpush1.msra.mxu0 0.0
    %921 = vmatprep.subr.mxu0 0.0
    %922 = vmatpush1.msra.mxu0 0.0
    %923 = vmatprep.subr.mxu0 0.0
    %924 = vmatpush1.msra.mxu0 0.0
    %925 = vmatprep.subr.mxu0 0.0
    %926 = vmatpush1.msra.mxu0 0.0
    %927 = vmatprep.subr.mxu0 0.0
    %928 = vmatpush1.msra.mxu0 0.0
    %929 = vmatprep.subr.mxu0 0.0
    %930 = vmatpush1.msra.mxu0 0.0
    %931 = vmatprep.subr.mxu0 0.0
    %932 = vmatpush1.msra.mxu0 0.0
    %933 = vmatprep.subr.mxu0 0.0
    %934 = vmatpush1.msra.mxu0 0.0
    %935 = vmatprep.subr.mxu0 0.0
    %936 = vmatpush1.msra.mxu0 0.0
    %937 = vmatprep.subr.mxu0 0.0
    %938 = vmatpush1.msra.mxu0 0.0
    %939 = vmatprep.subr.mxu0 0.0
    %940 = vmatpush1.msra.mxu0 0.0
    %941 = vmatprep.subr.mxu0 0.0
    %942 = vmatpush1.msra.mxu0 0.0
    %943 = vmatprep.subr.mxu0 0.0
    %944 = vmatpush1.msra.mxu0 0.0
    %945 = vmatprep.mubr.f32.mxu0 0.0
    %946 = vmatmul.mubr.f32.gmra.mrb[0].mxu0 %v873
    %v947 = vpop.f32.mrb[0].mxu0
    %v948 = vadd.f32 0.0, %v947
    %v949 = vpop.f32.mrb[0].mxu0
    %v950 = vadd.f32 0.0, %v949
    %951 = vdwg.mxu0
    %952 = vmatprep.subr.mxu0 %v137
    %953 = vmatpush1.msra.mxu0 %v136
    %954 = vmatprep.subr.mxu0 %v141
    %955 = vmatpush1.msra.mxu0 %v140
    %956 = vmatprep.subr.mxu0 %v145
    %957 = vmatpush1.msra.mxu0 %v144
    %958 = vmatprep.subr.mxu0 %v149
    %959 = vmatpush1.msra.mxu0 %v148
    %960 = vmatprep.subr.mxu0 %v153
    %961 = vmatpush1.msra.mxu0 %v152
    %962 = vmatprep.subr.mxu0 %v157
    %963 = vmatpush1.msra.mxu0 %v156
    %964 = vmatprep.subr.mxu0 %v161
    %965 = vmatpush1.msra.mxu0 %v160
    %966 = vmatprep.subr.mxu0 %v165
    %967 = vmatpush1.msra.mxu0 %v164
    %968 = vmatprep.subr.mxu0 %v169
    %969 = vmatpush1.msra.mxu0 %v168
    %970 = vmatprep.subr.mxu0 %v173
    %971 = vmatpush1.msra.mxu0 %v172
    %972 = vmatprep.subr.mxu0 %v177
    %973 = vmatpush1.msra.mxu0 %v176
    %974 = vmatprep.subr.mxu0 %v181
    %975 = vmatpush1.msra.mxu0 %v180
    %976 = vmatprep.subr.mxu0 %v185
    %977 = vmatpush1.msra.mxu0 %v184
    %978 = vmatprep.subr.mxu0 %v189
    %979 = vmatpush1.msra.mxu0 %v188
    %980 = vmatprep.subr.mxu0 %v193
    %981 = vmatpush1.msra.mxu0 %v192
    %982 = vmatprep.subr.mxu0 %v197
    %983 = vmatpush1.msra.mxu0 %v196
    %984 = vmatprep.subr.mxu0 0.0
    %985 = vmatpush1.msra.mxu0 0.0
    %986 = vmatprep.subr.mxu0 0.0
    %987 = vmatpush1.msra.mxu0 0.0
    %988 = vmatprep.subr.mxu0 0.0
    %989 = vmatpush1.msra.mxu0 0.0
    %990 = vmatprep.subr.mxu0 0.0
    %991 = vmatpush1.msra.mxu0 0.0
    %992 = vmatprep.subr.mxu0 0.0
    %993 = vmatpush1.msra.mxu0 0.0
    %994 = vmatprep.subr.mxu0 0.0
    %995 = vmatpush1.msra.mxu0 0.0
    %996 = vmatprep.subr.mxu0 0.0
    %997 = vmatpush1.msra.mxu0 0.0
    %998 = vmatprep.subr.mxu0 0.0
    %999 = vmatpush1.msra.mxu0 0.0
    %1000 = vmatprep.subr.mxu0 0.0
    %1001 = vmatpush1.msra.mxu0 0.0
    %1002 = vmatprep.subr.mxu0 0.0
    %1003 = vmatpush1.msra.mxu0 0.0
    %1004 = vmatprep.subr.mxu0 0.0
    %1005 = vmatpush1.msra.mxu0 0.0
    %1006 = vmatprep.subr.mxu0 0.0
    %1007 = vmatpush1.msra.mxu0 0.0
    %1008 = vmatprep.subr.mxu0 0.0
    %1009 = vmatpush1.msra.mxu0 0.0
    %1010 = vmatprep.subr.mxu0 0.0
    %1011 = vmatpush1.msra.mxu0 0.0
    %1012 = vmatprep.subr.mxu0 0.0
    %1013 = vmatpush1.msra.mxu0 0.0
    %1014 = vmatprep.subr.mxu0 0.0
    %1015 = vmatpush1.msra.mxu0 0.0
    %1016 = vmatprep.mubr.f32.mxu0 0.0
    %1017 = vmatmul.mubr.f32.gmra.mrb[0].mxu0 %v873
    %v1018 = vpop.f32.mrb[0].mxu0
    %v1019 = vadd.f32 0.0, %v1018
    %v1020 = vpop.f32.mrb[0].mxu0
    %v1021 = vadd.f32 0.0, %v1020
    %1022 = vdwg.mxu0
    %v1023 = vadd.f32 %v877, %v948
    %v1024 = vadd.f32 %v878, %v950
    %v1025 = vadd.f32 %v879, %v1019
    %v1026 = vadd.f32 %v880, %v1021
    %v1027 = vxor.u32 %v1023, 2147483648
    %v1028 = vxor.u32 %v1024, 2147483648
    %v1029 = vxor.u32 %v1025, 2147483648
    %v1030 = vmul.f32 %v1027, 1.442695
    %v1031 = vpow.pop %v1030
    %v1032 = vmul.f32 %v1028, 1.442695
    %v1033 = vpow.pop %v1032
    %v1034 = vmul.f32 %v1029, 1.442695
    %v1035 = vpow.pop %v1034
    %v1036 = vadd.f32 %v1031, 1.0
    %v1037 = vadd.f32 %v1033, 1.0
    %v1038 = vadd.f32 %v1035, 1.0
    %v1039 = vrcp.pop %v1036
    %v1040 = vmul.f32 1.0, %v1039
    %v1041 = vrcp.pop %v1037
    %v1042 = vmul.f32 1.0, %v1041
    %v1043 = vrcp.pop %v1038
    %v1044 = vmul.f32 1.0, %v1043
    %v1045 = vtanh.pop %v1026
    %v1046 = vmul.f32 %v1042, %v871
    %v1047 = vmul.f32 %v1040, %v1045
    %v1048 = vadd.f32 %v1046, %v1047
    %v1049 = vtanh.pop %v1048
    %v1050 = vmul.f32 %v1044, %v1049
    %s1051 = scalar_lea.vmem [#allocation2], 16
    %1052 = vst [vmem:[%s1051] sm:$0xff] %v1050
    %s1053 = scalar_lea.vmem [#allocation3], 96
    %v1054 = vld [vmem:[%s1053] sm:$0xff]
    %v1055 = vld [vmem:[%s1053 + $0x8] sm:$0xff]
    %v1056 = vld [vmem:[%s1053 + $0x10] sm:$0xff]
    %v1057 = vld [vmem:[%s1053 + $0x18] sm:$0xff]
    %1058 = vmatprep.subr.mxu0 %v135
    %1059 = vmatpush1.msra.mxu0 %v134
    %1060 = vmatprep.subr.mxu0 %v139
    %1061 = vmatpush1.msra.mxu0 %v138
    %1062 = vmatprep.subr.mxu0 %v143
    %1063 = vmatpush1.msra.mxu0 %v142
    %1064 = vmatprep.subr.mxu0 %v147
    %1065 = vmatpush1.msra.mxu0 %v146
    %1066 = vmatprep.subr.mxu0 %v151
    %1067 = vmatpush1.msra.mxu0 %v150
    %1068 = vmatprep.subr.mxu0 %v155
    %1069 = vmatpush1.msra.mxu0 %v154
    %1070 = vmatprep.subr.mxu0 %v159
    %1071 = vmatpush1.msra.mxu0 %v158
    %1072 = vmatprep.subr.mxu0 %v163
    %1073 = vmatpush1.msra.mxu0 %v162
    %1074 = vmatprep.subr.mxu0 %v167
    %1075 = vmatpush1.msra.mxu0 %v166
    %1076 = vmatprep.subr.mxu0 %v171
    %1077 = vmatpush1.msra.mxu0 %v170
    %1078 = vmatprep.subr.mxu0 %v175
    %1079 = vmatpush1.msra.mxu0 %v174
    %1080 = vmatprep.subr.mxu0 %v179
    %1081 = vmatpush1.msra.mxu0 %v178
    %1082 = vmatprep.subr.mxu0 %v183
    %1083 = vmatpush1.msra.mxu0 %v182
    %1084 = vmatprep.subr.mxu0 %v187
    %1085 = vmatpush1.msra.mxu0 %v186
    %1086 = vmatprep.subr.mxu0 %v191
    %1087 = vmatpush1.msra.mxu0 %v190
    %1088 = vmatprep.subr.mxu0 %v195
    %1089 = vmatpush1.msra.mxu0 %v194
    %1090 = vmatprep.subr.mxu0 0.0
    %1091 = vmatpush1.msra.mxu0 0.0
    %1092 = vmatprep.subr.mxu0 0.0
    %1093 = vmatpush1.msra.mxu0 0.0
    %1094 = vmatprep.subr.mxu0 0.0
    %1095 = vmatpush1.msra.mxu0 0.0
    %1096 = vmatprep.subr.mxu0 0.0
    %1097 = vmatpush1.msra.mxu0 0.0
    %1098 = vmatprep.subr.mxu0 0.0
    %1099 = vmatpush1.msra.mxu0 0.0
    %1100 = vmatprep.subr.mxu0 0.0
    %1101 = vmatpush1.msra.mxu0 0.0
    %1102 = vmatprep.subr.mxu0 0.0
    %1103 = vmatpush1.msra.mxu0 0.0
    %1104 = vmatprep.subr.mxu0 0.0
    %1105 = vmatpush1.msra.mxu0 0.0
    %1106 = vmatprep.subr.mxu0 0.0
    %1107 = vmatpush1.msra.mxu0 0.0
    %1108 = vmatprep.subr.mxu0 0.0
    %1109 = vmatpush1.msra.mxu0 0.0
    %1110 = vmatprep.subr.mxu0 0.0
    %1111 = vmatpush1.msra.mxu0 0.0
    %1112 = vmatprep.subr.mxu0 0.0
    %1113 = vmatpush1.msra.mxu0 0.0
    %1114 = vmatprep.subr.mxu0 0.0
    %1115 = vmatpush1.msra.mxu0 0.0
    %1116 = vmatprep.subr.mxu0 0.0
    %1117 = vmatpush1.msra.mxu0 0.0
    %1118 = vmatprep.subr.mxu0 0.0
    %1119 = vmatpush1.msra.mxu0 0.0
    %1120 = vmatprep.subr.mxu0 0.0
    %1121 = vmatpush1.msra.mxu0 0.0
    %1122 = vmatprep.mubr.f32.mxu0 0.0
    %1123 = vmatmul.mubr.f32.gmra.mrb[0].mxu0 %v1050
    %v1124 = vpop.f32.mrb[0].mxu0
    %v1125 = vadd.f32 0.0, %v1124
    %v1126 = vpop.f32.mrb[0].mxu0
    %v1127 = vadd.f32 0.0, %v1126
    %1128 = vdwg.mxu0
    %1129 = vmatprep.subr.mxu0 %v137
    %1130 = vmatpush1.msra.mxu0 %v136
    %1131 = vmatprep.subr.mxu0 %v141
    %1132 = vmatpush1.msra.mxu0 %v140
    %1133 = vmatprep.subr.mxu0 %v145
    %1134 = vmatpush1.msra.mxu0 %v144
    %1135 = vmatprep.subr.mxu0 %v149
    %1136 = vmatpush1.msra.mxu0 %v148
    %1137 = vmatprep.subr.mxu0 %v153
    %1138 = vmatpush1.msra.mxu0 %v152
    %1139 = vmatprep.subr.mxu0 %v157
    %1140 = vmatpush1.msra.mxu0 %v156
    %1141 = vmatprep.subr.mxu0 %v161
    %1142 = vmatpush1.msra.mxu0 %v160
    %1143 = vmatprep.subr.mxu0 %v165
    %1144 = vmatpush1.msra.mxu0 %v164
    %1145 = vmatprep.subr.mxu0 %v169
    %1146 = vmatpush1.msra.mxu0 %v168
    %1147 = vmatprep.subr.mxu0 %v173
    %1148 = vmatpush1.msra.mxu0 %v172
    %1149 = vmatprep.subr.mxu0 %v177
    %1150 = vmatpush1.msra.mxu0 %v176
    %1151 = vmatprep.subr.mxu0 %v181
    %1152 = vmatpush1.msra.mxu0 %v180
    %1153 = vmatprep.subr.mxu0 %v185
    %1154 = vmatpush1.msra.mxu0 %v184
    %1155 = vmatprep.subr.mxu0 %v189
    %1156 = vmatpush1.msra.mxu0 %v188
    %1157 = vmatprep.subr.mxu0 %v193
    %1158 = vmatpush1.msra.mxu0 %v192
    %1159 = vmatprep.subr.mxu0 %v197
    %1160 = vmatpush1.msra.mxu0 %v196
    %1161 = vmatprep.subr.mxu0 0.0
    %1162 = vmatpush1.msra.mxu0 0.0
    %1163 = vmatprep.subr.mxu0 0.0
    %1164 = vmatpush1.msra.mxu0 0.0
    %1165 = vmatprep.subr.mxu0 0.0
    %1166 = vmatpush1.msra.mxu0 0.0
    %1167 = vmatprep.subr.mxu0 0.0
    %1168 = vmatpush1.msra.mxu0 0.0
    %1169 = vmatprep.subr.mxu0 0.0
    %1170 = vmatpush1.msra.mxu0 0.0
    %1171 = vmatprep.subr.mxu0 0.0
    %1172 = vmatpush1.msra.mxu0 0.0
    %1173 = vmatprep.subr.mxu0 0.0
    %1174 = vmatpush1.msra.mxu0 0.0
    %1175 = vmatprep.subr.mxu0 0.0
    %1176 = vmatpush1.msra.mxu0 0.0
    %1177 = vmatprep.subr.mxu0 0.0
    %1178 = vmatpush1.msra.mxu0 0.0
    %1179 = vmatprep.subr.mxu0 0.0
    %1180 = vmatpush1.msra.mxu0 0.0
    %1181 = vmatprep.subr.mxu0 0.0
    %1182 = vmatpush1.msra.mxu0 0.0
    %1183 = vmatprep.subr.mxu0 0.0
    %1184 = vmatpush1.msra.mxu0 0.0
    %1185 = vmatprep.subr.mxu0 0.0
    %1186 = vmatpush1.msra.mxu0 0.0
    %1187 = vmatprep.subr.mxu0 0.0
    %1188 = vmatpush1.msra.mxu0 0.0
    %1189 = vmatprep.subr.mxu0 0.0
    %1190 = vmatpush1.msra.mxu0 0.0
    %1191 = vmatprep.subr.mxu0 0.0
    %1192 = vmatpush1.msra.mxu0 0.0
    %1193 = vmatprep.mubr.f32.mxu0 0.0
    %1194 = vmatmul.mubr.f32.gmra.mrb[0].mxu0 %v1050
    %v1195 = vpop.f32.mrb[0].mxu0
    %v1196 = vadd.f32 0.0, %v1195
    %v1197 = vpop.f32.mrb[0].mxu0
    %v1198 = vadd.f32 0.0, %v1197
    %1199 = vdwg.mxu0
    %v1200 = vadd.f32 %v1054, %v1125
    %v1201 = vadd.f32 %v1055, %v1127
    %v1202 = vadd.f32 %v1056, %v1196
    %v1203 = vadd.f32 %v1057, %v1198
    %v1204 = vxor.u32 %v1200, 2147483648
    %v1205 = vxor.u32 %v1201, 2147483648
    %v1206 = vxor.u32 %v1202, 2147483648
    %v1207 = vmul.f32 %v1204, 1.442695
    %v1208 = vpow.pop %v1207
    %v1209 = vmul.f32 %v1205, 1.442695
    %v1210 = vpow.pop %v1209
    %v1211 = vmul.f32 %v1206, 1.442695
    %v1212 = vpow.pop %v1211
    %v1213 = vadd.f32 %v1208, 1.0
    %v1214 = vadd.f32 %v1210, 1.0
    %v1215 = vadd.f32 %v1212, 1.0
    %v1216 = vrcp.pop %v1213
    %v1217 = vmul.f32 1.0, %v1216
    %v1218 = vrcp.pop %v1214
    %v1219 = vmul.f32 1.0, %v1218
    %v1220 = vrcp.pop %v1215
    %v1221 = vmul.f32 1.0, %v1220
    %v1222 = vtanh.pop %v1203
    %v1223 = vmul.f32 %v1219, %v1048
    %v1224 = vmul.f32 %v1217, %v1222
    %v1225 = vadd.f32 %v1223, %v1224
    %v1226 = vtanh.pop %v1225
    %v1227 = vmul.f32 %v1221, %v1226
    %s1228 = scalar_lea.vmem [#allocation2], 24
    %1229 = vst [vmem:[%s1228] sm:$0xff] %v1227
    %s1230 = scalar_lea.vmem [#allocation3], 128
    %v1231 = vld [vmem:[%s1230] sm:$0xff]
    %v1232 = vld [vmem:[%s1230 + $0x8] sm:$0xff]
    %v1233 = vld [vmem:[%s1230 + $0x10] sm:$0xff]
    %v1234 = vld [vmem:[%s1230 + $0x18] sm:$0xff]
    %1235 = vmatprep.subr.mxu0 %v135
    %1236 = vmatpush1.msra.mxu0 %v134
    %1237 = vmatprep.subr.mxu0 %v139
    %1238 = vmatpush1.msra.mxu0 %v138
    %1239 = vmatprep.subr.mxu0 %v143
    %1240 = vmatpush1.msra.mxu0 %v142
    %1241 = vmatprep.subr.mxu0 %v147
    %1242 = vmatpush1.msra.mxu0 %v146
    %1243 = vmatprep.subr.mxu0 %v151
    %1244 = vmatpush1.msra.mxu0 %v150
    %1245 = vmatprep.subr.mxu0 %v155
    %1246 = vmatpush1.msra.mxu0 %v154
    %1247 = vmatprep.subr.mxu0 %v159
    %1248 = vmatpush1.msra.mxu0 %v158
    %1249 = vmatprep.subr.mxu0 %v163
    %1250 = vmatpush1.msra.mxu0 %v162
    %1251 = vmatprep.subr.mxu0 %v167
    %1252 = vmatpush1.msra.mxu0 %v166
    %1253 = vmatprep.subr.mxu0 %v171
    %1254 = vmatpush1.msra.mxu0 %v170
    %1255 = vmatprep.subr.mxu0 %v175
    %1256 = vmatpush1.msra.mxu0 %v174
    %1257 = vmatprep.subr.mxu0 %v179
    %1258 = vmatpush1.msra.mxu0 %v178
    %1259 = vmatprep.subr.mxu0 %v183
    %1260 = vmatpush1.msra.mxu0 %v182
    %1261 = vmatprep.subr.mxu0 %v187
    %1262 = vmatpush1.msra.mxu0 %v186
    %1263 = vmatprep.subr.mxu0 %v191
    %1264 = vmatpush1.msra.mxu0 %v190
    %1265 = vmatprep.subr.mxu0 %v195
    %1266 = vmatpush1.msra.mxu0 %v194
    %1267 = vmatprep.subr.mxu0 0.0
    %1268 = vmatpush1.msra.mxu0 0.0
    %1269 = vmatprep.subr.mxu0 0.0
    %1270 = vmatpush1.msra.mxu0 0.0
    %1271 = vmatprep.subr.mxu0 0.0
    %1272 = vmatpush1.msra.mxu0 0.0
    %1273 = vmatprep.subr.mxu0 0.0
    %1274 = vmatpush1.msra.mxu0 0.0
    %1275 = vmatprep.subr.mxu0 0.0
    %1276 = vmatpush1.msra.mxu0 0.0
    %1277 = vmatprep.subr.mxu0 0.0
    %1278 = vmatpush1.msra.mxu0 0.0
    %1279 = vmatprep.subr.mxu0 0.0
    %1280 = vmatpush1.msra.mxu0 0.0
    %1281 = vmatprep.subr.mxu0 0.0
    %1282 = vmatpush1.msra.mxu0 0.0
    %1283 = vmatprep.subr.mxu0 0.0
    %1284 = vmatpush1.msra.mxu0 0.0
    %1285 = vmatprep.subr.mxu0 0.0
    %1286 = vmatpush1.msra.mxu0 0.0
    %1287 = vmatprep.subr.mxu0 0.0
    %1288 = vmatpush1.msra.mxu0 0.0
    %1289 = vmatprep.subr.mxu0 0.0
    %1290 = vmatpush1.msra.mxu0 0.0
    %1291 = vmatprep.subr.mxu0 0.0
    %1292 = vmatpush1.msra.mxu0 0.0
    %1293 = vmatprep.subr.mxu0 0.0
    %1294 = vmatpush1.msra.mxu0 0.0
    %1295 = vmatprep.subr.mxu0 0.0
    %1296 = vmatpush1.msra.mxu0 0.0
    %1297 = vmatprep.subr.mxu0 0.0
    %1298 = vmatpush1.msra.mxu0 0.0
    %1299 = vmatprep.mubr.f32.mxu0 0.0
    %1300 = vmatmul.mubr.f32.gmra.mrb[0].mxu0 %v1227
    %v1301 = vpop.f32.mrb[0].mxu0
    %v1302 = vadd.f32 0.0, %v1301
    %v1303 = vpop.f32.mrb[0].mxu0
    %v1304 = vadd.f32 0.0, %v1303
    %1305 = vdwg.mxu0
    %1306 = vmatprep.subr.mxu0 %v137
    %1307 = vmatpush1.msra.mxu0 %v136
    %1308 = vmatprep.subr.mxu0 %v141
    %1309 = vmatpush1.msra.mxu0 %v140
    %1310 = vmatprep.subr.mxu0 %v145
    %1311 = vmatpush1.msra.mxu0 %v144
    %1312 = vmatprep.subr.mxu0 %v149
    %1313 = vmatpush1.msra.mxu0 %v148
    %1314 = vmatprep.subr.mxu0 %v153
    %1315 = vmatpush1.msra.mxu0 %v152
    %1316 = vmatprep.subr.mxu0 %v157
    %1317 = vmatpush1.msra.mxu0 %v156
    %1318 = vmatprep.subr.mxu0 %v161
    %1319 = vmatpush1.msra.mxu0 %v160
    %1320 = vmatprep.subr.mxu0 %v165
    %1321 = vmatpush1.msra.mxu0 %v164
    %1322 = vmatprep.subr.mxu0 %v169
    %1323 = vmatpush1.msra.mxu0 %v168
    %1324 = vmatprep.subr.mxu0 %v173
    %1325 = vmatpush1.msra.mxu0 %v172
    %1326 = vmatprep.subr.mxu0 %v177
    %1327 = vmatpush1.msra.mxu0 %v176
    %1328 = vmatprep.subr.mxu0 %v181
    %1329 = vmatpush1.msra.mxu0 %v180
    %1330 = vmatprep.subr.mxu0 %v185
    %1331 = vmatpush1.msra.mxu0 %v184
    %1332 = vmatprep.subr.mxu0 %v189
    %1333 = vmatpush1.msra.mxu0 %v188
    %1334 = vmatprep.subr.mxu0 %v193
    %1335 = vmatpush1.msra.mxu0 %v192
    %1336 = vmatprep.subr.mxu0 %v197
    %1337 = vmatpush1.msra.mxu0 %v196
    %1338 = vmatprep.subr.mxu0 0.0
    %1339 = vmatpush1.msra.mxu0 0.0
    %1340 = vmatprep.subr.mxu0 0.0
    %1341 = vmatpush1.msra.mxu0 0.0
    %1342 = vmatprep.subr.mxu0 0.0
    %1343 = vmatpush1.msra.mxu0 0.0
    %1344 = vmatprep.subr.mxu0 0.0
    %1345 = vmatpush1.msra.mxu0 0.0
    %1346 = vmatprep.subr.mxu0 0.0
    %1347 = vmatpush1.msra.mxu0 0.0
    %1348 = vmatprep.subr.mxu0 0.0
    %1349 = vmatpush1.msra.mxu0 0.0
    %1350 = vmatprep.subr.mxu0 0.0
    %1351 = vmatpush1.msra.mxu0 0.0
    %1352 = vmatprep.subr.mxu0 0.0
    %1353 = vmatpush1.msra.mxu0 0.0
    %1354 = vmatprep.subr.mxu0 0.0
    %1355 = vmatpush1.msra.mxu0 0.0
    %1356 = vmatprep.subr.mxu0 0.0
    %1357 = vmatpush1.msra.mxu0 0.0
    %1358 = vmatprep.subr.mxu0 0.0
    %1359 = vmatpush1.msra.mxu0 0.0
    %1360 = vmatprep.subr.mxu0 0.0
    %1361 = vmatpush1.msra.mxu0 0.0
    %1362 = vmatprep.subr.mxu0 0.0
    %1363 = vmatpush1.msra.mxu0 0.0
    %1364 = vmatprep.subr.mxu0 0.0
    %1365 = vmatpush1.msra.mxu0 0.0
    %1366 = vmatprep.subr.mxu0 0.0
    %1367 = vmatpush1.msra.mxu0 0.0
    %1368 = vmatprep.subr.mxu0 0.0
    %1369 = vmatpush1.msra.mxu0 0.0
    %1370 = vmatprep.mubr.f32.mxu0 0.0
    %1371 = vmatmul.mubr.f32.gmra.mrb[0].mxu0 %v1227
    %v1372 = vpop.f32.mrb[0].mxu0
    %v1373 = vadd.f32 0.0, %v1372
    %v1374 = vpop.f32.mrb[0].mxu0
    %v1375 = vadd.f32 0.0, %v1374
    %1376 = vdwg.mxu0
    %v1377 = vadd.f32 %v1231, %v1302
    %v1378 = vadd.f32 %v1232, %v1304
    %v1379 = vadd.f32 %v1233, %v1373
    %v1380 = vadd.f32 %v1234, %v1375
    %v1381 = vxor.u32 %v1377, 2147483648
    %v1382 = vxor.u32 %v1378, 2147483648
    %v1383 = vxor.u32 %v1379, 2147483648
    %v1384 = vmul.f32 %v1381, 1.442695
    %v1385 = vpow.pop %v1384
    %v1386 = vmul.f32 %v1382, 1.442695
    %v1387 = vpow.pop %v1386
    %v1388 = vmul.f32 %v1383, 1.442695
    %v1389 = vpow.pop %v1388
    %v1390 = vadd.f32 %v1385, 1.0
    %v1391 = vadd.f32 %v1387, 1.0
    %v1392 = vadd.f32 %v1389, 1.0
    %v1393 = vrcp.pop %v1390
    %v1394 = vmul.f32 1.0, %v1393
    %v1395 = vrcp.pop %v1391
    %v1396 = vmul.f32 1.0, %v1395
    %v1397 = vrcp.pop %v1392
    %v1398 = vmul.f32 1.0, %v1397
    %v1399 = vtanh.pop %v1380
    %v1400 = vmul.f32 %v1396, %v1225
    %v1401 = vmul.f32 %v1394, %v1399
    %v1402 = vadd.f32 %v1400, %v1401
    %v1403 = vtanh.pop %v1402
    %v1404 = vmul.f32 %v1398, %v1403
    %s1405 = scalar_lea.vmem [#allocation2], 32
    %1406 = vst [vmem:[%s1405] sm:$0xff] %v1404
    %s1407 = scalar_lea.vmem [#allocation3], 160
    %v1408 = vld [vmem:[%s1407] sm:$0xff]
    %v1409 = vld [vmem:[%s1407 + $0x8] sm:$0xff]
    %v1410 = vld [vmem:[%s1407 + $0x10] sm:$0xff]
    %v1411 = vld [vmem:[%s1407 + $0x18] sm:$0xff]
    %1412 = vmatprep.subr.mxu0 %v135
    %1413 = vmatpush1.msra.mxu0 %v134
    %1414 = vmatprep.subr.mxu0 %v139
    %1415 = vmatpush1.msra.mxu0 %v138
    %1416 = vmatprep.subr.mxu0 %v143
    %1417 = vmatpush1.msra.mxu0 %v142
    %1418 = vmatprep.subr.mxu0 %v147
    %1419 = vmatpush1.msra.mxu0 %v146
    %1420 = vmatprep.subr.mxu0 %v151
    %1421 = vmatpush1.msra.mxu0 %v150
    %1422 = vmatprep.subr.mxu0 %v155
    %1423 = vmatpush1.msra.mxu0 %v154
    %1424 = vmatprep.subr.mxu0 %v159
    %1425 = vmatpush1.msra.mxu0 %v158
    %1426 = vmatprep.subr.mxu0 %v163
    %1427 = vmatpush1.msra.mxu0 %v162
    %1428 = vmatprep.subr.mxu0 %v167
    %1429 = vmatpush1.msra.mxu0 %v166
    %1430 = vmatprep.subr.mxu0 %v171
    %1431 = vmatpush1.msra.mxu0 %v170
    %1432 = vmatprep.subr.mxu0 %v175
    %1433 = vmatpush1.msra.mxu0 %v174
    %1434 = vmatprep.subr.mxu0 %v179
    %1435 = vmatpush1.msra.mxu0 %v178
    %1436 = vmatprep.subr.mxu0 %v183
    %1437 = vmatpush1.msra.mxu0 %v182
    %1438 = vmatprep.subr.mxu0 %v187
    %1439 = vmatpush1.msra.mxu0 %v186
    %1440 = vmatprep.subr.mxu0 %v191
    %1441 = vmatpush1.msra.mxu0 %v190
    %1442 = vmatprep.subr.mxu0 %v195
    %1443 = vmatpush1.msra.mxu0 %v194
    %1444 = vmatprep.subr.mxu0 0.0
    %1445 = vmatpush1.msra.mxu0 0.0
    %1446 = vmatprep.subr.mxu0 0.0
    %1447 = vmatpush1.msra.mxu0 0.0
    %1448 = vmatprep.subr.mxu0 0.0
    %1449 = vmatpush1.msra.mxu0 0.0
    %1450 = vmatprep.subr.mxu0 0.0
    %1451 = vmatpush1.msra.mxu0 0.0
    %1452 = vmatprep.subr.mxu0 0.0
    %1453 = vmatpush1.msra.mxu0 0.0
    %1454 = vmatprep.subr.mxu0 0.0
    %1455 = vmatpush1.msra.mxu0 0.0
    %1456 = vmatprep.subr.mxu0 0.0
    %1457 = vmatpush1.msra.mxu0 0.0
    %1458 = vmatprep.subr.mxu0 0.0
    %1459 = vmatpush1.msra.mxu0 0.0
    %1460 = vmatprep.subr.mxu0 0.0
    %1461 = vmatpush1.msra.mxu0 0.0
    %1462 = vmatprep.subr.mxu0 0.0
    %1463 = vmatpush1.msra.mxu0 0.0
    %1464 = vmatprep.subr.mxu0 0.0
    %1465 = vmatpush1.msra.mxu0 0.0
    %1466 = vmatprep.subr.mxu0 0.0
    %1467 = vmatpush1.msra.mxu0 0.0
    %1468 = vmatprep.subr.mxu0 0.0
    %1469 = vmatpush1.msra.mxu0 0.0
    %1470 = vmatprep.subr.mxu0 0.0
    %1471 = vmatpush1.msra.mxu0 0.0
    %1472 = vmatprep.subr.mxu0 0.0
    %1473 = vmatpush1.msra.mxu0 0.0
    %1474 = vmatprep.subr.mxu0 0.0
    %1475 = vmatpush1.msra.mxu0 0.0
    %1476 = vmatprep.mubr.f32.mxu0 0.0
    %1477 = vmatmul.mubr.f32.gmra.mrb[0].mxu0 %v1404
    %v1478 = vpop.f32.mrb[0].mxu0
    %v1479 = vadd.f32 0.0, %v1478
    %v1480 = vpop.f32.mrb[0].mxu0
    %v1481 = vadd.f32 0.0, %v1480
    %1482 = vdwg.mxu0
    %1483 = vmatprep.subr.mxu0 %v137
    %1484 = vmatpush1.msra.mxu0 %v136
    %1485 = vmatprep.subr.mxu0 %v141
    %1486 = vmatpush1.msra.mxu0 %v140
    %1487 = vmatprep.subr.mxu0 %v145
    %1488 = vmatpush1.msra.mxu0 %v144
    %1489 = vmatprep.subr.mxu0 %v149
    %1490 = vmatpush1.msra.mxu0 %v148
    %1491 = vmatprep.subr.mxu0 %v153
    %1492 = vmatpush1.msra.mxu0 %v152
    %1493 = vmatprep.subr.mxu0 %v157
    %1494 = vmatpush1.msra.mxu0 %v156
    %1495 = vmatprep.subr.mxu0 %v161
    %1496 = vmatpush1.msra.mxu0 %v160
    %1497 = vmatprep.subr.mxu0 %v165
    %1498 = vmatpush1.msra.mxu0 %v164
    %1499 = vmatprep.subr.mxu0 %v169
    %1500 = vmatpush1.msra.mxu0 %v168
    %1501 = vmatprep.subr.mxu0 %v173
    %1502 = vmatpush1.msra.mxu0 %v172
    %1503 = vmatprep.subr.mxu0 %v177
    %1504 = vmatpush1.msra.mxu0 %v176
    %1505 = vmatprep.subr.mxu0 %v181
    %1506 = vmatpush1.msra.mxu0 %v180
    %1507 = vmatprep.subr.mxu0 %v185
    %1508 = vmatpush1.msra.mxu0 %v184
    %1509 = vmatprep.subr.mxu0 %v189
    %1510 = vmatpush1.msra.mxu0 %v188
    %1511 = vmatprep.subr.mxu0 %v193
    %1512 = vmatpush1.msra.mxu0 %v192
    %1513 = vmatprep.subr.mxu0 %v197
    %1514 = vmatpush1.msra.mxu0 %v196
    %1515 = vmatprep.subr.mxu0 0.0
    %1516 = vmatpush1.msra.mxu0 0.0
    %1517 = vmatprep.subr.mxu0 0.0
    %1518 = vmatpush1.msra.mxu0 0.0
    %1519 = vmatprep.subr.mxu0 0.0
    %1520 = vmatpush1.msra.mxu0 0.0
    %1521 = vmatprep.subr.mxu0 0.0
    %1522 = vmatpush1.msra.mxu0 0.0
    %1523 = vmatprep.subr.mxu0 0.0
    %1524 = vmatpush1.msra.mxu0 0.0
    %1525 = vmatprep.subr.mxu0 0.0
    %1526 = vmatpush1.msra.mxu0 0.0
    %1527 = vmatprep.subr.mxu0 0.0
    %1528 = vmatpush1.msra.mxu0 0.0
    %1529 = vmatprep.subr.mxu0 0.0
    %1530 = vmatpush1.msra.mxu0 0.0
    %1531 = vmatprep.subr.mxu0 0.0
    %1532 = vmatpush1.msra.mxu0 0.0
    %1533 = vmatprep.subr.mxu0 0.0
    %1534 = vmatpush1.msra.mxu0 0.0
    %1535 = vmatprep.subr.mxu0 0.0
    %1536 = vmatpush1.msra.mxu0 0.0
    %1537 = vmatprep.subr.mxu0 0.0
    %1538 = vmatpush1.msra.mxu0 0.0
    %1539 = vmatprep.subr.mxu0 0.0
    %1540 = vmatpush1.msra.mxu0 0.0
    %1541 = vmatprep.subr.mxu0 0.0
    %1542 = vmatpush1.msra.mxu0 0.0
    %1543 = vmatprep.subr.mxu0 0.0
    %1544 = vmatpush1.msra.mxu0 0.0
    %1545 = vmatprep.subr.mxu0 0.0
    %1546 = vmatpush1.msra.mxu0 0.0
    %1547 = vmatprep.mubr.f32.mxu0 0.0
    %1548 = vmatmul.mubr.f32.gmra.mrb[0].mxu0 %v1404
    %v1549 = vpop.f32.mrb[0].mxu0
    %v1550 = vadd.f32 0.0, %v1549
    %v1551 = vpop.f32.mrb[0].mxu0
    %v1552 = vadd.f32 0.0, %v1551
    %1553 = vdwg.mxu0
    %v1554 = vadd.f32 %v1408, %v1479
    %v1555 = vadd.f32 %v1409, %v1481
    %v1556 = vadd.f32 %v1410, %v1550
    %v1557 = vadd.f32 %v1411, %v1552
    %v1558 = vxor.u32 %v1554, 2147483648
    %v1559 = vxor.u32 %v1555, 2147483648
    %v1560 = vxor.u32 %v1556, 2147483648
    %v1561 = vmul.f32 %v1558, 1.442695
    %v1562 = vpow.pop %v1561
    %v1563 = vmul.f32 %v1559, 1.442695
    %v1564 = vpow.pop %v1563
    %v1565 = vmul.f32 %v1560, 1.442695
    %v1566 = vpow.pop %v1565
    %v1567 = vadd.f32 %v1562, 1.0
    %v1568 = vadd.f32 %v1564, 1.0
    %v1569 = vadd.f32 %v1566, 1.0
    %v1570 = vrcp.pop %v1567
    %v1571 = vmul.f32 1.0, %v1570
    %v1572 = vrcp.pop %v1568
    %v1573 = vmul.f32 1.0, %v1572
    %v1574 = vrcp.pop %v1569
    %v1575 = vmul.f32 1.0, %v1574
    %v1576 = vtanh.pop %v1557
    %v1577 = vmul.f32 %v1573, %v1402
    %v1578 = vmul.f32 %v1571, %v1576
    %v1579 = vadd.f32 %v1577, %v1578
    %v1580 = vtanh.pop %v1579
    %v1581 = vmul.f32 %v1575, %v1580
    %s1582 = scalar_lea.vmem [#allocation2], 40
    %1583 = vst [vmem:[%s1582] sm:$0xff] %v1581
    %s1584 = scalar_lea.vmem [#allocation3], 192
    %v1585 = vld [vmem:[%s1584] sm:$0xff]
    %v1586 = vld [vmem:[%s1584 + $0x8] sm:$0xff]
    %v1587 = vld [vmem:[%s1584 + $0x10] sm:$0xff]
    %v1588 = vld [vmem:[%s1584 + $0x18] sm:$0xff]
    %1589 = vmatprep.subr.mxu0 %v135
    %1590 = vmatpush1.msra.mxu0 %v134
    %1591 = vmatprep.subr.mxu0 %v139
    %1592 = vmatpush1.msra.mxu0 %v138
    %1593 = vmatprep.subr.mxu0 %v143
    %1594 = vmatpush1.msra.mxu0 %v142
    %1595 = vmatprep.subr.mxu0 %v147
    %1596 = vmatpush1.msra.mxu0 %v146
    %1597 = vmatprep.subr.mxu0 %v151
    %1598 = vmatpush1.msra.mxu0 %v150
    %1599 = vmatprep.subr.mxu0 %v155
    %1600 = vmatpush1.msra.mxu0 %v154
    %1601 = vmatprep.subr.mxu0 %v159
    %1602 = vmatpush1.msra.mxu0 %v158
    %1603 = vmatprep.subr.mxu0 %v163
    %1604 = vmatpush1.msra.mxu0 %v162
    %1605 = vmatprep.subr.mxu0 %v167
    %1606 = vmatpush1.msra.mxu0 %v166
    %1607 = vmatprep.subr.mxu0 %v171
    %1608 = vmatpush1.msra.mxu0 %v170
    %1609 = vmatprep.subr.mxu0 %v175
    %1610 = vmatpush1.msra.mxu0 %v174
    %1611 = vmatprep.subr.mxu0 %v179
    %1612 = vmatpush1.msra.mxu0 %v178
    %1613 = vmatprep.subr.mxu0 %v183
    %1614 = vmatpush1.msra.mxu0 %v182
    %1615 = vmatprep.subr.mxu0 %v187
    %1616 = vmatpush1.msra.mxu0 %v186
    %1617 = vmatprep.subr.mxu0 %v191
    %1618 = vmatpush1.msra.mxu0 %v190
    %1619 = vmatprep.subr.mxu0 %v195
    %1620 = vmatpush1.msra.mxu0 %v194
    %1621 = vmatprep.subr.mxu0 0.0
    %1622 = vmatpush1.msra.mxu0 0.0
    %1623 = vmatprep.subr.mxu0 0.0
    %1624 = vmatpush1.msra.mxu0 0.0
    %1625 = vmatprep.subr.mxu0 0.0
    %1626 = vmatpush1.msra.mxu0 0.0
    %1627 = vmatprep.subr.mxu0 0.0
    %1628 = vmatpush1.msra.mxu0 0.0
    %1629 = vmatprep.subr.mxu0 0.0
    %1630 = vmatpush1.msra.mxu0 0.0
    %1631 = vmatprep.subr.mxu0 0.0
    %1632 = vmatpush1.msra.mxu0 0.0
    %1633 = vmatprep.subr.mxu0 0.0
    %1634 = vmatpush1.msra.mxu0 0.0
    %1635 = vmatprep.subr.mxu0 0.0
    %1636 = vmatpush1.msra.mxu0 0.0
    %1637 = vmatprep.subr.mxu0 0.0
    %1638 = vmatpush1.msra.mxu0 0.0
    %1639 = vmatprep.subr.mxu0 0.0
    %1640 = vmatpush1.msra.mxu0 0.0
    %1641 = vmatprep.subr.mxu0 0.0
    %1642 = vmatpush1.msra.mxu0 0.0
    %1643 = vmatprep.subr.mxu0 0.0
    %1644 = vmatpush1.msra.mxu0 0.0
    %1645 = vmatprep.subr.mxu0 0.0
    %1646 = vmatpush1.msra.mxu0 0.0
    %1647 = vmatprep.subr.mxu0 0.0
    %1648 = vmatpush1.msra.mxu0 0.0
    %1649 = vmatprep.subr.mxu0 0.0
    %1650 = vmatpush1.msra.mxu0 0.0
    %1651 = vmatprep.subr.mxu0 0.0
    %1652 = vmatpush1.msra.mxu0 0.0
    %1653 = vmatprep.mubr.f32.mxu0 0.0
    %1654 = vmatmul.mubr.f32.gmra.mrb[0].mxu0 %v1581
    %v1655 = vpop.f32.mrb[0].mxu0
    %v1656 = vadd.f32 0.0, %v1655
    %v1657 = vpop.f32.mrb[0].mxu0
    %v1658 = vadd.f32 0.0, %v1657
    %1659 = vdwg.mxu0
    %1660 = vmatprep.subr.mxu0 %v137
    %1661 = vmatpush1.msra.mxu0 %v136
    %1662 = vmatprep.subr.mxu0 %v141
    %1663 = vmatpush1.msra.mxu0 %v140
    %1664 = vmatprep.subr.mxu0 %v145
    %1665 = vmatpush1.msra.mxu0 %v144
    %1666 = vmatprep.subr.mxu0 %v149
    %1667 = vmatpush1.msra.mxu0 %v148
    %1668 = vmatprep.subr.mxu0 %v153
    %1669 = vmatpush1.msra.mxu0 %v152
    %1670 = vmatprep.subr.mxu0 %v157
    %1671 = vmatpush1.msra.mxu0 %v156
    %1672 = vmatprep.subr.mxu0 %v161
    %1673 = vmatpush1.msra.mxu0 %v160
    %1674 = vmatprep.subr.mxu0 %v165
    %1675 = vmatpush1.msra.mxu0 %v164
    %1676 = vmatprep.subr.mxu0 %v169
    %1677 = vmatpush1.msra.mxu0 %v168
    %1678 = vmatprep.subr.mxu0 %v173
    %1679 = vmatpush1.msra.mxu0 %v172
    %1680 = vmatprep.subr.mxu0 %v177
    %1681 = vmatpush1.msra.mxu0 %v176
    %1682 = vmatprep.subr.mxu0 %v181
    %1683 = vmatpush1.msra.mxu0 %v180
    %1684 = vmatprep.subr.mxu0 %v185
    %1685 = vmatpush1.msra.mxu0 %v184
    %1686 = vmatprep.subr.mxu0 %v189
    %1687 = vmatpush1.msra.mxu0 %v188
    %1688 = vmatprep.subr.mxu0 %v193
    %1689 = vmatpush1.msra.mxu0 %v192
    %1690 = vmatprep.subr.mxu0 %v197
    %1691 = vmatpush1.msra.mxu0 %v196
    %1692 = vmatprep.subr.mxu0 0.0
    %1693 = vmatpush1.msra.mxu0 0.0
    %1694 = vmatprep.subr.mxu0 0.0
    %1695 = vmatpush1.msra.mxu0 0.0
    %1696 = vmatprep.subr.mxu0 0.0
    %1697 = vmatpush1.msra.mxu0 0.0
    %1698 = vmatprep.subr.mxu0 0.0
    %1699 = vmatpush1.msra.mxu0 0.0
    %1700 = vmatprep.subr.mxu0 0.0
    %1701 = vmatpush1.msra.mxu0 0.0
    %1702 = vmatprep.subr.mxu0 0.0
    %1703 = vmatpush1.msra.mxu0 0.0
    %1704 = vmatprep.subr.mxu0 0.0
    %1705 = vmatpush1.msra.mxu0 0.0
    %1706 = vmatprep.subr.mxu0 0.0
    %1707 = vmatpush1.msra.mxu0 0.0
    %1708 = vmatprep.subr.mxu0 0.0
    %1709 = vmatpush1.msra.mxu0 0.0
    %1710 = vmatprep.subr.mxu0 0.0
    %1711 = vmatpush1.msra.mxu0 0.0
    %1712 = vmatprep.subr.mxu0 0.0
    %1713 = vmatpush1.msra.mxu0 0.0
    %1714 = vmatprep.subr.mxu0 0.0
    %1715 = vmatpush1.msra.mxu0 0.0
    %1716 = vmatprep.subr.mxu0 0.0
    %1717 = vmatpush1.msra.mxu0 0.0
    %1718 = vmatprep.subr.mxu0 0.0
    %1719 = vmatpush1.msra.mxu0 0.0
    %1720 = vmatprep.subr.mxu0 0.0
    %1721 = vmatpush1.msra.mxu0 0.0
    %1722 = vmatprep.subr.mxu0 0.0
    %1723 = vmatpush1.msra.mxu0 0.0
    %1724 = vmatprep.mubr.f32.mxu0 0.0
    %1725 = vmatmul.mubr.f32.gmra.mrb[0].mxu0 %v1581
    %v1726 = vpop.f32.mrb[0].mxu0
    %v1727 = vadd.f32 0.0, %v1726
    %v1728 = vpop.f32.mrb[0].mxu0
    %v1729 = vadd.f32 0.0, %v1728
    %1730 = vdwg.mxu0
    %v1731 = vadd.f32 %v1585, %v1656
    %v1732 = vadd.f32 %v1586, %v1658
    %v1733 = vadd.f32 %v1587, %v1727
    %v1734 = vadd.f32 %v1588, %v1729
    %v1735 = vxor.u32 %v1731, 2147483648
    %v1736 = vxor.u32 %v1732, 2147483648
    %v1737 = vxor.u32 %v1733, 2147483648
    %v1738 = vmul.f32 %v1735, 1.442695
    %v1739 = vpow.pop %v1738
    %v1740 = vmul.f32 %v1736, 1.442695
    %v1741 = vpow.pop %v1740
    %v1742 = vmul.f32 %v1737, 1.442695
    %v1743 = vpow.pop %v1742
    %v1744 = vadd.f32 %v1739, 1.0
    %v1745 = vadd.f32 %v1741, 1.0
    %v1746 = vadd.f32 %v1743, 1.0
    %v1747 = vrcp.pop %v1744
    %v1748 = vmul.f32 1.0, %v1747
    %v1749 = vrcp.pop %v1745
    %v1750 = vmul.f32 1.0, %v1749
    %v1751 = vrcp.pop %v1746
    %v1752 = vmul.f32 1.0, %v1751
    %v1753 = vtanh.pop %v1734
    %v1754 = vmul.f32 %v1750, %v1579
    %v1755 = vmul.f32 %v1748, %v1753
    %v1756 = vadd.f32 %v1754, %v1755
    %v1757 = vtanh.pop %v1756
    %v1758 = vmul.f32 %v1752, %v1757
    %s1759 = scalar_lea.vmem [#allocation2], 48
    %1760 = vst [vmem:[%s1759] sm:$0xff] %v1758
    %s1761 = scalar_lea.vmem [#allocation3], 224
    %v1762 = vld [vmem:[%s1761] sm:$0xff]
    %v1763 = vld [vmem:[%s1761 + $0x8] sm:$0xff]
    %v1764 = vld [vmem:[%s1761 + $0x10] sm:$0xff]
    %v1765 = vld [vmem:[%s1761 + $0x18] sm:$0xff]
    %1766 = vmatprep.subr.mxu0 %v135
    %1767 = vmatpush1.msra.mxu0 %v134
    %1768 = vmatprep.subr.mxu0 %v139
    %1769 = vmatpush1.msra.mxu0 %v138
    %1770 = vmatprep.subr.mxu0 %v143
    %1771 = vmatpush1.msra.mxu0 %v142
    %1772 = vmatprep.subr.mxu0 %v147
    %1773 = vmatpush1.msra.mxu0 %v146
    %1774 = vmatprep.subr.mxu0 %v151
    %1775 = vmatpush1.msra.mxu0 %v150
    %1776 = vmatprep.subr.mxu0 %v155
    %1777 = vmatpush1.msra.mxu0 %v154
    %1778 = vmatprep.subr.mxu0 %v159
    %1779 = vmatpush1.msra.mxu0 %v158
    %1780 = vmatprep.subr.mxu0 %v163
    %1781 = vmatpush1.msra.mxu0 %v162
    %1782 = vmatprep.subr.mxu0 %v167
    %1783 = vmatpush1.msra.mxu0 %v166
    %1784 = vmatprep.subr.mxu0 %v171
    %1785 = vmatpush1.msra.mxu0 %v170
    %1786 = vmatprep.subr.mxu0 %v175
    %1787 = vmatpush1.msra.mxu0 %v174
    %1788 = vmatprep.subr.mxu0 %v179
    %1789 = vmatpush1.msra.mxu0 %v178
    %1790 = vmatprep.subr.mxu0 %v183
    %1791 = vmatpush1.msra.mxu0 %v182
    %1792 = vmatprep.subr.mxu0 %v187
    %1793 = vmatpush1.msra.mxu0 %v186
    %1794 = vmatprep.subr.mxu0 %v191
    %1795 = vmatpush1.msra.mxu0 %v190
    %1796 = vmatprep.subr.mxu0 %v195
    %1797 = vmatpush1.msra.mxu0 %v194
    %1798 = vmatprep.subr.mxu0 0.0
    %1799 = vmatpush1.msra.mxu0 0.0
    %1800 = vmatprep.subr.mxu0 0.0
    %1801 = vmatpush1.msra.mxu0 0.0
    %1802 = vmatprep.subr.mxu0 0.0
    %1803 = vmatpush1.msra.mxu0 0.0
    %1804 = vmatprep.subr.mxu0 0.0
    %1805 = vmatpush1.msra.mxu0 0.0
    %1806 = vmatprep.subr.mxu0 0.0
    %1807 = vmatpush1.msra.mxu0 0.0
    %1808 = vmatprep.subr.mxu0 0.0
    %1809 = vmatpush1.msra.mxu0 0.0
    %1810 = vmatprep.subr.mxu0 0.0
    %1811 = vmatpush1.msra.mxu0 0.0
    %1812 = vmatprep.subr.mxu0 0.0
    %1813 = vmatpush1.msra.mxu0 0.0
    %1814 = vmatprep.subr.mxu0 0.0
    %1815 = vmatpush1.msra.mxu0 0.0
    %1816 = vmatprep.subr.mxu0 0.0
    %1817 = vmatpush1.msra.mxu0 0.0
    %1818 = vmatprep.subr.mxu0 0.0
    %1819 = vmatpush1.msra.mxu0 0.0
    %1820 = vmatprep.subr.mxu0 0.0
    %1821 = vmatpush1.msra.mxu0 0.0
    %1822 = vmatprep.subr.mxu0 0.0
    %1823 = vmatpush1.msra.mxu0 0.0
    %1824 = vmatprep.subr.mxu0 0.0
    %1825 = vmatpush1.msra.mxu0 0.0
    %1826 = vmatprep.subr.mxu0 0.0
    %1827 = vmatpush1.msra.mxu0 0.0
    %1828 = vmatprep.subr.mxu0 0.0
    %1829 = vmatpush1.msra.mxu0 0.0
    %1830 = vmatprep.mubr.f32.mxu0 0.0
    %1831 = vmatmul.mubr.f32.gmra.mrb[0].mxu0 %v1758
    %v1832 = vpop.f32.mrb[0].mxu0
    %v1833 = vadd.f32 0.0, %v1832
    %v1834 = vpop.f32.mrb[0].mxu0
    %v1835 = vadd.f32 0.0, %v1834
    %1836 = vdwg.mxu0
    %1837 = vmatprep.subr.mxu0 %v137
    %1838 = vmatpush1.msra.mxu0 %v136
    %1839 = vmatprep.subr.mxu0 %v141
    %1840 = vmatpush1.msra.mxu0 %v140
    %1841 = vmatprep.subr.mxu0 %v145
    %1842 = vmatpush1.msra.mxu0 %v144
    %1843 = vmatprep.subr.mxu0 %v149
    %1844 = vmatpush1.msra.mxu0 %v148
    %1845 = vmatprep.subr.mxu0 %v153
    %1846 = vmatpush1.msra.mxu0 %v152
    %1847 = vmatprep.subr.mxu0 %v157
    %1848 = vmatpush1.msra.mxu0 %v156
    %1849 = vmatprep.subr.mxu0 %v161
    %1850 = vmatpush1.msra.mxu0 %v160
    %1851 = vmatprep.subr.mxu0 %v165
    %1852 = vmatpush1.msra.mxu0 %v164
    %1853 = vmatprep.subr.mxu0 %v169
    %1854 = vmatpush1.msra.mxu0 %v168
    %1855 = vmatprep.subr.mxu0 %v173
    %1856 = vmatpush1.msra.mxu0 %v172
    %1857 = vmatprep.subr.mxu0 %v177
    %1858 = vmatpush1.msra.mxu0 %v176
    %1859 = vmatprep.subr.mxu0 %v181
    %1860 = vmatpush1.msra.mxu0 %v180
    %1861 = vmatprep.subr.mxu0 %v185
    %1862 = vmatpush1.msra.mxu0 %v184
    %1863 = vmatprep.subr.mxu0 %v189
    %1864 = vmatpush1.msra.mxu0 %v188
    %1865 = vmatprep.subr.mxu0 %v193
    %1866 = vmatpush1.msra.mxu0 %v192
    %1867 = vmatprep.subr.mxu0 %v197
    %1868 = vmatpush1.msra.mxu0 %v196
    %1869 = vmatprep.subr.mxu0 0.0
    %1870 = vmatpush1.msra.mxu0 0.0
    %1871 = vmatprep.subr.mxu0 0.0
    %1872 = vmatpush1.msra.mxu0 0.0
    %1873 = vmatprep.subr.mxu0 0.0
    %1874 = vmatpush1.msra.mxu0 0.0
    %1875 = vmatprep.subr.mxu0 0.0
    %1876 = vmatpush1.msra.mxu0 0.0
    %1877 = vmatprep.subr.mxu0 0.0
    %1878 = vmatpush1.msra.mxu0 0.0
    %1879 = vmatprep.subr.mxu0 0.0
    %1880 = vmatpush1.msra.mxu0 0.0
    %1881 = vmatprep.subr.mxu0 0.0
    %1882 = vmatpush1.msra.mxu0 0.0
    %1883 = vmatprep.subr.mxu0 0.0
    %1884 = vmatpush1.msra.mxu0 0.0
    %1885 = vmatprep.subr.mxu0 0.0
    %1886 = vmatpush1.msra.mxu0 0.0
    %1887 = vmatprep.subr.mxu0 0.0
    %1888 = vmatpush1.msra.mxu0 0.0
    %1889 = vmatprep.subr.mxu0 0.0
    %1890 = vmatpush1.msra.mxu0 0.0
    %1891 = vmatprep.subr.mxu0 0.0
    %1892 = vmatpush1.msra.mxu0 0.0
    %1893 = vmatprep.subr.mxu0 0.0
    %1894 = vmatpush1.msra.mxu0 0.0
    %1895 = vmatprep.subr.mxu0 0.0
    %1896 = vmatpush1.msra.mxu0 0.0
    %1897 = vmatprep.subr.mxu0 0.0
    %1898 = vmatpush1.msra.mxu0 0.0
    %1899 = vmatprep.subr.mxu0 0.0
    %1900 = vmatpush1.msra.mxu0 0.0
    %1901 = vmatprep.mubr.f32.mxu0 0.0
    %1902 = vmatmul.mubr.f32.gmra.mrb[0].mxu0 %v1758
    %v1903 = vpop.f32.mrb[0].mxu0
    %v1904 = vadd.f32 0.0, %v1903
    %v1905 = vpop.f32.mrb[0].mxu0
    %v1906 = vadd.f32 0.0, %v1905
    %1907 = vdwg.mxu0
    %v1908 = vadd.f32 %v1762, %v1833
    %v1909 = vadd.f32 %v1763, %v1835
    %v1910 = vadd.f32 %v1764, %v1904
    %v1911 = vadd.f32 %v1765, %v1906
    %v1912 = vxor.u32 %v1908, 2147483648
    %v1913 = vxor.u32 %v1909, 2147483648
    %v1914 = vxor.u32 %v1910, 2147483648
    %v1915 = vmul.f32 %v1912, 1.442695
    %v1916 = vpow.pop %v1915
    %v1917 = vmul.f32 %v1913, 1.442695
    %v1918 = vpow.pop %v1917
    %v1919 = vmul.f32 %v1914, 1.442695
    %v1920 = vpow.pop %v1919
    %v1921 = vadd.f32 %v1916, 1.0
    %v1922 = vadd.f32 %v1918, 1.0
    %v1923 = vadd.f32 %v1920, 1.0
    %v1924 = vrcp.pop %v1921
    %v1925 = vmul.f32 1.0, %v1924
    %v1926 = vrcp.pop %v1922
    %v1927 = vmul.f32 1.0, %v1926
    %v1928 = vrcp.pop %v1923
    %v1929 = vmul.f32 1.0, %v1928
    %v1930 = vtanh.pop %v1911
    %v1931 = vmul.f32 %v1927, %v1756
    %v1932 = vmul.f32 %v1925, %v1930
    %v1933 = vadd.f32 %v1931, %v1932
    %v1934 = vtanh.pop %v1933
    %v1935 = vmul.f32 %v1929, %v1934
    %s1936 = scalar_lea.vmem [#allocation2], 56
    %1937 = vst [vmem:[%s1936] sm:$0xff] %v1935
    %1938 = vst [vmem:[#allocation17] sm:$0xff] %v1935
    %1939 = vst [vmem:[#allocation19] sm:$0xff] %v1933
    %v1940 = vld [vmem:[#allocation10] sm:$0xff]
    %v1941 = vld [vmem:[#allocation10 + $0x8] sm:$0xff]
    %v1942 = vld [vmem:[#allocation10 + $0x10] sm:$0xff]
    %v1943 = vld [vmem:[#allocation10 + $0x18] sm:$0xff]
    %v1944 = vld [vmem:[#allocation10 + $0x20] sm:$0xff]
    %v1945 = vld [vmem:[#allocation10 + $0x28] sm:$0xff]
    %v1946 = vld [vmem:[#allocation10 + $0x30] sm:$0xff]
    %v1947 = vld [vmem:[#allocation10 + $0x38] sm:$0xff]
    %v1948 = vld [vmem:[#allocation10 + $0x40] sm:$0xff]
    %v1949 = vld [vmem:[#allocation10 + $0x48] sm:$0xff]
    %v1950 = vld [vmem:[#allocation10 + $0x50] sm:$0xff]
    %v1951 = vld [vmem:[#allocation10 + $0x58] sm:$0xff]
    %v1952 = vld [vmem:[#allocation10 + $0x60] sm:$0xff]
    %v1953 = vld [vmem:[#allocation10 + $0x68] sm:$0xff]
    %v1954 = vld [vmem:[#allocation10 + $0x70] sm:$0xff]
    %v1955 = vld [vmem:[#allocation10 + $0x78] sm:$0xff]
    %v1956 = vld [vmem:[#allocation10 + $0x80] sm:$0xff]
    %v1957 = vld [vmem:[#allocation10 + $0x88] sm:$0xff]
    %v1958 = vld [vmem:[#allocation10 + $0x90] sm:$0xff]
    %v1959 = vld [vmem:[#allocation10 + $0x98] sm:$0xff]
    %v1960 = vld [vmem:[#allocation10 + $0xa0] sm:$0xff]
    %v1961 = vld [vmem:[#allocation10 + $0xa8] sm:$0xff]
    %v1962 = vld [vmem:[#allocation10 + $0xb0] sm:$0xff]
    %v1963 = vld [vmem:[#allocation10 + $0xb8] sm:$0xff]
    %v1964 = vld [vmem:[#allocation10 + $0xc0] sm:$0xff]
    %v1965 = vld [vmem:[#allocation10 + $0xc8] sm:$0xff]
    %v1966 = vld [vmem:[#allocation10 + $0xd0] sm:$0xff]
    %v1967 = vld [vmem:[#allocation10 + $0xd8] sm:$0xff]
    %v1968 = vld [vmem:[#allocation10 + $0xe0] sm:$0xff]
    %v1969 = vld [vmem:[#allocation10 + $0xe8] sm:$0xff]
    %v1970 = vld [vmem:[#allocation10 + $0xf0] sm:$0xff]
    %v1971 = vld [vmem:[#allocation10 + $0xf8] sm:$0xff]
    %v1972 = vld [vmem:[#allocation10 + $0x100] sm:$0xff]
    %v1973 = vld [vmem:[#allocation10 + $0x108] sm:$0xff]
    %v1974 = vld [vmem:[#allocation10 + $0x110] sm:$0xff]
    %v1975 = vld [vmem:[#allocation10 + $0x118] sm:$0xff]
    %v1976 = vld [vmem:[#allocation10 + $0x120] sm:$0xff]
    %v1977 = vld [vmem:[#allocation10 + $0x128] sm:$0xff]
    %v1978 = vld [vmem:[#allocation10 + $0x130] sm:$0xff]
    %v1979 = vld [vmem:[#allocation10 + $0x138] sm:$0xff]
    %v1980 = vld [vmem:[#allocation10 + $0x140] sm:$0xff]
    %v1981 = vld [vmem:[#allocation10 + $0x148] sm:$0xff]
    %v1982 = vld [vmem:[#allocation10 + $0x150] sm:$0xff]
    %v1983 = vld [vmem:[#allocation10 + $0x158] sm:$0xff]
    %v1984 = vld [vmem:[#allocation10 + $0x160] sm:$0xff]
    %v1985 = vld [vmem:[#allocation10 + $0x168] sm:$0xff]
    %v1986 = vld [vmem:[#allocation10 + $0x170] sm:$0xff]
    %v1987 = vld [vmem:[#allocation10 + $0x178] sm:$0xff]
    %v1988 = vld [vmem:[#allocation10 + $0x180] sm:$0xff]
    %v1989 = vld [vmem:[#allocation10 + $0x188] sm:$0xff]
    %v1990 = vld [vmem:[#allocation10 + $0x190] sm:$0xff]
    %v1991 = vld [vmem:[#allocation10 + $0x198] sm:$0xff]
    %v1992 = vld [vmem:[#allocation10 + $0x1a0] sm:$0xff]
    %v1993 = vld [vmem:[#allocation10 + $0x1a8] sm:$0xff]
    %v1994 = vld [vmem:[#allocation10 + $0x1b0] sm:$0xff]
    %v1995 = vld [vmem:[#allocation10 + $0x1b8] sm:$0xff]
    %v1996 = vld [vmem:[#allocation10 + $0x1c0] sm:$0xff]
    %v1997 = vld [vmem:[#allocation10 + $0x1c8] sm:$0xff]
    %v1998 = vld [vmem:[#allocation10 + $0x1d0] sm:$0xff]
    %v1999 = vld [vmem:[#allocation10 + $0x1d8] sm:$0xff]
    %v2000 = vld [vmem:[#allocation10 + $0x1e0] sm:$0xff]
    %v2001 = vld [vmem:[#allocation10 + $0x1e8] sm:$0xff]
    %v2002 = vld [vmem:[#allocation10 + $0x1f0] sm:$0xff]
    %v2003 = vld [vmem:[#allocation10 + $0x1f8] sm:$0xff]
    %v2004 = vld [vmem:[#allocation12] sm:$0xff]
    %v2005 = vld [vmem:[#allocation12 + $0x8] sm:$0xff]
    %v2006 = vld [vmem:[#allocation12 + $0x10] sm:$0xff]
    %v2007 = vld [vmem:[#allocation12 + $0x18] sm:$0xff]
    %v2008 = vld [vmem:[#allocation12 + $0x20] sm:$0xff]
    %v2009 = vld [vmem:[#allocation12 + $0x28] sm:$0xff]
    %v2010 = vld [vmem:[#allocation12 + $0x30] sm:$0xff]
    %v2011 = vld [vmem:[#allocation12 + $0x38] sm:$0xff]
    %v2012 = vld [vmem:[#allocation12 + $0x40] sm:$0xff]
    %v2013 = vld [vmem:[#allocation12 + $0x48] sm:$0xff]
    %v2014 = vld [vmem:[#allocation12 + $0x50] sm:$0xff]
    %v2015 = vld [vmem:[#allocation12 + $0x58] sm:$0xff]
    %v2016 = vld [vmem:[#allocation12 + $0x60] sm:$0xff]
    %v2017 = vld [vmem:[#allocation12 + $0x68] sm:$0xff]
    %v2018 = vld [vmem:[#allocation12 + $0x70] sm:$0xff]
    %v2019 = vld [vmem:[#allocation12 + $0x78] sm:$0xff]
    %v2020 = vld [vmem:[#allocation12 + $0x80] sm:$0xff]
    %v2021 = vld [vmem:[#allocation12 + $0x88] sm:$0xff]
    %v2022 = vld [vmem:[#allocation12 + $0x90] sm:$0xff]
    %v2023 = vld [vmem:[#allocation12 + $0x98] sm:$0xff]
    %v2024 = vld [vmem:[#allocation12 + $0xa0] sm:$0xff]
    %v2025 = vld [vmem:[#allocation12 + $0xa8] sm:$0xff]
    %v2026 = vld [vmem:[#allocation12 + $0xb0] sm:$0xff]
    %v2027 = vld [vmem:[#allocation12 + $0xb8] sm:$0xff]
    %v2028 = vld [vmem:[#allocation12 + $0xc0] sm:$0xff]
    %v2029 = vld [vmem:[#allocation12 + $0xc8] sm:$0xff]
    %v2030 = vld [vmem:[#allocation12 + $0xd0] sm:$0xff]
    %v2031 = vld [vmem:[#allocation12 + $0xd8] sm:$0xff]
    %v2032 = vld [vmem:[#allocation12 + $0xe0] sm:$0xff]
    %v2033 = vld [vmem:[#allocation12 + $0xe8] sm:$0xff]
    %v2034 = vld [vmem:[#allocation12 + $0xf0] sm:$0xff]
    %v2035 = vld [vmem:[#allocation12 + $0xf8] sm:$0xff]
    %v2036 = vld [vmem:[#allocation12 + $0x100] sm:$0xff]
    %v2037 = vld [vmem:[#allocation12 + $0x108] sm:$0xff]
    %v2038 = vld [vmem:[#allocation12 + $0x110] sm:$0xff]
    %v2039 = vld [vmem:[#allocation12 + $0x118] sm:$0xff]
    %v2040 = vld [vmem:[#allocation12 + $0x120] sm:$0xff]
    %v2041 = vld [vmem:[#allocation12 + $0x128] sm:$0xff]
    %v2042 = vld [vmem:[#allocation12 + $0x130] sm:$0xff]
    %v2043 = vld [vmem:[#allocation12 + $0x138] sm:$0xff]
    %v2044 = vld [vmem:[#allocation12 + $0x140] sm:$0xff]
    %v2045 = vld [vmem:[#allocation12 + $0x148] sm:$0xff]
    %v2046 = vld [vmem:[#allocation12 + $0x150] sm:$0xff]
    %v2047 = vld [vmem:[#allocation12 + $0x158] sm:$0xff]
    %v2048 = vld [vmem:[#allocation12 + $0x160] sm:$0xff]
    %v2049 = vld [vmem:[#allocation12 + $0x168] sm:$0xff]
    %v2050 = vld [vmem:[#allocation12 + $0x170] sm:$0xff]
    %v2051 = vld [vmem:[#allocation12 + $0x178] sm:$0xff]
    %v2052 = vld [vmem:[#allocation12 + $0x180] sm:$0xff]
    %v2053 = vld [vmem:[#allocation12 + $0x188] sm:$0xff]
    %v2054 = vld [vmem:[#allocation12 + $0x190] sm:$0xff]
    %v2055 = vld [vmem:[#allocation12 + $0x198] sm:$0xff]
    %v2056 = vld [vmem:[#allocation12 + $0x1a0] sm:$0xff]
    %v2057 = vld [vmem:[#allocation12 + $0x1a8] sm:$0xff]
    %v2058 = vld [vmem:[#allocation12 + $0x1b0] sm:$0xff]
    %v2059 = vld [vmem:[#allocation12 + $0x1b8] sm:$0xff]
    %v2060 = vld [vmem:[#allocation12 + $0x1c0] sm:$0xff]
    %v2061 = vld [vmem:[#allocation12 + $0x1c8] sm:$0xff]
    %v2062 = vld [vmem:[#allocation12 + $0x1d0] sm:$0xff]
    %v2063 = vld [vmem:[#allocation12 + $0x1d8] sm:$0xff]
    %v2064 = vld [vmem:[#allocation12 + $0x1e0] sm:$0xff]
    %v2065 = vld [vmem:[#allocation12 + $0x1e8] sm:$0xff]
    %v2066 = vld [vmem:[#allocation12 + $0x1f0] sm:$0xff]
    %v2067 = vld [vmem:[#allocation12 + $0x1f8] sm:$0xff]
    %v2068 = vld [vmem:[#allocation13] sm:$0xf]
    %v2069 = vld [vmem:[#allocation2] sm:$0xff]
    %v2070 = vld [vmem:[#allocation2 + $0x8] sm:$0xff]
    %v2071 = vld [vmem:[#allocation2 + $0x10] sm:$0xff]
    %v2072 = vld [vmem:[#allocation2 + $0x18] sm:$0xff]
    %v2073 = vld [vmem:[#allocation2 + $0x20] sm:$0xff]
    %v2074 = vld [vmem:[#allocation2 + $0x28] sm:$0xff]
    %v2075 = vld [vmem:[#allocation2 + $0x30] sm:$0xff]
    %v2076 = vld [vmem:[#allocation2 + $0x38] sm:$0xff]
    %v2078 = vlaneseq
    %v2079 = vshrl.u32 %v2078, 7
    %v2080 = vsub.s32 0, %v2079
    %v2081 = vrot.slane %v2068, %v2080
    %v2082 = vlaneseq
    %v2083 = vshrl.u32 %v2082, 7
    %v2084 = vsub.s32 1, %v2083
    %v2085 = vrot.slane %v2068, %v2084
    %v2086 = vlaneseq
    %v2087 = vshrl.u32 %v2086, 7
    %v2088 = vsub.s32 2, %v2087
    %v2089 = vrot.slane %v2068, %v2088
    %v2090 = vlaneseq
    %v2091 = vshrl.u32 %v2090, 7
    %v2092 = vsub.s32 3, %v2091
    %v2093 = vrot.slane %v2068, %v2092
    %2098 = vmatprep.subr.mxu0 %v1941
    %2099 = vmatpush1.msra.mxu0 %v1940
    %2100 = vmatprep.subr.mxu0 %v1945
    %2101 = vmatpush1.msra.mxu0 %v1944
    %2102 = vmatprep.subr.mxu0 %v1949
    %2103 = vmatpush1.msra.mxu0 %v1948
    %2104 = vmatprep.subr.mxu0 %v1953
    %2105 = vmatpush1.msra.mxu0 %v1952
    %2106 = vmatprep.subr.mxu0 %v1957
    %2107 = vmatpush1.msra.mxu0 %v1956
    %2108 = vmatprep.subr.mxu0 %v1961
    %2109 = vmatpush1.msra.mxu0 %v1960
    %2110 = vmatprep.subr.mxu0 %v1965
    %2111 = vmatpush1.msra.mxu0 %v1964
    %2112 = vmatprep.subr.mxu0 %v1969
    %2113 = vmatpush1.msra.mxu0 %v1968
    %2114 = vmatprep.subr.mxu0 %v1973
    %2115 = vmatpush1.msra.mxu0 %v1972
    %2116 = vmatprep.subr.mxu0 %v1977
    %2117 = vmatpush1.msra.mxu0 %v1976
    %2118 = vmatprep.subr.mxu0 %v1981
    %2119 = vmatpush1.msra.mxu0 %v1980
    %2120 = vmatprep.subr.mxu0 %v1985
    %2121 = vmatpush1.msra.mxu0 %v1984
    %2122 = vmatprep.subr.mxu0 %v1989
    %2123 = vmatpush1.msra.mxu0 %v1988
    %2124 = vmatprep.subr.mxu0 %v1993
    %2125 = vmatpush1.msra.mxu0 %v1992
    %2126 = vmatprep.subr.mxu0 %v1997
    %2127 = vmatpush1.msra.mxu0 %v1996
    %2128 = vmatprep.subr.mxu0 %v2001
    %2129 = vmatpush1.msra.mxu0 %v2000
    %2130 = vmatprep.subr.mxu0 0.0
    %2131 = vmatpush1.msra.mxu0 0.0
    %2132 = vmatprep.subr.mxu0 0.0
    %2133 = vmatpush1.msra.mxu0 0.0
    %2134 = vmatprep.subr.mxu0 0.0
    %2135 = vmatpush1.msra.mxu0 0.0
    %2136 = vmatprep.subr.mxu0 0.0
    %2137 = vmatpush1.msra.mxu0 0.0
    %2138 = vmatprep.subr.mxu0 0.0
    %2139 = vmatpush1.msra.mxu0 0.0
    %2140 = vmatprep.subr.mxu0 0.0
    %2141 = vmatpush1.msra.mxu0 0.0
    %2142 = vmatprep.subr.mxu0 0.0
    %2143 = vmatpush1.msra.mxu0 0.0
    %2144 = vmatprep.subr.mxu0 0.0
    %2145 = vmatpush1.msra.mxu0 0.0
    %2146 = vmatprep.subr.mxu0 0.0
    %2147 = vmatpush1.msra.mxu0 0.0
    %2148 = vmatprep.subr.mxu0 0.0
    %2149 = vmatpush1.msra.mxu0 0.0
    %2150 = vmatprep.subr.mxu0 0.0
    %2151 = vmatpush1.msra.mxu0 0.0
    %2152 = vmatprep.subr.mxu0 0.0
    %2153 = vmatpush1.msra.mxu0 0.0
    %2154 = vmatprep.subr.mxu0 0.0
    %2155 = vmatpush1.msra.mxu0 0.0
    %2156 = vmatprep.subr.mxu0 0.0
    %2157 = vmatpush1.msra.mxu0 0.0
    %2158 = vmatprep.subr.mxu0 0.0
    %2159 = vmatpush1.msra.mxu0 0.0
    %2160 = vmatprep.subr.mxu0 0.0
    %2161 = vmatpush1.msra.mxu0 0.0
    %2162 = vmatprep.mubr.f32.mxu0 0.0
    %2163 = vmatmul.mubr.f32.gmra.mrb[0].mxu0 %v2069
    %v2164 = vpop.f32.mrb[0].mxu0
    %v2165 = vadd.f32 %v2081, %v2164
    %v2166 = vpop.f32.mrb[0].mxu0
    %v2167 = vadd.f32 %v2085, %v2166
    %2168 = vmatprep.mubr.f32.mxu0 0.0
    %2169 = vmatmul.mubr.f32.gmra.mrb[0].mxu0 %v2070
    %v2170 = vpop.f32.mrb[0].mxu0
    %v2171 = vadd.f32 %v2081, %v2170
    %v2172 = vpop.f32.mrb[0].mxu0
    %v2173 = vadd.f32 %v2085, %v2172
    %2174 = vmatprep.mubr.f32.mxu0 0.0
    %2175 = vmatmul.mubr.f32.gmra.mrb[0].mxu0 %v2071
    %v2176 = vpop.f32.mrb[0].mxu0
    %v2177 = vadd.f32 %v2081, %v2176
    %v2178 = vpop.f32.mrb[0].mxu0
    %v2179 = vadd.f32 %v2085, %v2178
    %2180 = vmatprep.mubr.f32.mxu0 0.0
    %2181 = vmatmul.mubr.f32.gmra.mrb[0].mxu0 %v2072
    %v2182 = vpop.f32.mrb[0].mxu0
    %v2183 = vadd.f32 %v2081, %v2182
    %v2184 = vpop.f32.mrb[0].mxu0
    %v2185 = vadd.f32 %v2085, %v2184
    %2186 = vmatprep.mubr.f32.mxu0 0.0
    %2187 = vmatmul.mubr.f32.gmra.mrb[0].mxu0 %v2073
    %v2188 = vpop.f32.mrb[0].mxu0
    %v2189 = vadd.f32 %v2081, %v2188
    %v2190 = vpop.f32.mrb[0].mxu0
    %v2191 = vadd.f32 %v2085, %v2190
    %2192 = vmatprep.mubr.f32.mxu0 0.0
    %2193 = vmatmul.mubr.f32.gmra.mrb[0].mxu0 %v2074
    %v2194 = vpop.f32.mrb[0].mxu0
    %v2195 = vadd.f32 %v2081, %v2194
    %v2196 = vpop.f32.mrb[0].mxu0
    %v2197 = vadd.f32 %v2085, %v2196
    %2198 = vmatprep.mubr.f32.mxu0 0.0
    %2199 = vmatmul.mubr.f32.gmra.mrb[0].mxu0 %v2075
    %v2200 = vpop.f32.mrb[0].mxu0
    %v2201 = vadd.f32 %v2081, %v2200
    %v2202 = vpop.f32.mrb[0].mxu0
    %v2203 = vadd.f32 %v2085, %v2202
    %2204 = vmatprep.mubr.f32.mxu0 0.0
    %2205 = vmatmul.mubr.f32.gmra.mrb[0].mxu0 %v2076
    %v2206 = vpop.f32.mrb[0].mxu0
    %v2207 = vadd.f32 %v2081, %v2206
    %v2208 = vpop.f32.mrb[0].mxu0
    %v2209 = vadd.f32 %v2085, %v2208
    %2210 = vdwg.mxu0
    %2211 = vmatprep.subr.mxu0 %v1943
    %2212 = vmatpush1.msra.mxu0 %v1942
    %2213 = vmatprep.subr.mxu0 %v1947
    %2214 = vmatpush1.msra.mxu0 %v1946
    %2215 = vmatprep.subr.mxu0 %v1951
    %2216 = vmatpush1.msra.mxu0 %v1950
    %2217 = vmatprep.subr.mxu0 %v1955
    %2218 = vmatpush1.msra.mxu0 %v1954
    %2219 = vmatprep.subr.mxu0 %v1959
    %2220 = vmatpush1.msra.mxu0 %v1958
    %2221 = vmatprep.subr.mxu0 %v1963
    %2222 = vmatpush1.msra.mxu0 %v1962
    %2223 = vmatprep.subr.mxu0 %v1967
    %2224 = vmatpush1.msra.mxu0 %v1966
    %2225 = vmatprep.subr.mxu0 %v1971
    %2226 = vmatpush1.msra.mxu0 %v1970
    %2227 = vmatprep.subr.mxu0 %v1975
    %2228 = vmatpush1.msra.mxu0 %v1974
    %2229 = vmatprep.subr.mxu0 %v1979
    %2230 = vmatpush1.msra.mxu0 %v1978
    %2231 = vmatprep.subr.mxu0 %v1983
    %2232 = vmatpush1.msra.mxu0 %v1982
    %2233 = vmatprep.subr.mxu0 %v1987
    %2234 = vmatpush1.msra.mxu0 %v1986
    %2235 = vmatprep.subr.mxu0 %v1991
    %2236 = vmatpush1.msra.mxu0 %v1990
    %2237 = vmatprep.subr.mxu0 %v1995
    %2238 = vmatpush1.msra.mxu0 %v1994
    %2239 = vmatprep.subr.mxu0 %v1999
    %2240 = vmatpush1.msra.mxu0 %v1998
    %2241 = vmatprep.subr.mxu0 %v2003
    %2242 = vmatpush1.msra.mxu0 %v2002
    %2243 = vmatprep.subr.mxu0 0.0
    %2244 = vmatpush1.msra.mxu0 0.0
    %2245 = vmatprep.subr.mxu0 0.0
    %2246 = vmatpush1.msra.mxu0 0.0
    %2247 = vmatprep.subr.mxu0 0.0
    %2248 = vmatpush1.msra.mxu0 0.0
    %2249 = vmatprep.subr.mxu0 0.0
    %2250 = vmatpush1.msra.mxu0 0.0
    %2251 = vmatprep.subr.mxu0 0.0
    %2252 = vmatpush1.msra.mxu0 0.0
    %2253 = vmatprep.subr.mxu0 0.0
    %2254 = vmatpush1.msra.mxu0 0.0
    %2255 = vmatprep.subr.mxu0 0.0
    %2256 = vmatpush1.msra.mxu0 0.0
    %2257 = vmatprep.subr.mxu0 0.0
    %2258 = vmatpush1.msra.mxu0 0.0
    %2259 = vmatprep.subr.mxu0 0.0
    %2260 = vmatpush1.msra.mxu0 0.0
    %2261 = vmatprep.subr.mxu0 0.0
    %2262 = vmatpush1.msra.mxu0 0.0
    %2263 = vmatprep.subr.mxu0 0.0
    %2264 = vmatpush1.msra.mxu0 0.0
    %2265 = vmatprep.subr.mxu0 0.0
    %2266 = vmatpush1.msra.mxu0 0.0
    %2267 = vmatprep.subr.mxu0 0.0
    %2268 = vmatpush1.msra.mxu0 0.0
    %2269 = vmatprep.subr.mxu0 0.0
    %2270 = vmatpush1.msra.mxu0 0.0
    %2271 = vmatprep.subr.mxu0 0.0
    %2272 = vmatpush1.msra.mxu0 0.0
    %2273 = vmatprep.subr.mxu0 0.0
    %2274 = vmatpush1.msra.mxu0 0.0
    %2275 = vmatprep.mubr.f32.mxu0 0.0
    %2276 = vmatmul.mubr.f32.gmra.mrb[0].mxu0 %v2069
    %v2277 = vpop.f32.mrb[0].mxu0
    %v2278 = vadd.f32 %v2089, %v2277
    %v2279 = vpop.f32.mrb[0].mxu0
    %v2280 = vadd.f32 %v2093, %v2279
    %2281 = vmatprep.mubr.f32.mxu0 0.0
    %2282 = vmatmul.mubr.f32.gmra.mrb[0].mxu0 %v2070
    %v2283 = vpop.f32.mrb[0].mxu0
    %v2284 = vadd.f32 %v2089, %v2283
    %v2285 = vpop.f32.mrb[0].mxu0
    %v2286 = vadd.f32 %v2093, %v2285
    %2287 = vmatprep.mubr.f32.mxu0 0.0
    %2288 = vmatmul.mubr.f32.gmra.mrb[0].mxu0 %v2071
    %v2289 = vpop.f32.mrb[0].mxu0
    %v2290 = vadd.f32 %v2089, %v2289
    %v2291 = vpop.f32.mrb[0].mxu0
    %v2292 = vadd.f32 %v2093, %v2291
    %2293 = vmatprep.mubr.f32.mxu0 0.0
    %2294 = vmatmul.mubr.f32.gmra.mrb[0].mxu0 %v2072
    %v2295 = vpop.f32.mrb[0].mxu0
    %v2296 = vadd.f32 %v2089, %v2295
    %v2297 = vpop.f32.mrb[0].mxu0
    %v2298 = vadd.f32 %v2093, %v2297
    %2299 = vmatprep.mubr.f32.mxu0 0.0
    %2300 = vmatmul.mubr.f32.gmra.mrb[0].mxu0 %v2073
    %v2301 = vpop.f32.mrb[0].mxu0
    %v2302 = vadd.f32 %v2089, %v2301
    %v2303 = vpop.f32.mrb[0].mxu0
    %v2304 = vadd.f32 %v2093, %v2303
    %2305 = vmatprep.mubr.f32.mxu0 0.0
    %2306 = vmatmul.mubr.f32.gmra.mrb[0].mxu0 %v2074
    %v2307 = vpop.f32.mrb[0].mxu0
    %v2308 = vadd.f32 %v2089, %v2307
    %v2309 = vpop.f32.mrb[0].mxu0
    %v2310 = vadd.f32 %v2093, %v2309
    %2311 = vmatprep.mubr.f32.mxu0 0.0
    %2312 = vmatmul.mubr.f32.gmra.mrb[0].mxu0 %v2075
    %v2313 = vpop.f32.mrb[0].mxu0
    %v2314 = vadd.f32 %v2089, %v2313
    %v2315 = vpop.f32.mrb[0].mxu0
    %v2316 = vadd.f32 %v2093, %v2315
    %2317 = vmatprep.mubr.f32.mxu0 0.0
    %2318 = vmatmul.mubr.f32.gmra.mrb[0].mxu0 %v2076
    %v2319 = vpop.f32.mrb[0].mxu0
    %v2320 = vadd.f32 %v2089, %v2319
    %v2321 = vpop.f32.mrb[0].mxu0
    %v2322 = vadd.f32 %v2093, %v2321
    %2323 = vdwg.mxu0
    %2324 = vst [vmem:[#allocation3] sm:$0xff] %v2165
    %2325 = vst [vmem:[#allocation3 + $0x8] sm:$0xff] %v2167
    %2326 = vst [vmem:[#allocation3 + $0x10] sm:$0xff] %v2278
    %2327 = vst [vmem:[#allocation3 + $0x18] sm:$0xff] %v2280
    %2328 = vst [vmem:[#allocation3 + $0x20] sm:$0xff] %v2171
    %2329 = vst [vmem:[#allocation3 + $0x28] sm:$0xff] %v2173
    %2330 = vst [vmem:[#allocation3 + $0x30] sm:$0xff] %v2284
    %2331 = vst [vmem:[#allocation3 + $0x38] sm:$0xff] %v2286
    %2332 = vst [vmem:[#allocation3 + $0x40] sm:$0xff] %v2177
    %2333 = vst [vmem:[#allocation3 + $0x48] sm:$0xff] %v2179
    %2334 = vst [vmem:[#allocation3 + $0x50] sm:$0xff] %v2290
    %2335 = vst [vmem:[#allocation3 + $0x58] sm:$0xff] %v2292
    %2336 = vst [vmem:[#allocation3 + $0x60] sm:$0xff] %v2183
    %2337 = vst [vmem:[#allocation3 + $0x68] sm:$0xff] %v2185
    %2338 = vst [vmem:[#allocation3 + $0x70] sm:$0xff] %v2296
    %2339 = vst [vmem:[#allocation3 + $0x78] sm:$0xff] %v2298
    %2340 = vst [vmem:[#allocation3 + $0x80] sm:$0xff] %v2189
    %2341 = vst [vmem:[#allocation3 + $0x88] sm:$0xff] %v2191
    %2342 = vst [vmem:[#allocation3 + $0x90] sm:$0xff] %v2302
    %2343 = vst [vmem:[#allocation3 + $0x98] sm:$0xff] %v2304
    %2344 = vst [vmem:[#allocation3 + $0xa0] sm:$0xff] %v2195
    %2345 = vst [vmem:[#allocation3 + $0xa8] sm:$0xff] %v2197
    %2346 = vst [vmem:[#allocation3 + $0xb0] sm:$0xff] %v2308
    %2347 = vst [vmem:[#allocation3 + $0xb8] sm:$0xff] %v2310
    %2348 = vst [vmem:[#allocation3 + $0xc0] sm:$0xff] %v2201
    %2349 = vst [vmem:[#allocation3 + $0xc8] sm:$0xff] %v2203
    %2350 = vst [vmem:[#allocation3 + $0xd0] sm:$0xff] %v2314
    %2351 = vst [vmem:[#allocation3 + $0xd8] sm:$0xff] %v2316
    %2352 = vst [vmem:[#allocation3 + $0xe0] sm:$0xff] %v2207
    %2353 = vst [vmem:[#allocation3 + $0xe8] sm:$0xff] %v2209
    %2354 = vst [vmem:[#allocation3 + $0xf0] sm:$0xff] %v2320
    %2355 = vst [vmem:[#allocation3 + $0xf8] sm:$0xff] %v2322
    %v2356 = vld [vmem:[#allocation3] sm:$0xff]
    %v2357 = vld [vmem:[#allocation3 + $0x8] sm:$0xff]
    %v2358 = vld [vmem:[#allocation3 + $0x10] sm:$0xff]
    %v2359 = vld [vmem:[#allocation3 + $0x18] sm:$0xff]
    %2360 = vmatprep.subr.mxu0 %v2005
    %2361 = vmatpush1.msra.mxu0 %v2004
    %2362 = vmatprep.subr.mxu0 %v2009
    %2363 = vmatpush1.msra.mxu0 %v2008
    %2364 = vmatprep.subr.mxu0 %v2013
    %2365 = vmatpush1.msra.mxu0 %v2012
    %2366 = vmatprep.subr.mxu0 %v2017
    %2367 = vmatpush1.msra.mxu0 %v2016
    %2368 = vmatprep.subr.mxu0 %v2021
    %2369 = vmatpush1.msra.mxu0 %v2020
    %2370 = vmatprep.subr.mxu0 %v2025
    %2371 = vmatpush1.msra.mxu0 %v2024
    %2372 = vmatprep.subr.mxu0 %v2029
    %2373 = vmatpush1.msra.mxu0 %v2028
    %2374 = vmatprep.subr.mxu0 %v2033
    %2375 = vmatpush1.msra.mxu0 %v2032
    %2376 = vmatprep.subr.mxu0 %v2037
    %2377 = vmatpush1.msra.mxu0 %v2036
    %2378 = vmatprep.subr.mxu0 %v2041
    %2379 = vmatpush1.msra.mxu0 %v2040
    %2380 = vmatprep.subr.mxu0 %v2045
    %2381 = vmatpush1.msra.mxu0 %v2044
    %2382 = vmatprep.subr.mxu0 %v2049
    %2383 = vmatpush1.msra.mxu0 %v2048
    %2384 = vmatprep.subr.mxu0 %v2053
    %2385 = vmatpush1.msra.mxu0 %v2052
    %2386 = vmatprep.subr.mxu0 %v2057
    %2387 = vmatpush1.msra.mxu0 %v2056
    %2388 = vmatprep.subr.mxu0 %v2061
    %2389 = vmatpush1.msra.mxu0 %v2060
    %2390 = vmatprep.subr.mxu0 %v2065
    %2391 = vmatpush1.msra.mxu0 %v2064
    %2392 = vmatprep.subr.mxu0 0.0
    %2393 = vmatpush1.msra.mxu0 0.0
    %2394 = vmatprep.subr.mxu0 0.0
    %2395 = vmatpush1.msra.mxu0 0.0
    %2396 = vmatprep.subr.mxu0 0.0
    %2397 = vmatpush1.msra.mxu0 0.0
    %2398 = vmatprep.subr.mxu0 0.0
    %2399 = vmatpush1.msra.mxu0 0.0
    %2400 = vmatprep.subr.mxu0 0.0
    %2401 = vmatpush1.msra.mxu0 0.0
    %2402 = vmatprep.subr.mxu0 0.0
    %2403 = vmatpush1.msra.mxu0 0.0
    %2404 = vmatprep.subr.mxu0 0.0
    %2405 = vmatpush1.msra.mxu0 0.0
    %2406 = vmatprep.subr.mxu0 0.0
    %2407 = vmatpush1.msra.mxu0 0.0
    %2408 = vmatprep.subr.mxu0 0.0
    %2409 = vmatpush1.msra.mxu0 0.0
    %2410 = vmatprep.subr.mxu0 0.0
    %2411 = vmatpush1.msra.mxu0 0.0
    %2412 = vmatprep.subr.mxu0 0.0
    %2413 = vmatpush1.msra.mxu0 0.0
    %2414 = vmatprep.subr.mxu0 0.0
    %2415 = vmatpush1.msra.mxu0 0.0
    %2416 = vmatprep.subr.mxu0 0.0
    %2417 = vmatpush1.msra.mxu0 0.0
    %2418 = vmatprep.subr.mxu0 0.0
    %2419 = vmatpush1.msra.mxu0 0.0
    %2420 = vmatprep.subr.mxu0 0.0
    %2421 = vmatpush1.msra.mxu0 0.0
    %2422 = vmatprep.subr.mxu0 0.0
    %2423 = vmatpush1.msra.mxu0 0.0
    %2424 = vmatprep.mubr.f32.mxu0 0.0
    %2425 = vmatmul.mubr.f32.gmra.mrb[0].mxu0 0.0
    %v2426 = vpop.f32.mrb[0].mxu0
    %v2427 = vadd.f32 0.0, %v2426
    %v2428 = vpop.f32.mrb[0].mxu0
    %v2429 = vadd.f32 0.0, %v2428
    %2430 = vdwg.mxu0
    %2431 = vmatprep.subr.mxu0 %v2007
    %2432 = vmatpush1.msra.mxu0 %v2006
    %2433 = vmatprep.subr.mxu0 %v2011
    %2434 = vmatpush1.msra.mxu0 %v2010
    %2435 = vmatprep.subr.mxu0 %v2015
    %2436 = vmatpush1.msra.mxu0 %v2014
    %2437 = vmatprep.subr.mxu0 %v2019
    %2438 = vmatpush1.msra.mxu0 %v2018
    %2439 = vmatprep.subr.mxu0 %v2023
    %2440 = vmatpush1.msra.mxu0 %v2022
    %2441 = vmatprep.subr.mxu0 %v2027
    %2442 = vmatpush1.msra.mxu0 %v2026
    %2443 = vmatprep.subr.mxu0 %v2031
    %2444 = vmatpush1.msra.mxu0 %v2030
    %2445 = vmatprep.subr.mxu0 %v2035
    %2446 = vmatpush1.msra.mxu0 %v2034
    %2447 = vmatprep.subr.mxu0 %v2039
    %2448 = vmatpush1.msra.mxu0 %v2038
    %2449 = vmatprep.subr.mxu0 %v2043
    %2450 = vmatpush1.msra.mxu0 %v2042
    %2451 = vmatprep.subr.mxu0 %v2047
    %2452 = vmatpush1.msra.mxu0 %v2046
    %2453 = vmatprep.subr.mxu0 %v2051
    %2454 = vmatpush1.msra.mxu0 %v2050
    %2455 = vmatprep.subr.mxu0 %v2055
    %2456 = vmatpush1.msra.mxu0 %v2054
    %2457 = vmatprep.subr.mxu0 %v2059
    %2458 = vmatpush1.msra.mxu0 %v2058
    %2459 = vmatprep.subr.mxu0 %v2063
    %2460 = vmatpush1.msra.mxu0 %v2062
    %2461 = vmatprep.subr.mxu0 %v2067
    %2462 = vmatpush1.msra.mxu0 %v2066
    %2463 = vmatprep.subr.mxu0 0.0
    %2464 = vmatpush1.msra.mxu0 0.0
    %2465 = vmatprep.subr.mxu0 0.0
    %2466 = vmatpush1.msra.mxu0 0.0
    %2467 = vmatprep.subr.mxu0 0.0
    %2468 = vmatpush1.msra.mxu0 0.0
    %2469 = vmatprep.subr.mxu0 0.0
    %2470 = vmatpush1.msra.mxu0 0.0
    %2471 = vmatprep.subr.mxu0 0.0
    %2472 = vmatpush1.msra.mxu0 0.0
    %2473 = vmatprep.subr.mxu0 0.0
    %2474 = vmatpush1.msra.mxu0 0.0
    %2475 = vmatprep.subr.mxu0 0.0
    %2476 = vmatpush1.msra.mxu0 0.0
    %2477 = vmatprep.subr.mxu0 0.0
    %2478 = vmatpush1.msra.mxu0 0.0
    %2479 = vmatprep.subr.mxu0 0.0
    %2480 = vmatpush1.msra.mxu0 0.0
    %2481 = vmatprep.subr.mxu0 0.0
    %2482 = vmatpush1.msra.mxu0 0.0
    %2483 = vmatprep.subr.mxu0 0.0
    %2484 = vmatpush1.msra.mxu0 0.0
    %2485 = vmatprep.subr.mxu0 0.0
    %2486 = vmatpush1.msra.mxu0 0.0
    %2487 = vmatprep.subr.mxu0 0.0
    %2488 = vmatpush1.msra.mxu0 0.0
    %2489 = vmatprep.subr.mxu0 0.0
    %2490 = vmatpush1.msra.mxu0 0.0
    %2491 = vmatprep.subr.mxu0 0.0
    %2492 = vmatpush1.msra.mxu0 0.0
    %2493 = vmatprep.subr.mxu0 0.0
    %2494 = vmatpush1.msra.mxu0 0.0
    %2495 = vmatprep.mubr.f32.mxu0 0.0
    %2496 = vmatmul.mubr.f32.gmra.mrb[0].mxu0 0.0
    %v2497 = vpop.f32.mrb[0].mxu0
    %v2498 = vadd.f32 0.0, %v2497
    %v2499 = vpop.f32.mrb[0].mxu0
    %v2500 = vadd.f32 0.0, %v2499
    %2501 = vdwg.mxu0
    %v2502 = vadd.f32 %v2356, %v2427
    %v2503 = vadd.f32 %v2357, %v2429
    %v2504 = vadd.f32 %v2358, %v2498
    %v2505 = vadd.f32 %v2359, %v2500
    %v2506 = vxor.u32 %v2502, 2147483648
    %v2507 = vxor.u32 %v2503, 2147483648
    %v2508 = vxor.u32 %v2504, 2147483648
    %v2509 = vmul.f32 %v2506, 1.442695
    %v2510 = vpow.pop %v2509
    %v2511 = vmul.f32 %v2507, 1.442695
    %v2512 = vpow.pop %v2511
    %v2513 = vmul.f32 %v2508, 1.442695
    %v2514 = vpow.pop %v2513
    %v2515 = vadd.f32 %v2510, 1.0
    %v2516 = vadd.f32 %v2512, 1.0
    %v2517 = vadd.f32 %v2514, 1.0
    %v2518 = vrcp.pop %v2515
    %v2519 = vmul.f32 1.0, %v2518
    %v2520 = vrcp.pop %v2516
    %v2521 = vmul.f32 1.0, %v2520
    %v2522 = vrcp.pop %v2517
    %v2523 = vmul.f32 1.0, %v2522
    %v2524 = vtanh.pop %v2505
    %v2525 = vmul.f32 %v2521, 0.0
    %v2526 = vmul.f32 %v2519, %v2524
    %v2527 = vadd.f32 %v2525, %v2526
    %v2528 = vtanh.pop %v2527
    %v2529 = vmul.f32 %v2523, %v2528
    %v2530 = vld [vmem:[%s699] sm:$0xff]
    %v2531 = vld [vmem:[%s699 + $0x8] sm:$0xff]
    %v2532 = vld [vmem:[%s699 + $0x10] sm:$0xff]
    %v2533 = vld [vmem:[%s699 + $0x18] sm:$0xff]
    %2534 = vmatprep.subr.mxu0 %v2005
    %2535 = vmatpush1.msra.mxu0 %v2004
    %2536 = vmatprep.subr.mxu0 %v2009
    %2537 = vmatpush1.msra.mxu0 %v2008
    %2538 = vmatprep.subr.mxu0 %v2013
    %2539 = vmatpush1.msra.mxu0 %v2012
    %2540 = vmatprep.subr.mxu0 %v2017
    %2541 = vmatpush1.msra.mxu0 %v2016
    %2542 = vmatprep.subr.mxu0 %v2021
    %2543 = vmatpush1.msra.mxu0 %v2020
    %2544 = vmatprep.subr.mxu0 %v2025
    %2545 = vmatpush1.msra.mxu0 %v2024
    %2546 = vmatprep.subr.mxu0 %v2029
    %2547 = vmatpush1.msra.mxu0 %v2028
    %2548 = vmatprep.subr.mxu0 %v2033
    %2549 = vmatpush1.msra.mxu0 %v2032
    %2550 = vmatprep.subr.mxu0 %v2037
    %2551 = vmatpush1.msra.mxu0 %v2036
    %2552 = vmatprep.subr.mxu0 %v2041
    %2553 = vmatpush1.msra.mxu0 %v2040
    %2554 = vmatprep.subr.mxu0 %v2045
    %2555 = vmatpush1.msra.mxu0 %v2044
    %2556 = vmatprep.subr.mxu0 %v2049
    %2557 = vmatpush1.msra.mxu0 %v2048
    %2558 = vmatprep.subr.mxu0 %v2053
    %2559 = vmatpush1.msra.mxu0 %v2052
    %2560 = vmatprep.subr.mxu0 %v2057
    %2561 = vmatpush1.msra.mxu0 %v2056
    %2562 = vmatprep.subr.mxu0 %v2061
    %2563 = vmatpush1.msra.mxu0 %v2060
    %2564 = vmatprep.subr.mxu0 %v2065
    %2565 = vmatpush1.msra.mxu0 %v2064
    %2566 = vmatprep.subr.mxu0 0.0
    %2567 = vmatpush1.msra.mxu0 0.0
    %2568 = vmatprep.subr.mxu0 0.0
    %2569 = vmatpush1.msra.mxu0 0.0
    %2570 = vmatprep.subr.mxu0 0.0
    %2571 = vmatpush1.msra.mxu0 0.0
    %2572 = vmatprep.subr.mxu0 0.0
    %2573 = vmatpush1.msra.mxu0 0.0
    %2574 = vmatprep.subr.mxu0 0.0
    %2575 = vmatpush1.msra.mxu0 0.0
    %2576 = vmatprep.subr.mxu0 0.0
    %2577 = vmatpush1.msra.mxu0 0.0
    %2578 = vmatprep.subr.mxu0 0.0
    %2579 = vmatpush1.msra.mxu0 0.0
    %2580 = vmatprep.subr.mxu0 0.0
    %2581 = vmatpush1.msra.mxu0 0.0
    %2582 = vmatprep.subr.mxu0 0.0
    %2583 = vmatpush1.msra.mxu0 0.0
    %2584 = vmatprep.subr.mxu0 0.0
    %2585 = vmatpush1.msra.mxu0 0.0
    %2586 = vmatprep.subr.mxu0 0.0
    %2587 = vmatpush1.msra.mxu0 0.0
    %2588 = vmatprep.subr.mxu0 0.0
    %2589 = vmatpush1.msra.mxu0 0.0
    %2590 = vmatprep.subr.mxu0 0.0
    %2591 = vmatpush1.msra.mxu0 0.0
    %2592 = vmatprep.subr.mxu0 0.0
    %2593 = vmatpush1.msra.mxu0 0.0
    %2594 = vmatprep.subr.mxu0 0.0
    %2595 = vmatpush1.msra.mxu0 0.0
    %2596 = vmatprep.subr.mxu0 0.0
    %2597 = vmatpush1.msra.mxu0 0.0
    %2598 = vmatprep.mubr.f32.mxu0 0.0
    %2599 = vmatmul.mubr.f32.gmra.mrb[0].mxu0 %v2529
    %v2600 = vpop.f32.mrb[0].mxu0
    %v2601 = vadd.f32 0.0, %v2600
    %v2602 = vpop.f32.mrb[0].mxu0
    %v2603 = vadd.f32 0.0, %v2602
    %2604 = vdwg.mxu0
    %2605 = vmatprep.subr.mxu0 %v2007
    %2606 = vmatpush1.msra.mxu0 %v2006
    %2607 = vmatprep.subr.mxu0 %v2011
    %2608 = vmatpush1.msra.mxu0 %v2010
    %2609 = vmatprep.subr.mxu0 %v2015
    %2610 = vmatpush1.msra.mxu0 %v2014
    %2611 = vmatprep.subr.mxu0 %v2019
    %2612 = vmatpush1.msra.mxu0 %v2018
    %2613 = vmatprep.subr.mxu0 %v2023
    %2614 = vmatpush1.msra.mxu0 %v2022
    %2615 = vmatprep.subr.mxu0 %v2027
    %2616 = vmatpush1.msra.mxu0 %v2026
    %2617 = vmatprep.subr.mxu0 %v2031
    %2618 = vmatpush1.msra.mxu0 %v2030
    %2619 = vmatprep.subr.mxu0 %v2035
    %2620 = vmatpush1.msra.mxu0 %v2034
    %2621 = vmatprep.subr.mxu0 %v2039
    %2622 = vmatpush1.msra.mxu0 %v2038
    %2623 = vmatprep.subr.mxu0 %v2043
    %2624 = vmatpush1.msra.mxu0 %v2042
    %2625 = vmatprep.subr.mxu0 %v2047
    %2626 = vmatpush1.msra.mxu0 %v2046
    %2627 = vmatprep.subr.mxu0 %v2051
    %2628 = vmatpush1.msra.mxu0 %v2050
    %2629 = vmatprep.subr.mxu0 %v2055
    %2630 = vmatpush1.msra.mxu0 %v2054
    %2631 = vmatprep.subr.mxu0 %v2059
    %2632 = vmatpush1.msra.mxu0 %v2058
    %2633 = vmatprep.subr.mxu0 %v2063
    %2634 = vmatpush1.msra.mxu0 %v2062
    %2635 = vmatprep.subr.mxu0 %v2067
    %2636 = vmatpush1.msra.mxu0 %v2066
    %2637 = vmatprep.subr.mxu0 0.0
    %2638 = vmatpush1.msra.mxu0 0.0
    %2639 = vmatprep.subr.mxu0 0.0
    %2640 = vmatpush1.msra.mxu0 0.0
    %2641 = vmatprep.subr.mxu0 0.0
    %2642 = vmatpush1.msra.mxu0 0.0
    %2643 = vmatprep.subr.mxu0 0.0
    %2644 = vmatpush1.msra.mxu0 0.0
    %2645 = vmatprep.subr.mxu0 0.0
    %2646 = vmatpush1.msra.mxu0 0.0
    %2647 = vmatprep.subr.mxu0 0.0
    %2648 = vmatpush1.msra.mxu0 0.0
    %2649 = vmatprep.subr.mxu0 0.0
    %2650 = vmatpush1.msra.mxu0 0.0
    %2651 = vmatprep.subr.mxu0 0.0
    %2652 = vmatpush1.msra.mxu0 0.0
    %2653 = vmatprep.subr.mxu0 0.0
    %2654 = vmatpush1.msra.mxu0 0.0
    %2655 = vmatprep.subr.mxu0 0.0
    %2656 = vmatpush1.msra.mxu0 0.0
    %2657 = vmatprep.subr.mxu0 0.0
    %2658 = vmatpush1.msra.mxu0 0.0
    %2659 = vmatprep.subr.mxu0 0.0
    %2660 = vmatpush1.msra.mxu0 0.0
    %2661 = vmatprep.subr.mxu0 0.0
    %2662 = vmatpush1.msra.mxu0 0.0
    %2663 = vmatprep.subr.mxu0 0.0
    %2664 = vmatpush1.msra.mxu0 0.0
    %2665 = vmatprep.subr.mxu0 0.0
    %2666 = vmatpush1.msra.mxu0 0.0
    %2667 = vmatprep.subr.mxu0 0.0
    %2668 = vmatpush1.msra.mxu0 0.0
    %2669 = vmatprep.mubr.f32.mxu0 0.0
    %2670 = vmatmul.mubr.f32.gmra.mrb[0].mxu0 %v2529
    %v2671 = vpop.f32.mrb[0].mxu0
    %v2672 = vadd.f32 0.0, %v2671
    %v2673 = vpop.f32.mrb[0].mxu0
    %v2674 = vadd.f32 0.0, %v2673
    %2675 = vdwg.mxu0
    %v2676 = vadd.f32 %v2530, %v2601
    %v2677 = vadd.f32 %v2531, %v2603
    %v2678 = vadd.f32 %v2532, %v2672
    %v2679 = vadd.f32 %v2533, %v2674
    %v2680 = vxor.u32 %v2676, 2147483648
    %v2681 = vxor.u32 %v2677, 2147483648
    %v2682 = vxor.u32 %v2678, 2147483648
    %v2683 = vmul.f32 %v2680, 1.442695
    %v2684 = vpow.pop %v2683
    %v2685 = vmul.f32 %v2681, 1.442695
    %v2686 = vpow.pop %v2685
    %v2687 = vmul.f32 %v2682, 1.442695
    %v2688 = vpow.pop %v2687
    %v2689 = vadd.f32 %v2684, 1.0
    %v2690 = vadd.f32 %v2686, 1.0
    %v2691 = vadd.f32 %v2688, 1.0
    %v2692 = vrcp.pop %v2689
    %v2693 = vmul.f32 1.0, %v2692
    %v2694 = vrcp.pop %v2690
    %v2695 = vmul.f32 1.0, %v2694
    %v2696 = vrcp.pop %v2691
    %v2697 = vmul.f32 1.0, %v2696
    %v2698 = vtanh.pop %v2679
    %v2699 = vmul.f32 %v2695, %v2527
    %v2700 = vmul.f32 %v2693, %v2698
    %v2701 = vadd.f32 %v2699, %v2700
    %v2702 = vtanh.pop %v2701
    %v2703 = vmul.f32 %v2697, %v2702
    %v2704 = vld [vmem:[%s876] sm:$0xff]
    %v2705 = vld [vmem:[%s876 + $0x8] sm:$0xff]
    %v2706 = vld [vmem:[%s876 + $0x10] sm:$0xff]
    %v2707 = vld [vmem:[%s876 + $0x18] sm:$0xff]
    %2708 = vmatprep.subr.mxu0 %v2005
    %2709 = vmatpush1.msra.mxu0 %v2004
    %2710 = vmatprep.subr.mxu0 %v2009
    %2711 = vmatpush1.msra.mxu0 %v2008
    %2712 = vmatprep.subr.mxu0 %v2013
    %2713 = vmatpush1.msra.mxu0 %v2012
    %2714 = vmatprep.subr.mxu0 %v2017
    %2715 = vmatpush1.msra.mxu0 %v2016
    %2716 = vmatprep.subr.mxu0 %v2021
    %2717 = vmatpush1.msra.mxu0 %v2020
    %2718 = vmatprep.subr.mxu0 %v2025
    %2719 = vmatpush1.msra.mxu0 %v2024
    %2720 = vmatprep.subr.mxu0 %v2029
    %2721 = vmatpush1.msra.mxu0 %v2028
    %2722 = vmatprep.subr.mxu0 %v2033
    %2723 = vmatpush1.msra.mxu0 %v2032
    %2724 = vmatprep.subr.mxu0 %v2037
    %2725 = vmatpush1.msra.mxu0 %v2036
    %2726 = vmatprep.subr.mxu0 %v2041
    %2727 = vmatpush1.msra.mxu0 %v2040
    %2728 = vmatprep.subr.mxu0 %v2045
    %2729 = vmatpush1.msra.mxu0 %v2044
    %2730 = vmatprep.subr.mxu0 %v2049
    %2731 = vmatpush1.msra.mxu0 %v2048
    %2732 = vmatprep.subr.mxu0 %v2053
    %2733 = vmatpush1.msra.mxu0 %v2052
    %2734 = vmatprep.subr.mxu0 %v2057
    %2735 = vmatpush1.msra.mxu0 %v2056
    %2736 = vmatprep.subr.mxu0 %v2061
    %2737 = vmatpush1.msra.mxu0 %v2060
    %2738 = vmatprep.subr.mxu0 %v2065
    %2739 = vmatpush1.msra.mxu0 %v2064
    %2740 = vmatprep.subr.mxu0 0.0
    %2741 = vmatpush1.msra.mxu0 0.0
    %2742 = vmatprep.subr.mxu0 0.0
    %2743 = vmatpush1.msra.mxu0 0.0
    %2744 = vmatprep.subr.mxu0 0.0
    %2745 = vmatpush1.msra.mxu0 0.0
    %2746 = vmatprep.subr.mxu0 0.0
    %2747 = vmatpush1.msra.mxu0 0.0
    %2748 = vmatprep.subr.mxu0 0.0
    %2749 = vmatpush1.msra.mxu0 0.0
    %2750 = vmatprep.subr.mxu0 0.0
    %2751 = vmatpush1.msra.mxu0 0.0
    %2752 = vmatprep.subr.mxu0 0.0
    %2753 = vmatpush1.msra.mxu0 0.0
    %2754 = vmatprep.subr.mxu0 0.0
    %2755 = vmatpush1.msra.mxu0 0.0
    %2756 = vmatprep.subr.mxu0 0.0
    %2757 = vmatpush1.msra.mxu0 0.0
    %2758 = vmatprep.subr.mxu0 0.0
    %2759 = vmatpush1.msra.mxu0 0.0
    %2760 = vmatprep.subr.mxu0 0.0
    %2761 = vmatpush1.msra.mxu0 0.0
    %2762 = vmatprep.subr.mxu0 0.0
    %2763 = vmatpush1.msra.mxu0 0.0
    %2764 = vmatprep.subr.mxu0 0.0
    %2765 = vmatpush1.msra.mxu0 0.0
    %2766 = vmatprep.subr.mxu0 0.0
    %2767 = vmatpush1.msra.mxu0 0.0
    %2768 = vmatprep.subr.mxu0 0.0
    %2769 = vmatpush1.msra.mxu0 0.0
    %2770 = vmatprep.subr.mxu0 0.0
    %2771 = vmatpush1.msra.mxu0 0.0
    %2772 = vmatprep.mubr.f32.mxu0 0.0
    %2773 = vmatmul.mubr.f32.gmra.mrb[0].mxu0 %v2703
    %v2774 = vpop.f32.mrb[0].mxu0
    %v2775 = vadd.f32 0.0, %v2774
    %v2776 = vpop.f32.mrb[0].mxu0
    %v2777 = vadd.f32 0.0, %v2776
    %2778 = vdwg.mxu0
    %2779 = vmatprep.subr.mxu0 %v2007
    %2780 = vmatpush1.msra.mxu0 %v2006
    %2781 = vmatprep.subr.mxu0 %v2011
    %2782 = vmatpush1.msra.mxu0 %v2010
    %2783 = vmatprep.subr.mxu0 %v2015
    %2784 = vmatpush1.msra.mxu0 %v2014
    %2785 = vmatprep.subr.mxu0 %v2019
    %2786 = vmatpush1.msra.mxu0 %v2018
    %2787 = vmatprep.subr.mxu0 %v2023
    %2788 = vmatpush1.msra.mxu0 %v2022
    %2789 = vmatprep.subr.mxu0 %v2027
    %2790 = vmatpush1.msra.mxu0 %v2026
    %2791 = vmatprep.subr.mxu0 %v2031
    %2792 = vmatpush1.msra.mxu0 %v2030
    %2793 = vmatprep.subr.mxu0 %v2035
    %2794 = vmatpush1.msra.mxu0 %v2034
    %2795 = vmatprep.subr.mxu0 %v2039
    %2796 = vmatpush1.msra.mxu0 %v2038
    %2797 = vmatprep.subr.mxu0 %v2043
    %2798 = vmatpush1.msra.mxu0 %v2042
    %2799 = vmatprep.subr.mxu0 %v2047
    %2800 = vmatpush1.msra.mxu0 %v2046
    %2801 = vmatprep.subr.mxu0 %v2051
    %2802 = vmatpush1.msra.mxu0 %v2050
    %2803 = vmatprep.subr.mxu0 %v2055
    %2804 = vmatpush1.msra.mxu0 %v2054
    %2805 = vmatprep.subr.mxu0 %v2059
    %2806 = vmatpush1.msra.mxu0 %v2058
    %2807 = vmatprep.subr.mxu0 %v2063
    %2808 = vmatpush1.msra.mxu0 %v2062
    %2809 = vmatprep.subr.mxu0 %v2067
    %2810 = vmatpush1.msra.mxu0 %v2066
    %2811 = vmatprep.subr.mxu0 0.0
    %2812 = vmatpush1.msra.mxu0 0.0
    %2813 = vmatprep.subr.mxu0 0.0
    %2814 = vmatpush1.msra.mxu0 0.0
    %2815 = vmatprep.subr.mxu0 0.0
    %2816 = vmatpush1.msra.mxu0 0.0
    %2817 = vmatprep.subr.mxu0 0.0
    %2818 = vmatpush1.msra.mxu0 0.0
    %2819 = vmatprep.subr.mxu0 0.0
    %2820 = vmatpush1.msra.mxu0 0.0
    %2821 = vmatprep.subr.mxu0 0.0
    %2822 = vmatpush1.msra.mxu0 0.0
    %2823 = vmatprep.subr.mxu0 0.0
    %2824 = vmatpush1.msra.mxu0 0.0
    %2825 = vmatprep.subr.mxu0 0.0
    %2826 = vmatpush1.msra.mxu0 0.0
    %2827 = vmatprep.subr.mxu0 0.0
    %2828 = vmatpush1.msra.mxu0 0.0
    %2829 = vmatprep.subr.mxu0 0.0
    %2830 = vmatpush1.msra.mxu0 0.0
    %2831 = vmatprep.subr.mxu0 0.0
    %2832 = vmatpush1.msra.mxu0 0.0
    %2833 = vmatprep.subr.mxu0 0.0
    %2834 = vmatpush1.msra.mxu0 0.0
    %2835 = vmatprep.subr.mxu0 0.0
    %2836 = vmatpush1.msra.mxu0 0.0
    %2837 = vmatprep.subr.mxu0 0.0
    %2838 = vmatpush1.msra.mxu0 0.0
    %2839 = vmatprep.subr.mxu0 0.0
    %2840 = vmatpush1.msra.mxu0 0.0
    %2841 = vmatprep.subr.mxu0 0.0
    %2842 = vmatpush1.msra.mxu0 0.0
    %2843 = vmatprep.mubr.f32.mxu0 0.0
    %2844 = vmatmul.mubr.f32.gmra.mrb[0].mxu0 %v2703
    %v2845 = vpop.f32.mrb[0].mxu0
    %v2846 = vadd.f32 0.0, %v2845
    %v2847 = vpop.f32.mrb[0].mxu0
    %v2848 = vadd.f32 0.0, %v2847
    %2849 = vdwg.mxu0
    %v2850 = vadd.f32 %v2704, %v2775
    %v2851 = vadd.f32 %v2705, %v2777
    %v2852 = vadd.f32 %v2706, %v2846
    %v2853 = vadd.f32 %v2707, %v2848
    %v2854 = vxor.u32 %v2850, 2147483648
    %v2855 = vxor.u32 %v2851, 2147483648
    %v2856 = vxor.u32 %v2852, 2147483648
    %v2857 = vmul.f32 %v2854, 1.442695
    %v2858 = vpow.pop %v2857
    %v2859 = vmul.f32 %v2855, 1.442695
    %v2860 = vpow.pop %v2859
    %v2861 = vmul.f32 %v2856, 1.442695
    %v2862 = vpow.pop %v2861
    %v2863 = vadd.f32 %v2858, 1.0
    %v2864 = vadd.f32 %v2860, 1.0
    %v2865 = vadd.f32 %v2862, 1.0
    %v2866 = vrcp.pop %v2863
    %v2867 = vmul.f32 1.0, %v2866
    %v2868 = vrcp.pop %v2864
    %v2869 = vmul.f32 1.0, %v2868
    %v2870 = vrcp.pop %v2865
    %v2871 = vmul.f32 1.0, %v2870
    %v2872 = vtanh.pop %v2853
    %v2873 = vmul.f32 %v2869, %v2701
    %v2874 = vmul.f32 %v2867, %v2872
    %v2875 = vadd.f32 %v2873, %v2874
    %v2876 = vtanh.pop %v2875
    %v2877 = vmul.f32 %v2871, %v2876
    %v2878 = vld [vmem:[%s1053] sm:$0xff]
    %v2879 = vld [vmem:[%s1053 + $0x8] sm:$0xff]
    %v2880 = vld [vmem:[%s1053 + $0x10] sm:$0xff]
    %v2881 = vld [vmem:[%s1053 + $0x18] sm:$0xff]
    %2882 = vmatprep.subr.mxu0 %v2005
    %2883 = vmatpush1.msra.mxu0 %v2004
    %2884 = vmatprep.subr.mxu0 %v2009
    %2885 = vmatpush1.msra.mxu0 %v2008
    %2886 = vmatprep.subr.mxu0 %v2013
    %2887 = vmatpush1.msra.mxu0 %v2012
    %2888 = vmatprep.subr.mxu0 %v2017
    %2889 = vmatpush1.msra.mxu0 %v2016
    %2890 = vmatprep.subr.mxu0 %v2021
    %2891 = vmatpush1.msra.mxu0 %v2020
    %2892 = vmatprep.subr.mxu0 %v2025
    %2893 = vmatpush1.msra.mxu0 %v2024
    %2894 = vmatprep.subr.mxu0 %v2029
    %2895 = vmatpush1.msra.mxu0 %v2028
    %2896 = vmatprep.subr.mxu0 %v2033
    %2897 = vmatpush1.msra.mxu0 %v2032
    %2898 = vmatprep.subr.mxu0 %v2037
    %2899 = vmatpush1.msra.mxu0 %v2036
    %2900 = vmatprep.subr.mxu0 %v2041
    %2901 = vmatpush1.msra.mxu0 %v2040
    %2902 = vmatprep.subr.mxu0 %v2045
    %2903 = vmatpush1.msra.mxu0 %v2044
    %2904 = vmatprep.subr.mxu0 %v2049
    %2905 = vmatpush1.msra.mxu0 %v2048
    %2906 = vmatprep.subr.mxu0 %v2053
    %2907 = vmatpush1.msra.mxu0 %v2052
    %2908 = vmatprep.subr.mxu0 %v2057
    %2909 = vmatpush1.msra.mxu0 %v2056
    %2910 = vmatprep.subr.mxu0 %v2061
    %2911 = vmatpush1.msra.mxu0 %v2060
    %2912 = vmatprep.subr.mxu0 %v2065
    %2913 = vmatpush1.msra.mxu0 %v2064
    %2914 = vmatprep.subr.mxu0 0.0
    %2915 = vmatpush1.msra.mxu0 0.0
    %2916 = vmatprep.subr.mxu0 0.0
    %2917 = vmatpush1.msra.mxu0 0.0
    %2918 = vmatprep.subr.mxu0 0.0
    %2919 = vmatpush1.msra.mxu0 0.0
    %2920 = vmatprep.subr.mxu0 0.0
    %2921 = vmatpush1.msra.mxu0 0.0
    %2922 = vmatprep.subr.mxu0 0.0
    %2923 = vmatpush1.msra.mxu0 0.0
    %2924 = vmatprep.subr.mxu0 0.0
    %2925 = vmatpush1.msra.mxu0 0.0
    %2926 = vmatprep.subr.mxu0 0.0
    %2927 = vmatpush1.msra.mxu0 0.0
    %2928 = vmatprep.subr.mxu0 0.0
    %2929 = vmatpush1.msra.mxu0 0.0
    %2930 = vmatprep.subr.mxu0 0.0
    %2931 = vmatpush1.msra.mxu0 0.0
    %2932 = vmatprep.subr.mxu0 0.0
    %2933 = vmatpush1.msra.mxu0 0.0
    %2934 = vmatprep.subr.mxu0 0.0
    %2935 = vmatpush1.msra.mxu0 0.0
    %2936 = vmatprep.subr.mxu0 0.0
    %2937 = vmatpush1.msra.mxu0 0.0
    %2938 = vmatprep.subr.mxu0 0.0
    %2939 = vmatpush1.msra.mxu0 0.0
    %2940 = vmatprep.subr.mxu0 0.0
    %2941 = vmatpush1.msra.mxu0 0.0
    %2942 = vmatprep.subr.mxu0 0.0
    %2943 = vmatpush1.msra.mxu0 0.0
    %2944 = vmatprep.subr.mxu0 0.0
    %2945 = vmatpush1.msra.mxu0 0.0
    %2946 = vmatprep.mubr.f32.mxu0 0.0
    %2947 = vmatmul.mubr.f32.gmra.mrb[0].mxu0 %v2877
    %v2948 = vpop.f32.mrb[0].mxu0
    %v2949 = vadd.f32 0.0, %v2948
    %v2950 = vpop.f32.mrb[0].mxu0
    %v2951 = vadd.f32 0.0, %v2950
    %2952 = vdwg.mxu0
    %2953 = vmatprep.subr.mxu0 %v2007
    %2954 = vmatpush1.msra.mxu0 %v2006
    %2955 = vmatprep.subr.mxu0 %v2011
    %2956 = vmatpush1.msra.mxu0 %v2010
    %2957 = vmatprep.subr.mxu0 %v2015
    %2958 = vmatpush1.msra.mxu0 %v2014
    %2959 = vmatprep.subr.mxu0 %v2019
    %2960 = vmatpush1.msra.mxu0 %v2018
    %2961 = vmatprep.subr.mxu0 %v2023
    %2962 = vmatpush1.msra.mxu0 %v2022
    %2963 = vmatprep.subr.mxu0 %v2027
    %2964 = vmatpush1.msra.mxu0 %v2026
    %2965 = vmatprep.subr.mxu0 %v2031
    %2966 = vmatpush1.msra.mxu0 %v2030
    %2967 = vmatprep.subr.mxu0 %v2035
    %2968 = vmatpush1.msra.mxu0 %v2034
    %2969 = vmatprep.subr.mxu0 %v2039
    %2970 = vmatpush1.msra.mxu0 %v2038
    %2971 = vmatprep.subr.mxu0 %v2043
    %2972 = vmatpush1.msra.mxu0 %v2042
    %2973 = vmatprep.subr.mxu0 %v2047
    %2974 = vmatpush1.msra.mxu0 %v2046
    %2975 = vmatprep.subr.mxu0 %v2051
    %2976 = vmatpush1.msra.mxu0 %v2050
    %2977 = vmatprep.subr.mxu0 %v2055
    %2978 = vmatpush1.msra.mxu0 %v2054
    %2979 = vmatprep.subr.mxu0 %v2059
    %2980 = vmatpush1.msra.mxu0 %v2058
    %2981 = vmatprep.subr.mxu0 %v2063
    %2982 = vmatpush1.msra.mxu0 %v2062
    %2983 = vmatprep.subr.mxu0 %v2067
    %2984 = vmatpush1.msra.mxu0 %v2066
    %2985 = vmatprep.subr.mxu0 0.0
    %2986 = vmatpush1.msra.mxu0 0.0
    %2987 = vmatprep.subr.mxu0 0.0
    %2988 = vmatpush1.msra.mxu0 0.0
    %2989 = vmatprep.subr.mxu0 0.0
    %2990 = vmatpush1.msra.mxu0 0.0
    %2991 = vmatprep.subr.mxu0 0.0
    %2992 = vmatpush1.msra.mxu0 0.0
    %2993 = vmatprep.subr.mxu0 0.0
    %2994 = vmatpush1.msra.mxu0 0.0
    %2995 = vmatprep.subr.mxu0 0.0
    %2996 = vmatpush1.msra.mxu0 0.0
    %2997 = vmatprep.subr.mxu0 0.0
    %2998 = vmatpush1.msra.mxu0 0.0
    %2999 = vmatprep.subr.mxu0 0.0
    %3000 = vmatpush1.msra.mxu0 0.0
    %3001 = vmatprep.subr.mxu0 0.0
    %3002 = vmatpush1.msra.mxu0 0.0
    %3003 = vmatprep.subr.mxu0 0.0
    %3004 = vmatpush1.msra.mxu0 0.0
    %3005 = vmatprep.subr.mxu0 0.0
    %3006 = vmatpush1.msra.mxu0 0.0
    %3007 = vmatprep.subr.mxu0 0.0
    %3008 = vmatpush1.msra.mxu0 0.0
    %3009 = vmatprep.subr.mxu0 0.0
    %3010 = vmatpush1.msra.mxu0 0.0
    %3011 = vmatprep.subr.mxu0 0.0
    %3012 = vmatpush1.msra.mxu0 0.0
    %3013 = vmatprep.subr.mxu0 0.0
    %3014 = vmatpush1.msra.mxu0 0.0
    %3015 = vmatprep.subr.mxu0 0.0
    %3016 = vmatpush1.msra.mxu0 0.0
    %3017 = vmatprep.mubr.f32.mxu0 0.0
    %3018 = vmatmul.mubr.f32.gmra.mrb[0].mxu0 %v2877
    %v3019 = vpop.f32.mrb[0].mxu0
    %v3020 = vadd.f32 0.0, %v3019
    %v3021 = vpop.f32.mrb[0].mxu0
    %v3022 = vadd.f32 0.0, %v3021
    %3023 = vdwg.mxu0
    %v3024 = vadd.f32 %v2878, %v2949
    %v3025 = vadd.f32 %v2879, %v2951
    %v3026 = vadd.f32 %v2880, %v3020
    %v3027 = vadd.f32 %v2881, %v3022
    %v3028 = vxor.u32 %v3024, 2147483648
    %v3029 = vxor.u32 %v3025, 2147483648
    %v3030 = vxor.u32 %v3026, 2147483648
    %v3031 = vmul.f32 %v3028, 1.442695
    %v3032 = vpow.pop %v3031
    %v3033 = vmul.f32 %v3029, 1.442695
    %v3034 = vpow.pop %v3033
    %v3035 = vmul.f32 %v3030, 1.442695
    %v3036 = vpow.pop %v3035
    %v3037 = vadd.f32 %v3032, 1.0
    %v3038 = vadd.f32 %v3034, 1.0
    %v3039 = vadd.f32 %v3036, 1.0
    %v3040 = vrcp.pop %v3037
    %v3041 = vmul.f32 1.0, %v3040
    %v3042 = vrcp.pop %v3038
    %v3043 = vmul.f32 1.0, %v3042
    %v3044 = vrcp.pop %v3039
    %v3045 = vmul.f32 1.0, %v3044
    %v3046 = vtanh.pop %v3027
    %v3047 = vmul.f32 %v3043, %v2875
    %v3048 = vmul.f32 %v3041, %v3046
    %v3049 = vadd.f32 %v3047, %v3048
    %v3050 = vtanh.pop %v3049
    %v3051 = vmul.f32 %v3045, %v3050
    %v3052 = vld [vmem:[%s1230] sm:$0xff]
    %v3053 = vld [vmem:[%s1230 + $0x8] sm:$0xff]
    %v3054 = vld [vmem:[%s1230 + $0x10] sm:$0xff]
    %v3055 = vld [vmem:[%s1230 + $0x18] sm:$0xff]
    %3056 = vmatprep.subr.mxu0 %v2005
    %3057 = vmatpush1.msra.mxu0 %v2004
    %3058 = vmatprep.subr.mxu0 %v2009
    %3059 = vmatpush1.msra.mxu0 %v2008
    %3060 = vmatprep.subr.mxu0 %v2013
    %3061 = vmatpush1.msra.mxu0 %v2012
    %3062 = vmatprep.subr.mxu0 %v2017
    %3063 = vmatpush1.msra.mxu0 %v2016
    %3064 = vmatprep.subr.mxu0 %v2021
    %3065 = vmatpush1.msra.mxu0 %v2020
    %3066 = vmatprep.subr.mxu0 %v2025
    %3067 = vmatpush1.msra.mxu0 %v2024
    %3068 = vmatprep.subr.mxu0 %v2029
    %3069 = vmatpush1.msra.mxu0 %v2028
    %3070 = vmatprep.subr.mxu0 %v2033
    %3071 = vmatpush1.msra.mxu0 %v2032
    %3072 = vmatprep.subr.mxu0 %v2037
    %3073 = vmatpush1.msra.mxu0 %v2036
    %3074 = vmatprep.subr.mxu0 %v2041
    %3075 = vmatpush1.msra.mxu0 %v2040
    %3076 = vmatprep.subr.mxu0 %v2045
    %3077 = vmatpush1.msra.mxu0 %v2044
    %3078 = vmatprep.subr.mxu0 %v2049
    %3079 = vmatpush1.msra.mxu0 %v2048
    %3080 = vmatprep.subr.mxu0 %v2053
    %3081 = vmatpush1.msra.mxu0 %v2052
    %3082 = vmatprep.subr.mxu0 %v2057
    %3083 = vmatpush1.msra.mxu0 %v2056
    %3084 = vmatprep.subr.mxu0 %v2061
    %3085 = vmatpush1.msra.mxu0 %v2060
    %3086 = vmatprep.subr.mxu0 %v2065
    %3087 = vmatpush1.msra.mxu0 %v2064
    %3088 = vmatprep.subr.mxu0 0.0
    %3089 = vmatpush1.msra.mxu0 0.0
    %3090 = vmatprep.subr.mxu0 0.0
    %3091 = vmatpush1.msra.mxu0 0.0
    %3092 = vmatprep.subr.mxu0 0.0
    %3093 = vmatpush1.msra.mxu0 0.0
    %3094 = vmatprep.subr.mxu0 0.0
    %3095 = vmatpush1.msra.mxu0 0.0
    %3096 = vmatprep.subr.mxu0 0.0
    %3097 = vmatpush1.msra.mxu0 0.0
    %3098 = vmatprep.subr.mxu0 0.0
    %3099 = vmatpush1.msra.mxu0 0.0
    %3100 = vmatprep.subr.mxu0 0.0
    %3101 = vmatpush1.msra.mxu0 0.0
    %3102 = vmatprep.subr.mxu0 0.0
    %3103 = vmatpush1.msra.mxu0 0.0
    %3104 = vmatprep.subr.mxu0 0.0
    %3105 = vmatpush1.msra.mxu0 0.0
    %3106 = vmatprep.subr.mxu0 0.0
    %3107 = vmatpush1.msra.mxu0 0.0
    %3108 = vmatprep.subr.mxu0 0.0
    %3109 = vmatpush1.msra.mxu0 0.0
    %3110 = vmatprep.subr.mxu0 0.0
    %3111 = vmatpush1.msra.mxu0 0.0
    %3112 = vmatprep.subr.mxu0 0.0
    %3113 = vmatpush1.msra.mxu0 0.0
    %3114 = vmatprep.subr.mxu0 0.0
    %3115 = vmatpush1.msra.mxu0 0.0
    %3116 = vmatprep.subr.mxu0 0.0
    %3117 = vmatpush1.msra.mxu0 0.0
    %3118 = vmatprep.subr.mxu0 0.0
    %3119 = vmatpush1.msra.mxu0 0.0
    %3120 = vmatprep.mubr.f32.mxu0 0.0
    %3121 = vmatmul.mubr.f32.gmra.mrb[0].mxu0 %v3051
    %v3122 = vpop.f32.mrb[0].mxu0
    %v3123 = vadd.f32 0.0, %v3122
    %v3124 = vpop.f32.mrb[0].mxu0
    %v3125 = vadd.f32 0.0, %v3124
    %3126 = vdwg.mxu0
    %3127 = vmatprep.subr.mxu0 %v2007
    %3128 = vmatpush1.msra.mxu0 %v2006
    %3129 = vmatprep.subr.mxu0 %v2011
    %3130 = vmatpush1.msra.mxu0 %v2010
    %3131 = vmatprep.subr.mxu0 %v2015
    %3132 = vmatpush1.msra.mxu0 %v2014
    %3133 = vmatprep.subr.mxu0 %v2019
    %3134 = vmatpush1.msra.mxu0 %v2018
    %3135 = vmatprep.subr.mxu0 %v2023
    %3136 = vmatpush1.msra.mxu0 %v2022
    %3137 = vmatprep.subr.mxu0 %v2027
    %3138 = vmatpush1.msra.mxu0 %v2026
    %3139 = vmatprep.subr.mxu0 %v2031
    %3140 = vmatpush1.msra.mxu0 %v2030
    %3141 = vmatprep.subr.mxu0 %v2035
    %3142 = vmatpush1.msra.mxu0 %v2034
    %3143 = vmatprep.subr.mxu0 %v2039
    %3144 = vmatpush1.msra.mxu0 %v2038
    %3145 = vmatprep.subr.mxu0 %v2043
    %3146 = vmatpush1.msra.mxu0 %v2042
    %3147 = vmatprep.subr.mxu0 %v2047
    %3148 = vmatpush1.msra.mxu0 %v2046
    %3149 = vmatprep.subr.mxu0 %v2051
    %3150 = vmatpush1.msra.mxu0 %v2050
    %3151 = vmatprep.subr.mxu0 %v2055
    %3152 = vmatpush1.msra.mxu0 %v2054
    %3153 = vmatprep.subr.mxu0 %v2059
    %3154 = vmatpush1.msra.mxu0 %v2058
    %3155 = vmatprep.subr.mxu0 %v2063
    %3156 = vmatpush1.msra.mxu0 %v2062
    %3157 = vmatprep.subr.mxu0 %v2067
    %3158 = vmatpush1.msra.mxu0 %v2066
    %3159 = vmatprep.subr.mxu0 0.0
    %3160 = vmatpush1.msra.mxu0 0.0
    %3161 = vmatprep.subr.mxu0 0.0
    %3162 = vmatpush1.msra.mxu0 0.0
    %3163 = vmatprep.subr.mxu0 0.0
    %3164 = vmatpush1.msra.mxu0 0.0
    %3165 = vmatprep.subr.mxu0 0.0
    %3166 = vmatpush1.msra.mxu0 0.0
    %3167 = vmatprep.subr.mxu0 0.0
    %3168 = vmatpush1.msra.mxu0 0.0
    %3169 = vmatprep.subr.mxu0 0.0
    %3170 = vmatpush1.msra.mxu0 0.0
    %3171 = vmatprep.subr.mxu0 0.0
    %3172 = vmatpush1.msra.mxu0 0.0
    %3173 = vmatprep.subr.mxu0 0.0
    %3174 = vmatpush1.msra.mxu0 0.0
    %3175 = vmatprep.subr.mxu0 0.0
    %3176 = vmatpush1.msra.mxu0 0.0
    %3177 = vmatprep.subr.mxu0 0.0
    %3178 = vmatpush1.msra.mxu0 0.0
    %3179 = vmatprep.subr.mxu0 0.0
    %3180 = vmatpush1.msra.mxu0 0.0
    %3181 = vmatprep.subr.mxu0 0.0
    %3182 = vmatpush1.msra.mxu0 0.0
    %3183 = vmatprep.subr.mxu0 0.0
    %3184 = vmatpush1.msra.mxu0 0.0
    %3185 = vmatprep.subr.mxu0 0.0
    %3186 = vmatpush1.msra.mxu0 0.0
    %3187 = vmatprep.subr.mxu0 0.0
    %3188 = vmatpush1.msra.mxu0 0.0
    %3189 = vmatprep.subr.mxu0 0.0
    %3190 = vmatpush1.msra.mxu0 0.0
    %3191 = vmatprep.mubr.f32.mxu0 0.0
    %3192 = vmatmul.mubr.f32.gmra.mrb[0].mxu0 %v3051
    %v3193 = vpop.f32.mrb[0].mxu0
    %v3194 = vadd.f32 0.0, %v3193
    %v3195 = vpop.f32.mrb[0].mxu0
    %v3196 = vadd.f32 0.0, %v3195
    %3197 = vdwg.mxu0
    %v3198 = vadd.f32 %v3052, %v3123
    %v3199 = vadd.f32 %v3053, %v3125
    %v3200 = vadd.f32 %v3054, %v3194
    %v3201 = vadd.f32 %v3055, %v3196
    %v3202 = vxor.u32 %v3198, 2147483648
    %v3203 = vxor.u32 %v3199, 2147483648
    %v3204 = vxor.u32 %v3200, 2147483648
    %v3205 = vmul.f32 %v3202, 1.442695
    %v3206 = vpow.pop %v3205
    %v3207 = vmul.f32 %v3203, 1.442695
    %v3208 = vpow.pop %v3207
    %v3209 = vmul.f32 %v3204, 1.442695
    %v3210 = vpow.pop %v3209
    %v3211 = vadd.f32 %v3206, 1.0
    %v3212 = vadd.f32 %v3208, 1.0
    %v3213 = vadd.f32 %v3210, 1.0
    %v3214 = vrcp.pop %v3211
    %v3215 = vmul.f32 1.0, %v3214
    %v3216 = vrcp.pop %v3212
    %v3217 = vmul.f32 1.0, %v3216
    %v3218 = vrcp.pop %v3213
    %v3219 = vmul.f32 1.0, %v3218
    %v3220 = vtanh.pop %v3201
    %v3221 = vmul.f32 %v3217, %v3049
    %v3222 = vmul.f32 %v3215, %v3220
    %v3223 = vadd.f32 %v3221, %v3222
    %v3224 = vtanh.pop %v3223
    %v3225 = vmul.f32 %v3219, %v3224
    %v3226 = vld [vmem:[%s1407] sm:$0xff]
    %v3227 = vld [vmem:[%s1407 + $0x8] sm:$0xff]
    %v3228 = vld [vmem:[%s1407 + $0x10] sm:$0xff]
    %v3229 = vld [vmem:[%s1407 + $0x18] sm:$0xff]
    %3230 = vmatprep.subr.mxu0 %v2005
    %3231 = vmatpush1.msra.mxu0 %v2004
    %3232 = vmatprep.subr.mxu0 %v2009
    %3233 = vmatpush1.msra.mxu0 %v2008
    %3234 = vmatprep.subr.mxu0 %v2013
    %3235 = vmatpush1.msra.mxu0 %v2012
    %3236 = vmatprep.subr.mxu0 %v2017
    %3237 = vmatpush1.msra.mxu0 %v2016
    %3238 = vmatprep.subr.mxu0 %v2021
    %3239 = vmatpush1.msra.mxu0 %v2020
    %3240 = vmatprep.subr.mxu0 %v2025
    %3241 = vmatpush1.msra.mxu0 %v2024
    %3242 = vmatprep.subr.mxu0 %v2029
    %3243 = vmatpush1.msra.mxu0 %v2028
    %3244 = vmatprep.subr.mxu0 %v2033
    %3245 = vmatpush1.msra.mxu0 %v2032
    %3246 = vmatprep.subr.mxu0 %v2037
    %3247 = vmatpush1.msra.mxu0 %v2036
    %3248 = vmatprep.subr.mxu0 %v2041
    %3249 = vmatpush1.msra.mxu0 %v2040
    %3250 = vmatprep.subr.mxu0 %v2045
    %3251 = vmatpush1.msra.mxu0 %v2044
    %3252 = vmatprep.subr.mxu0 %v2049
    %3253 = vmatpush1.msra.mxu0 %v2048
    %3254 = vmatprep.subr.mxu0 %v2053
    %3255 = vmatpush1.msra.mxu0 %v2052
    %3256 = vmatprep.subr.mxu0 %v2057
    %3257 = vmatpush1.msra.mxu0 %v2056
    %3258 = vmatprep.subr.mxu0 %v2061
    %3259 = vmatpush1.msra.mxu0 %v2060
    %3260 = vmatprep.subr.mxu0 %v2065
    %3261 = vmatpush1.msra.mxu0 %v2064
    %3262 = vmatprep.subr.mxu0 0.0
    %3263 = vmatpush1.msra.mxu0 0.0
    %3264 = vmatprep.subr.mxu0 0.0
    %3265 = vmatpush1.msra.mxu0 0.0
    %3266 = vmatprep.subr.mxu0 0.0
    %3267 = vmatpush1.msra.mxu0 0.0
    %3268 = vmatprep.subr.mxu0 0.0
    %3269 = vmatpush1.msra.mxu0 0.0
    %3270 = vmatprep.subr.mxu0 0.0
    %3271 = vmatpush1.msra.mxu0 0.0
    %3272 = vmatprep.subr.mxu0 0.0
    %3273 = vmatpush1.msra.mxu0 0.0
    %3274 = vmatprep.subr.mxu0 0.0
    %3275 = vmatpush1.msra.mxu0 0.0
    %3276 = vmatprep.subr.mxu0 0.0
    %3277 = vmatpush1.msra.mxu0 0.0
    %3278 = vmatprep.subr.mxu0 0.0
    %3279 = vmatpush1.msra.mxu0 0.0
    %3280 = vmatprep.subr.mxu0 0.0
    %3281 = vmatpush1.msra.mxu0 0.0
    %3282 = vmatprep.subr.mxu0 0.0
    %3283 = vmatpush1.msra.mxu0 0.0
    %3284 = vmatprep.subr.mxu0 0.0
    %3285 = vmatpush1.msra.mxu0 0.0
    %3286 = vmatprep.subr.mxu0 0.0
    %3287 = vmatpush1.msra.mxu0 0.0
    %3288 = vmatprep.subr.mxu0 0.0
    %3289 = vmatpush1.msra.mxu0 0.0
    %3290 = vmatprep.subr.mxu0 0.0
    %3291 = vmatpush1.msra.mxu0 0.0
    %3292 = vmatprep.subr.mxu0 0.0
    %3293 = vmatpush1.msra.mxu0 0.0
    %3294 = vmatprep.mubr.f32.mxu0 0.0
    %3295 = vmatmul.mubr.f32.gmra.mrb[0].mxu0 %v3225
    %v3296 = vpop.f32.mrb[0].mxu0
    %v3297 = vadd.f32 0.0, %v3296
    %v3298 = vpop.f32.mrb[0].mxu0
    %v3299 = vadd.f32 0.0, %v3298
    %3300 = vdwg.mxu0
    %3301 = vmatprep.subr.mxu0 %v2007
    %3302 = vmatpush1.msra.mxu0 %v2006
    %3303 = vmatprep.subr.mxu0 %v2011
    %3304 = vmatpush1.msra.mxu0 %v2010
    %3305 = vmatprep.subr.mxu0 %v2015
    %3306 = vmatpush1.msra.mxu0 %v2014
    %3307 = vmatprep.subr.mxu0 %v2019
    %3308 = vmatpush1.msra.mxu0 %v2018
    %3309 = vmatprep.subr.mxu0 %v2023
    %3310 = vmatpush1.msra.mxu0 %v2022
    %3311 = vmatprep.subr.mxu0 %v2027
    %3312 = vmatpush1.msra.mxu0 %v2026
    %3313 = vmatprep.subr.mxu0 %v2031
    %3314 = vmatpush1.msra.mxu0 %v2030
    %3315 = vmatprep.subr.mxu0 %v2035
    %3316 = vmatpush1.msra.mxu0 %v2034
    %3317 = vmatprep.subr.mxu0 %v2039
    %3318 = vmatpush1.msra.mxu0 %v2038
    %3319 = vmatprep.subr.mxu0 %v2043
    %3320 = vmatpush1.msra.mxu0 %v2042
    %3321 = vmatprep.subr.mxu0 %v2047
    %3322 = vmatpush1.msra.mxu0 %v2046
    %3323 = vmatprep.subr.mxu0 %v2051
    %3324 = vmatpush1.msra.mxu0 %v2050
    %3325 = vmatprep.subr.mxu0 %v2055
    %3326 = vmatpush1.msra.mxu0 %v2054
    %3327 = vmatprep.subr.mxu0 %v2059
    %3328 = vmatpush1.msra.mxu0 %v2058
    %3329 = vmatprep.subr.mxu0 %v2063
    %3330 = vmatpush1.msra.mxu0 %v2062
    %3331 = vmatprep.subr.mxu0 %v2067
    %3332 = vmatpush1.msra.mxu0 %v2066
    %3333 = vmatprep.subr.mxu0 0.0
    %3334 = vmatpush1.msra.mxu0 0.0
    %3335 = vmatprep.subr.mxu0 0.0
    %3336 = vmatpush1.msra.mxu0 0.0
    %3337 = vmatprep.subr.mxu0 0.0
    %3338 = vmatpush1.msra.mxu0 0.0
    %3339 = vmatprep.subr.mxu0 0.0
    %3340 = vmatpush1.msra.mxu0 0.0
    %3341 = vmatprep.subr.mxu0 0.0
    %3342 = vmatpush1.msra.mxu0 0.0
    %3343 = vmatprep.subr.mxu0 0.0
    %3344 = vmatpush1.msra.mxu0 0.0
    %3345 = vmatprep.subr.mxu0 0.0
    %3346 = vmatpush1.msra.mxu0 0.0
    %3347 = vmatprep.subr.mxu0 0.0
    %3348 = vmatpush1.msra.mxu0 0.0
    %3349 = vmatprep.subr.mxu0 0.0
    %3350 = vmatpush1.msra.mxu0 0.0
    %3351 = vmatprep.subr.mxu0 0.0
    %3352 = vmatpush1.msra.mxu0 0.0
    %3353 = vmatprep.subr.mxu0 0.0
    %3354 = vmatpush1.msra.mxu0 0.0
    %3355 = vmatprep.subr.mxu0 0.0
    %3356 = vmatpush1.msra.mxu0 0.0
    %3357 = vmatprep.subr.mxu0 0.0
    %3358 = vmatpush1.msra.mxu0 0.0
    %3359 = vmatprep.subr.mxu0 0.0
    %3360 = vmatpush1.msra.mxu0 0.0
    %3361 = vmatprep.subr.mxu0 0.0
    %3362 = vmatpush1.msra.mxu0 0.0
    %3363 = vmatprep.subr.mxu0 0.0
    %3364 = vmatpush1.msra.mxu0 0.0
    %3365 = vmatprep.mubr.f32.mxu0 0.0
    %3366 = vmatmul.mubr.f32.gmra.mrb[0].mxu0 %v3225
    %v3367 = vpop.f32.mrb[0].mxu0
    %v3368 = vadd.f32 0.0, %v3367
    %v3369 = vpop.f32.mrb[0].mxu0
    %v3370 = vadd.f32 0.0, %v3369
    %3371 = vdwg.mxu0
    %v3372 = vadd.f32 %v3226, %v3297
    %v3373 = vadd.f32 %v3227, %v3299
    %v3374 = vadd.f32 %v3228, %v3368
    %v3375 = vadd.f32 %v3229, %v3370
    %v3376 = vxor.u32 %v3372, 2147483648
    %v3377 = vxor.u32 %v3373, 2147483648
    %v3378 = vxor.u32 %v3374, 2147483648
    %v3379 = vmul.f32 %v3376, 1.442695
    %v3380 = vpow.pop %v3379
    %v3381 = vmul.f32 %v3377, 1.442695
    %v3382 = vpow.pop %v3381
    %v3383 = vmul.f32 %v3378, 1.442695
    %v3384 = vpow.pop %v3383
    %v3385 = vadd.f32 %v3380, 1.0
    %v3386 = vadd.f32 %v3382, 1.0
    %v3387 = vadd.f32 %v3384, 1.0
    %v3388 = vrcp.pop %v3385
    %v3389 = vmul.f32 1.0, %v3388
    %v3390 = vrcp.pop %v3386
    %v3391 = vmul.f32 1.0, %v3390
    %v3392 = vrcp.pop %v3387
    %v3393 = vmul.f32 1.0, %v3392
    %v3394 = vtanh.pop %v3375
    %v3395 = vmul.f32 %v3391, %v3223
    %v3396 = vmul.f32 %v3389, %v3394
    %v3397 = vadd.f32 %v3395, %v3396
    %v3398 = vtanh.pop %v3397
    %v3399 = vmul.f32 %v3393, %v3398
    %v3400 = vld [vmem:[%s1584] sm:$0xff]
    %v3401 = vld [vmem:[%s1584 + $0x8] sm:$0xff]
    %v3402 = vld [vmem:[%s1584 + $0x10] sm:$0xff]
    %v3403 = vld [vmem:[%s1584 + $0x18] sm:$0xff]
    %3404 = vmatprep.subr.mxu0 %v2005
    %3405 = vmatpush1.msra.mxu0 %v2004
    %3406 = vmatprep.subr.mxu0 %v2009
    %3407 = vmatpush1.msra.mxu0 %v2008
    %3408 = vmatprep.subr.mxu0 %v2013
    %3409 = vmatpush1.msra.mxu0 %v2012
    %3410 = vmatprep.subr.mxu0 %v2017
    %3411 = vmatpush1.msra.mxu0 %v2016
    %3412 = vmatprep.subr.mxu0 %v2021
    %3413 = vmatpush1.msra.mxu0 %v2020
    %3414 = vmatprep.subr.mxu0 %v2025
    %3415 = vmatpush1.msra.mxu0 %v2024
    %3416 = vmatprep.subr.mxu0 %v2029
    %3417 = vmatpush1.msra.mxu0 %v2028
    %3418 = vmatprep.subr.mxu0 %v2033
    %3419 = vmatpush1.msra.mxu0 %v2032
    %3420 = vmatprep.subr.mxu0 %v2037
    %3421 = vmatpush1.msra.mxu0 %v2036
    %3422 = vmatprep.subr.mxu0 %v2041
    %3423 = vmatpush1.msra.mxu0 %v2040
    %3424 = vmatprep.subr.mxu0 %v2045
    %3425 = vmatpush1.msra.mxu0 %v2044
    %3426 = vmatprep.subr.mxu0 %v2049
    %3427 = vmatpush1.msra.mxu0 %v2048
    %3428 = vmatprep.subr.mxu0 %v2053
    %3429 = vmatpush1.msra.mxu0 %v2052
    %3430 = vmatprep.subr.mxu0 %v2057
    %3431 = vmatpush1.msra.mxu0 %v2056
    %3432 = vmatprep.subr.mxu0 %v2061
    %3433 = vmatpush1.msra.mxu0 %v2060
    %3434 = vmatprep.subr.mxu0 %v2065
    %3435 = vmatpush1.msra.mxu0 %v2064
    %3436 = vmatprep.subr.mxu0 0.0
    %3437 = vmatpush1.msra.mxu0 0.0
    %3438 = vmatprep.subr.mxu0 0.0
    %3439 = vmatpush1.msra.mxu0 0.0
    %3440 = vmatprep.subr.mxu0 0.0
    %3441 = vmatpush1.msra.mxu0 0.0
    %3442 = vmatprep.subr.mxu0 0.0
    %3443 = vmatpush1.msra.mxu0 0.0
    %3444 = vmatprep.subr.mxu0 0.0
    %3445 = vmatpush1.msra.mxu0 0.0
    %3446 = vmatprep.subr.mxu0 0.0
    %3447 = vmatpush1.msra.mxu0 0.0
    %3448 = vmatprep.subr.mxu0 0.0
    %3449 = vmatpush1.msra.mxu0 0.0
    %3450 = vmatprep.subr.mxu0 0.0
    %3451 = vmatpush1.msra.mxu0 0.0
    %3452 = vmatprep.subr.mxu0 0.0
    %3453 = vmatpush1.msra.mxu0 0.0
    %3454 = vmatprep.subr.mxu0 0.0
    %3455 = vmatpush1.msra.mxu0 0.0
    %3456 = vmatprep.subr.mxu0 0.0
    %3457 = vmatpush1.msra.mxu0 0.0
    %3458 = vmatprep.subr.mxu0 0.0
    %3459 = vmatpush1.msra.mxu0 0.0
    %3460 = vmatprep.subr.mxu0 0.0
    %3461 = vmatpush1.msra.mxu0 0.0
    %3462 = vmatprep.subr.mxu0 0.0
    %3463 = vmatpush1.msra.mxu0 0.0
    %3464 = vmatprep.subr.mxu0 0.0
    %3465 = vmatpush1.msra.mxu0 0.0
    %3466 = vmatprep.subr.mxu0 0.0
    %3467 = vmatpush1.msra.mxu0 0.0
    %3468 = vmatprep.mubr.f32.mxu0 0.0
    %3469 = vmatmul.mubr.f32.gmra.mrb[0].mxu0 %v3399
    %v3470 = vpop.f32.mrb[0].mxu0
    %v3471 = vadd.f32 0.0, %v3470
    %v3472 = vpop.f32.mrb[0].mxu0
    %v3473 = vadd.f32 0.0, %v3472
    %3474 = vdwg.mxu0
    %3475 = vmatprep.subr.mxu0 %v2007
    %3476 = vmatpush1.msra.mxu0 %v2006
    %3477 = vmatprep.subr.mxu0 %v2011
    %3478 = vmatpush1.msra.mxu0 %v2010
    %3479 = vmatprep.subr.mxu0 %v2015
    %3480 = vmatpush1.msra.mxu0 %v2014
    %3481 = vmatprep.subr.mxu0 %v2019
    %3482 = vmatpush1.msra.mxu0 %v2018
    %3483 = vmatprep.subr.mxu0 %v2023
    %3484 = vmatpush1.msra.mxu0 %v2022
    %3485 = vmatprep.subr.mxu0 %v2027
    %3486 = vmatpush1.msra.mxu0 %v2026
    %3487 = vmatprep.subr.mxu0 %v2031
    %3488 = vmatpush1.msra.mxu0 %v2030
    %3489 = vmatprep.subr.mxu0 %v2035
    %3490 = vmatpush1.msra.mxu0 %v2034
    %3491 = vmatprep.subr.mxu0 %v2039
    %3492 = vmatpush1.msra.mxu0 %v2038
    %3493 = vmatprep.subr.mxu0 %v2043
    %3494 = vmatpush1.msra.mxu0 %v2042
    %3495 = vmatprep.subr.mxu0 %v2047
    %3496 = vmatpush1.msra.mxu0 %v2046
    %3497 = vmatprep.subr.mxu0 %v2051
    %3498 = vmatpush1.msra.mxu0 %v2050
    %3499 = vmatprep.subr.mxu0 %v2055
    %3500 = vmatpush1.msra.mxu0 %v2054
    %3501 = vmatprep.subr.mxu0 %v2059
    %3502 = vmatpush1.msra.mxu0 %v2058
    %3503 = vmatprep.subr.mxu0 %v2063
    %3504 = vmatpush1.msra.mxu0 %v2062
    %3505 = vmatprep.subr.mxu0 %v2067
    %3506 = vmatpush1.msra.mxu0 %v2066
    %3507 = vmatprep.subr.mxu0 0.0
    %3508 = vmatpush1.msra.mxu0 0.0
    %3509 = vmatprep.subr.mxu0 0.0
    %3510 = vmatpush1.msra.mxu0 0.0
    %3511 = vmatprep.subr.mxu0 0.0
    %3512 = vmatpush1.msra.mxu0 0.0
    %3513 = vmatprep.subr.mxu0 0.0
    %3514 = vmatpush1.msra.mxu0 0.0
    %3515 = vmatprep.subr.mxu0 0.0
    %3516 = vmatpush1.msra.mxu0 0.0
    %3517 = vmatprep.subr.mxu0 0.0
    %3518 = vmatpush1.msra.mxu0 0.0
    %3519 = vmatprep.subr.mxu0 0.0
    %3520 = vmatpush1.msra.mxu0 0.0
    %3521 = vmatprep.subr.mxu0 0.0
    %3522 = vmatpush1.msra.mxu0 0.0
    %3523 = vmatprep.subr.mxu0 0.0
    %3524 = vmatpush1.msra.mxu0 0.0
    %3525 = vmatprep.subr.mxu0 0.0
    %3526 = vmatpush1.msra.mxu0 0.0
    %3527 = vmatprep.subr.mxu0 0.0
    %3528 = vmatpush1.msra.mxu0 0.0
    %3529 = vmatprep.subr.mxu0 0.0
    %3530 = vmatpush1.msra.mxu0 0.0
    %3531 = vmatprep.subr.mxu0 0.0
    %3532 = vmatpush1.msra.mxu0 0.0
    %3533 = vmatprep.subr.mxu0 0.0
    %3534 = vmatpush1.msra.mxu0 0.0
    %3535 = vmatprep.subr.mxu0 0.0
    %3536 = vmatpush1.msra.mxu0 0.0
    %3537 = vmatprep.subr.mxu0 0.0
    %3538 = vmatpush1.msra.mxu0 0.0
    %3539 = vmatprep.mubr.f32.mxu0 0.0
    %3540 = vmatmul.mubr.f32.gmra.mrb[0].mxu0 %v3399
    %v3541 = vpop.f32.mrb[0].mxu0
    %v3542 = vadd.f32 0.0, %v3541
    %v3543 = vpop.f32.mrb[0].mxu0
    %v3544 = vadd.f32 0.0, %v3543
    %3545 = vdwg.mxu0
    %v3546 = vadd.f32 %v3400, %v3471
    %v3547 = vadd.f32 %v3401, %v3473
    %v3548 = vadd.f32 %v3402, %v3542
    %v3549 = vadd.f32 %v3403, %v3544
    %v3550 = vxor.u32 %v3546, 2147483648
    %v3551 = vxor.u32 %v3547, 2147483648
    %v3552 = vxor.u32 %v3548, 2147483648
    %v3553 = vmul.f32 %v3550, 1.442695
    %v3554 = vpow.pop %v3553
    %v3555 = vmul.f32 %v3551, 1.442695
    %v3556 = vpow.pop %v3555
    %v3557 = vmul.f32 %v3552, 1.442695
    %v3558 = vpow.pop %v3557
    %v3559 = vadd.f32 %v3554, 1.0
    %v3560 = vadd.f32 %v3556, 1.0
    %v3561 = vadd.f32 %v3558, 1.0
    %v3562 = vrcp.pop %v3559
    %v3563 = vmul.f32 1.0, %v3562
    %v3564 = vrcp.pop %v3560
    %v3565 = vmul.f32 1.0, %v3564
    %v3566 = vrcp.pop %v3561
    %v3567 = vmul.f32 1.0, %v3566
    %v3568 = vtanh.pop %v3549
    %v3569 = vmul.f32 %v3565, %v3397
    %v3570 = vmul.f32 %v3563, %v3568
    %v3571 = vadd.f32 %v3569, %v3570
    %v3572 = vtanh.pop %v3571
    %v3573 = vmul.f32 %v3567, %v3572
    %v3574 = vld [vmem:[%s1761] sm:$0xff]
    %v3575 = vld [vmem:[%s1761 + $0x8] sm:$0xff]
    %v3576 = vld [vmem:[%s1761 + $0x10] sm:$0xff]
    %v3577 = vld [vmem:[%s1761 + $0x18] sm:$0xff]
    %3578 = vmatprep.subr.mxu0 %v2005
    %3579 = vmatpush1.msra.mxu0 %v2004
    %3580 = vmatprep.subr.mxu0 %v2009
    %3581 = vmatpush1.msra.mxu0 %v2008
    %3582 = vmatprep.subr.mxu0 %v2013
    %3583 = vmatpush1.msra.mxu0 %v2012
    %3584 = vmatprep.subr.mxu0 %v2017
    %3585 = vmatpush1.msra.mxu0 %v2016
    %3586 = vmatprep.subr.mxu0 %v2021
    %3587 = vmatpush1.msra.mxu0 %v2020
    %3588 = vmatprep.subr.mxu0 %v2025
    %3589 = vmatpush1.msra.mxu0 %v2024
    %3590 = vmatprep.subr.mxu0 %v2029
    %3591 = vmatpush1.msra.mxu0 %v2028
    %3592 = vmatprep.subr.mxu0 %v2033
    %3593 = vmatpush1.msra.mxu0 %v2032
    %3594 = vmatprep.subr.mxu0 %v2037
    %3595 = vmatpush1.msra.mxu0 %v2036
    %3596 = vmatprep.subr.mxu0 %v2041
    %3597 = vmatpush1.msra.mxu0 %v2040
    %3598 = vmatprep.subr.mxu0 %v2045
    %3599 = vmatpush1.msra.mxu0 %v2044
    %3600 = vmatprep.subr.mxu0 %v2049
    %3601 = vmatpush1.msra.mxu0 %v2048
    %3602 = vmatprep.subr.mxu0 %v2053
    %3603 = vmatpush1.msra.mxu0 %v2052
    %3604 = vmatprep.subr.mxu0 %v2057
    %3605 = vmatpush1.msra.mxu0 %v2056
    %3606 = vmatprep.subr.mxu0 %v2061
    %3607 = vmatpush1.msra.mxu0 %v2060
    %3608 = vmatprep.subr.mxu0 %v2065
    %3609 = vmatpush1.msra.mxu0 %v2064
    %3610 = vmatprep.subr.mxu0 0.0
    %3611 = vmatpush1.msra.mxu0 0.0
    %3612 = vmatprep.subr.mxu0 0.0
    %3613 = vmatpush1.msra.mxu0 0.0
    %3614 = vmatprep.subr.mxu0 0.0
    %3615 = vmatpush1.msra.mxu0 0.0
    %3616 = vmatprep.subr.mxu0 0.0
    %3617 = vmatpush1.msra.mxu0 0.0
    %3618 = vmatprep.subr.mxu0 0.0
    %3619 = vmatpush1.msra.mxu0 0.0
    %3620 = vmatprep.subr.mxu0 0.0
    %3621 = vmatpush1.msra.mxu0 0.0
    %3622 = vmatprep.subr.mxu0 0.0
    %3623 = vmatpush1.msra.mxu0 0.0
    %3624 = vmatprep.subr.mxu0 0.0
    %3625 = vmatpush1.msra.mxu0 0.0
    %3626 = vmatprep.subr.mxu0 0.0
    %3627 = vmatpush1.msra.mxu0 0.0
    %3628 = vmatprep.subr.mxu0 0.0
    %3629 = vmatpush1.msra.mxu0 0.0
    %3630 = vmatprep.subr.mxu0 0.0
    %3631 = vmatpush1.msra.mxu0 0.0
    %3632 = vmatprep.subr.mxu0 0.0
    %3633 = vmatpush1.msra.mxu0 0.0
    %3634 = vmatprep.subr.mxu0 0.0
    %3635 = vmatpush1.msra.mxu0 0.0
    %3636 = vmatprep.subr.mxu0 0.0
    %3637 = vmatpush1.msra.mxu0 0.0
    %3638 = vmatprep.subr.mxu0 0.0
    %3639 = vmatpush1.msra.mxu0 0.0
    %3640 = vmatprep.subr.mxu0 0.0
    %3641 = vmatpush1.msra.mxu0 0.0
    %3642 = vmatprep.mubr.f32.mxu0 0.0
    %3643 = vmatmul.mubr.f32.gmra.mrb[0].mxu0 %v3573
    %v3644 = vpop.f32.mrb[0].mxu0
    %v3645 = vadd.f32 0.0, %v3644
    %v3646 = vpop.f32.mrb[0].mxu0
    %v3647 = vadd.f32 0.0, %v3646
    %3648 = vdwg.mxu0
    %3649 = vmatprep.subr.mxu0 %v2007
    %3650 = vmatpush1.msra.mxu0 %v2006
    %3651 = vmatprep.subr.mxu0 %v2011
    %3652 = vmatpush1.msra.mxu0 %v2010
    %3653 = vmatprep.subr.mxu0 %v2015
    %3654 = vmatpush1.msra.mxu0 %v2014
    %3655 = vmatprep.subr.mxu0 %v2019
    %3656 = vmatpush1.msra.mxu0 %v2018
    %3657 = vmatprep.subr.mxu0 %v2023
    %3658 = vmatpush1.msra.mxu0 %v2022
    %3659 = vmatprep.subr.mxu0 %v2027
    %3660 = vmatpush1.msra.mxu0 %v2026
    %3661 = vmatprep.subr.mxu0 %v2031
    %3662 = vmatpush1.msra.mxu0 %v2030
    %3663 = vmatprep.subr.mxu0 %v2035
    %3664 = vmatpush1.msra.mxu0 %v2034
    %3665 = vmatprep.subr.mxu0 %v2039
    %3666 = vmatpush1.msra.mxu0 %v2038
    %3667 = vmatprep.subr.mxu0 %v2043
    %3668 = vmatpush1.msra.mxu0 %v2042
    %3669 = vmatprep.subr.mxu0 %v2047
    %3670 = vmatpush1.msra.mxu0 %v2046
    %3671 = vmatprep.subr.mxu0 %v2051
    %3672 = vmatpush1.msra.mxu0 %v2050
    %3673 = vmatprep.subr.mxu0 %v2055
    %3674 = vmatpush1.msra.mxu0 %v2054
    %3675 = vmatprep.subr.mxu0 %v2059
    %3676 = vmatpush1.msra.mxu0 %v2058
    %3677 = vmatprep.subr.mxu0 %v2063
    %3678 = vmatpush1.msra.mxu0 %v2062
    %3679 = vmatprep.subr.mxu0 %v2067
    %3680 = vmatpush1.msra.mxu0 %v2066
    %3681 = vmatprep.subr.mxu0 0.0
    %3682 = vmatpush1.msra.mxu0 0.0
    %3683 = vmatprep.subr.mxu0 0.0
    %3684 = vmatpush1.msra.mxu0 0.0
    %3685 = vmatprep.subr.mxu0 0.0
    %3686 = vmatpush1.msra.mxu0 0.0
    %3687 = vmatprep.subr.mxu0 0.0
    %3688 = vmatpush1.msra.mxu0 0.0
    %3689 = vmatprep.subr.mxu0 0.0
    %3690 = vmatpush1.msra.mxu0 0.0
    %3691 = vmatprep.subr.mxu0 0.0
    %3692 = vmatpush1.msra.mxu0 0.0
    %3693 = vmatprep.subr.mxu0 0.0
    %3694 = vmatpush1.msra.mxu0 0.0
    %3695 = vmatprep.subr.mxu0 0.0
    %3696 = vmatpush1.msra.mxu0 0.0
    %3697 = vmatprep.subr.mxu0 0.0
    %3698 = vmatpush1.msra.mxu0 0.0
    %3699 = vmatprep.subr.mxu0 0.0
    %3700 = vmatpush1.msra.mxu0 0.0
    %3701 = vmatprep.subr.mxu0 0.0
    %3702 = vmatpush1.msra.mxu0 0.0
    %3703 = vmatprep.subr.mxu0 0.0
    %3704 = vmatpush1.msra.mxu0 0.0
    %3705 = vmatprep.subr.mxu0 0.0
    %3706 = vmatpush1.msra.mxu0 0.0
    %3707 = vmatprep.subr.mxu0 0.0
    %3708 = vmatpush1.msra.mxu0 0.0
    %3709 = vmatprep.subr.mxu0 0.0
    %3710 = vmatpush1.msra.mxu0 0.0
    %3711 = vmatprep.subr.mxu0 0.0
    %3712 = vmatpush1.msra.mxu0 0.0
    %3713 = vmatprep.mubr.f32.mxu0 0.0
    %3714 = vmatmul.mubr.f32.gmra.mrb[0].mxu0 %v3573
    %v3715 = vpop.f32.mrb[0].mxu0
    %v3716 = vadd.f32 0.0, %v3715
    %v3717 = vpop.f32.mrb[0].mxu0
    %v3718 = vadd.f32 0.0, %v3717
    %3719 = vdwg.mxu0
    %v3720 = vadd.f32 %v3574, %v3645
    %v3721 = vadd.f32 %v3575, %v3647
    %v3722 = vadd.f32 %v3576, %v3716
    %v3723 = vadd.f32 %v3577, %v3718
    %v3724 = vxor.u32 %v3720, 2147483648
    %v3725 = vxor.u32 %v3721, 2147483648
    %v3726 = vxor.u32 %v3722, 2147483648
    %v3727 = vmul.f32 %v3724, 1.442695
    %v3728 = vpow.pop %v3727
    %v3729 = vmul.f32 %v3725, 1.442695
    %v3730 = vpow.pop %v3729
    %v3731 = vmul.f32 %v3726, 1.442695
    %v3732 = vpow.pop %v3731
    %v3733 = vadd.f32 %v3728, 1.0
    %v3734 = vadd.f32 %v3730, 1.0
    %v3735 = vadd.f32 %v3732, 1.0
    %v3736 = vrcp.pop %v3733
    %v3737 = vmul.f32 1.0, %v3736
    %v3738 = vrcp.pop %v3734
    %v3739 = vmul.f32 1.0, %v3738
    %v3740 = vrcp.pop %v3735
    %v3741 = vmul.f32 1.0, %v3740
    %v3742 = vtanh.pop %v3723
    %v3743 = vmul.f32 %v3739, %v3571
    %v3744 = vmul.f32 %v3737, %v3742
    %v3745 = vadd.f32 %v3743, %v3744
    %v3746 = vtanh.pop %v3745
    %v3747 = vmul.f32 %v3741, %v3746
    %s3748 = scalar_lea.vmem [#allocation17], 8
    %3749 = vst [vmem:[%s3748] sm:$0xff] %v3747
    %s3750 = scalar_lea.vmem [#allocation19], 8
    %3751 = vst [vmem:[%s3750] sm:$0xff] %v3745
    %v3752 = vld [vmem:[#allocation15] sm:$0xff]
    %v3753 = vld [vmem:[#allocation15 + $0x8] sm:$0xff]
    %v3754 = vld [vmem:[#allocation15 + $0x10] sm:$0xff]
    %v3755 = vld [vmem:[#allocation15 + $0x18] sm:$0xff]
    %v3756 = vld [vmem:[#allocation15 + $0x20] sm:$0xff]
    %v3757 = vld [vmem:[#allocation15 + $0x28] sm:$0xff]
    %v3758 = vld [vmem:[#allocation15 + $0x30] sm:$0xff]
    %v3759 = vld [vmem:[#allocation15 + $0x38] sm:$0xff]
    %v3760 = vld [vmem:[#allocation15 + $0x40] sm:$0xff]
    %v3761 = vld [vmem:[#allocation15 + $0x48] sm:$0xff]
    %v3762 = vld [vmem:[#allocation15 + $0x50] sm:$0xff]
    %v3763 = vld [vmem:[#allocation15 + $0x58] sm:$0xff]
    %v3764 = vld [vmem:[#allocation15 + $0x60] sm:$0xff]
    %v3765 = vld [vmem:[#allocation15 + $0x68] sm:$0xff]
    %v3766 = vld [vmem:[#allocation15 + $0x70] sm:$0xff]
    %v3767 = vld [vmem:[#allocation15 + $0x78] sm:$0xff]
    %v3768 = vld [vmem:[%s8] sm:$0x1]
    %v3770 = vlaneseq
    %v3771 = vshrl.u32 %v3770, 7
    %v3772 = vsub.s32 0, %v3771
    %v3773 = vrot.slane %v3768, %v3772
    %3775 = vmatprep.subr.mxu0 0.0
    %3776 = vmatpush1.msra.mxu0 %v3752
    %3777 = vmatprep.subr.mxu0 0.0
    %3778 = vmatpush1.msra.mxu0 %v3753
    %3779 = vmatprep.subr.mxu0 0.0
    %3780 = vmatpush1.msra.mxu0 %v3754
    %3781 = vmatprep.subr.mxu0 0.0
    %3782 = vmatpush1.msra.mxu0 %v3755
    %3783 = vmatprep.subr.mxu0 0.0
    %3784 = vmatpush1.msra.mxu0 %v3756
    %3785 = vmatprep.subr.mxu0 0.0
    %3786 = vmatpush1.msra.mxu0 %v3757
    %3787 = vmatprep.subr.mxu0 0.0
    %3788 = vmatpush1.msra.mxu0 %v3758
    %3789 = vmatprep.subr.mxu0 0.0
    %3790 = vmatpush1.msra.mxu0 %v3759
    %3791 = vmatprep.subr.mxu0 0.0
    %3792 = vmatpush1.msra.mxu0 %v3760
    %3793 = vmatprep.subr.mxu0 0.0
    %3794 = vmatpush1.msra.mxu0 %v3761
    %3795 = vmatprep.subr.mxu0 0.0
    %3796 = vmatpush1.msra.mxu0 %v3762
    %3797 = vmatprep.subr.mxu0 0.0
    %3798 = vmatpush1.msra.mxu0 %v3763
    %3799 = vmatprep.subr.mxu0 0.0
    %3800 = vmatpush1.msra.mxu0 %v3764
    %3801 = vmatprep.subr.mxu0 0.0
    %3802 = vmatpush1.msra.mxu0 %v3765
    %3803 = vmatprep.subr.mxu0 0.0
    %3804 = vmatpush1.msra.mxu0 %v3766
    %3805 = vmatprep.subr.mxu0 0.0
    %3806 = vmatpush1.msra.mxu0 %v3767
    %3807 = vmatprep.subr.mxu0 0.0
    %3808 = vmatpush1.msra.mxu0 0.0
    %3809 = vmatprep.subr.mxu0 0.0
    %3810 = vmatpush1.msra.mxu0 0.0
    %3811 = vmatprep.subr.mxu0 0.0
    %3812 = vmatpush1.msra.mxu0 0.0
    %3813 = vmatprep.subr.mxu0 0.0
    %3814 = vmatpush1.msra.mxu0 0.0
    %3815 = vmatprep.subr.mxu0 0.0
    %3816 = vmatpush1.msra.mxu0 0.0
    %3817 = vmatprep.subr.mxu0 0.0
    %3818 = vmatpush1.msra.mxu0 0.0
    %3819 = vmatprep.subr.mxu0 0.0
    %3820 = vmatpush1.msra.mxu0 0.0
    %3821 = vmatprep.subr.mxu0 0.0
    %3822 = vmatpush1.msra.mxu0 0.0
    %3823 = vmatprep.subr.mxu0 0.0
    %3824 = vmatpush1.msra.mxu0 0.0
    %3825 = vmatprep.subr.mxu0 0.0
    %3826 = vmatpush1.msra.mxu0 0.0
    %3827 = vmatprep.subr.mxu0 0.0
    %3828 = vmatpush1.msra.mxu0 0.0
    %3829 = vmatprep.subr.mxu0 0.0
    %3830 = vmatpush1.msra.mxu0 0.0
    %3831 = vmatprep.subr.mxu0 0.0
    %3832 = vmatpush1.msra.mxu0 0.0
    %3833 = vmatprep.subr.mxu0 0.0
    %3834 = vmatpush1.msra.mxu0 0.0
    %3835 = vmatprep.subr.mxu0 0.0
    %3836 = vmatpush1.msra.mxu0 0.0
    %3837 = vmatprep.subr.mxu0 0.0
    %3838 = vmatpush1.msra.mxu0 0.0
    %3839 = vmatprep.mubr.f32.mxu0 0.0
    %3840 = vmatmul.mubr.f32.gmra.mrb[0].mxu0 %v3747
    %v3841 = vpop.f32.mrb[0].mxu0
    %v3842 = vadd.f32 %v3773, %v3841
    %v3843 = vpop.f32.mrb[0].mxu0
    %3844 = vdwg.mxu0
    %vm3845 = vcmp.gt.f32.partialorder %v3842, 0.0
    %v3846 = vmul.f32 %v3842, 0.01
    %v3847 = vsel %vm3845, %v3842, %v3846
    %v3848 = vld [vmem:[%s9] sm:$0xff]
    %v3849 = vld [vmem:[%s9 + $0x8] sm:$0xff]
    %v3850 = vld [vmem:[%s9 + $0x10] sm:$0xff]
    %v3851 = vld [vmem:[%s9 + $0x18] sm:$0xff]
    %v3852 = vld [vmem:[%s9 + $0x20] sm:$0xff]
    %v3853 = vld [vmem:[%s9 + $0x28] sm:$0xff]
    %v3854 = vld [vmem:[%s9 + $0x30] sm:$0xff]
    %v3855 = vld [vmem:[%s9 + $0x38] sm:$0xff]
    %v3856 = vld [vmem:[%s9 + $0x40] sm:$0xff]
    %v3857 = vld [vmem:[%s9 + $0x48] sm:$0xff]
    %v3858 = vld [vmem:[%s9 + $0x50] sm:$0xff]
    %v3859 = vld [vmem:[%s9 + $0x58] sm:$0xff]
    %v3860 = vld [vmem:[%s9 + $0x60] sm:$0xff]
    %v3861 = vld [vmem:[%s9 + $0x68] sm:$0xff]
    %v3862 = vld [vmem:[%s9 + $0x70] sm:$0xff]
    %v3863 = vld [vmem:[%s9 + $0x78] sm:$0xff]
    %v3864 = vld [vmem:[%s10] sm:$0x1]
    %v3866 = vlaneseq
    %v3867 = vshrl.u32 %v3866, 7
    %v3868 = vsub.s32 0, %v3867
    %v3869 = vrot.slane %v3864, %v3868
    %3871 = vmatprep.subr.mxu0 0.0
    %3872 = vmatpush1.msra.mxu0 %v3848
    %3873 = vmatprep.subr.mxu0 0.0
    %3874 = vmatpush1.msra.mxu0 %v3849
    %3875 = vmatprep.subr.mxu0 0.0
    %3876 = vmatpush1.msra.mxu0 %v3850
    %3877 = vmatprep.subr.mxu0 0.0
    %3878 = vmatpush1.msra.mxu0 %v3851
    %3879 = vmatprep.subr.mxu0 0.0
    %3880 = vmatpush1.msra.mxu0 %v3852
    %3881 = vmatprep.subr.mxu0 0.0
    %3882 = vmatpush1.msra.mxu0 %v3853
    %3883 = vmatprep.subr.mxu0 0.0
    %3884 = vmatpush1.msra.mxu0 %v3854
    %3885 = vmatprep.subr.mxu0 0.0
    %3886 = vmatpush1.msra.mxu0 %v3855
    %3887 = vmatprep.subr.mxu0 0.0
    %3888 = vmatpush1.msra.mxu0 %v3856
    %3889 = vmatprep.subr.mxu0 0.0
    %3890 = vmatpush1.msra.mxu0 %v3857
    %3891 = vmatprep.subr.mxu0 0.0
    %3892 = vmatpush1.msra.mxu0 %v3858
    %3893 = vmatprep.subr.mxu0 0.0
    %3894 = vmatpush1.msra.mxu0 %v3859
    %3895 = vmatprep.subr.mxu0 0.0
    %3896 = vmatpush1.msra.mxu0 %v3860
    %3897 = vmatprep.subr.mxu0 0.0
    %3898 = vmatpush1.msra.mxu0 %v3861
    %3899 = vmatprep.subr.mxu0 0.0
    %3900 = vmatpush1.msra.mxu0 %v3862
    %3901 = vmatprep.subr.mxu0 0.0
    %3902 = vmatpush1.msra.mxu0 %v3863
    %3903 = vmatprep.subr.mxu0 0.0
    %3904 = vmatpush1.msra.mxu0 0.0
    %3905 = vmatprep.subr.mxu0 0.0
    %3906 = vmatpush1.msra.mxu0 0.0
    %3907 = vmatprep.subr.mxu0 0.0
    %3908 = vmatpush1.msra.mxu0 0.0
    %3909 = vmatprep.subr.mxu0 0.0
    %3910 = vmatpush1.msra.mxu0 0.0
    %3911 = vmatprep.subr.mxu0 0.0
    %3912 = vmatpush1.msra.mxu0 0.0
    %3913 = vmatprep.subr.mxu0 0.0
    %3914 = vmatpush1.msra.mxu0 0.0
    %3915 = vmatprep.subr.mxu0 0.0
    %3916 = vmatpush1.msra.mxu0 0.0
    %3917 = vmatprep.subr.mxu0 0.0
    %3918 = vmatpush1.msra.mxu0 0.0
    %3919 = vmatprep.subr.mxu0 0.0
    %3920 = vmatpush1.msra.mxu0 0.0
    %3921 = vmatprep.subr.mxu0 0.0
    %3922 = vmatpush1.msra.mxu0 0.0
    %3923 = vmatprep.subr.mxu0 0.0
    %3924 = vmatpush1.msra.mxu0 0.0
    %3925 = vmatprep.subr.mxu0 0.0
    %3926 = vmatpush1.msra.mxu0 0.0
    %3927 = vmatprep.subr.mxu0 0.0
    %3928 = vmatpush1.msra.mxu0 0.0
    %3929 = vmatprep.subr.mxu0 0.0
    %3930 = vmatpush1.msra.mxu0 0.0
    %3931 = vmatprep.subr.mxu0 0.0
    %3932 = vmatpush1.msra.mxu0 0.0
    %3933 = vmatprep.subr.mxu0 0.0
    %3934 = vmatpush1.msra.mxu0 0.0
    %3935 = vmatprep.mubr.f32.mxu0 0.0
    %3936 = vmatmul.mubr.f32.gmra.mrb[0].mxu0 %v3847
    %v3937 = vpop.f32.mrb[0].mxu0
    %v3938 = vadd.f32 %v3869, %v3937
    %v3939 = vpop.f32.mrb[0].mxu0
    %3940 = vdwg.mxu0
    %3941 = vst [vmem:[#allocation16] sm:$0xff] %v3938
    // Predicated region
    $region74: #{tpu_custom_call.1} parent=1 // pred_check
      _
    $region75: #{tpu_custom_call.1} parent=1 // pred_check_branch
      %3943 = sbr.rel (0) target = $region77
    $region76: #{tpu_custom_call.1} parent=1 // pred_region
      %s3945 = ssub.s32 128, 128
      %3946 = vsyncadd [#allocation6], %s3945
      %s3948 = sshll.u32 [#allocation16], 4
      %s3949 = int_to_ptr.vmem [resolvable:$true] %s3948
      %3951 = dma.vmem_to_hbm [thread:$0]  %s3949, 128, %s11, [#allocation6]
    $region77: #{tpu_custom_call.1} parent=1 // pred_fallthru
      _
    // Predicated region
    $region78: #{tpu_custom_call.1} parent=1 // pred_check
      _
    $region79: #{tpu_custom_call.1} parent=1 // pred_check_branch
      %3953 = sbr.rel (0) target = $region81
    $region80: #{tpu_custom_call.1} parent=1 // pred_region
      %s3955 = ssub.s32 256, 256
      %3956 = vsyncadd [#allocation18], %s3955
      %s3957 = sshll.u32 [#allocation17], 4
      %s3958 = int_to_ptr.vmem [resolvable:$true] %s3957
      %3963 = dma.vmem_to_hbm [thread:$0]  %s3958, 256, %s12, [#allocation18], 128, 128, 8
    $region81: #{tpu_custom_call.1} parent=1 // pred_fallthru
      _
    // Predicated region
    $region82: #{tpu_custom_call.1} parent=1 // pred_check
      _
    $region83: #{tpu_custom_call.1} parent=1 // pred_check_branch
      %3965 = sbr.rel (0) target = $region85
    $region84: #{tpu_custom_call.1} parent=1 // pred_region
      %s3967 = ssub.s32 256, 256
      %3968 = vsyncadd [#allocation18], %s3967
      %s3969 = sshll.u32 [#allocation19], 4
      %s3970 = int_to_ptr.vmem [resolvable:$true] %s3969
      %3975 = dma.vmem_to_hbm [thread:$0]  %s3970, 256, %s13, [#allocation18], 128, 128, 8
    $region85: #{tpu_custom_call.1} parent=1 // pred_fallthru
      _
    // Predicated region
    $region86: #{tpu_custom_call.1} parent=1 // pred_check
      _
    $region87: #{tpu_custom_call.1} parent=1 // pred_check_branch
      %3977 = sbr.rel (0) target = $region89
    $region88: #{tpu_custom_call.1} parent=1 // pred_region
      %3978 = dma.done [#allocation6], 128
    $region89: #{tpu_custom_call.1} parent=1 // pred_fallthru
      _
    // Predicated region
    $region90: #{tpu_custom_call.1} parent=1 // pred_check
      _
    $region91: #{tpu_custom_call.1} parent=1 // pred_check_branch
      %3980 = sbr.rel (0) target = $region93
    $region92: #{tpu_custom_call.1} parent=1 // pred_region
      %3981 = dma.done [#allocation18], 256
    $region93: #{tpu_custom_call.1} parent=1 // pred_fallthru
      _
    // Predicated region
    $region94: #{tpu_custom_call.1} parent=1 // pred_check
      _
    $region95: #{tpu_custom_call.1} parent=1 // pred_check_branch
      %3983 = sbr.rel (0) target = $region97
    $region96: #{tpu_custom_call.1} parent=1 // pred_region
      %3984 = dma.done [#allocation18], 256
    $region97: #{tpu_custom_call.1} parent=1 // pred_fallthru
      _
    %3985 = vsyncpa [#allocation5], 1
    %3986 = vsyncpa [#allocation8], 1
    %3987 = vsyncpa [#allocation11], 1
    %3988 = vsyncpa [#allocation14], 1
    %3989 = vsyncpa [#allocation6], 1
    %3990 = vsyncpa [#allocation18], 1

</llo_original>
